<compile_context>
chip_gen: v5e
topology: v5e:2x2
jax: 0.10.0
libtpu: 0.0.40
codegen_flags: <defaults>
</compile_context>

<pallas_src>
import functools

import jax
import jax.numpy as jnp
from jax.experimental import pallas as pl
from jax.experimental.pallas import tpu as pltpu


def autopad(k, p=None, d=1):
    """Pad to 'same' shape outputs (matches the PyTorch module)."""
    if d > 1:
        k = d * (k - 1) + 1 if isinstance(k, int) else [d * (x - 1) + 1 for x in k]
    if p is None:
        p = k // 2 if isinstance(k, int) else [x // 2 for x in k]
    return p


def _round_up(x, m):
    return (x + m - 1) // m * m


def _vmem_capacity_bytes():
    try:
        return int(pltpu.get_tpu_info().vmem_capacity_bytes)
    except Exception:
        return 64 * 1024 * 1024  # conservative default (v7x per-core VMEM)


def _pick_row_tile(h_out, w_out, target_m):
    """Rows per strip: prefer TR*W_out % 128 == 0, then % 8 == 0, with TR*W_out <= target_m."""
    best128 = best8 = None
    for tr in range(1, h_out + 1):
        if h_out % tr:
            continue
        m = tr * w_out
        if m > target_m:
            break
        if m % 128 == 0:
            best128 = tr
        if m % 8 == 0:
            best8 = tr
    if best128 is not None:
        return best128
    if best8 is not None:
        return best8
    # Either W_out alone exceeds target_m (take one row) or nothing aligns (full extent
    # is always a legal block shape).
    return 1 if w_out % 8 == 0 else h_out


def _footprint_bytes(Hp, Wp, C1, K, TR, W_out, TC2, itemsize, img_bufs, use_im2col):
    """Per-step VMEM footprint estimate (lane dims pad to 128, double buffers counted)."""
    lane = 128
    m = TR * W_out
    kkc1 = K * K * C1
    c1l = _round_up(C1, lane)
    b = img_bufs * Hp * Wp * c1l * itemsize          # resident padded image block(s)
    b += 2 * kkc1 * TC2 * itemsize                   # weight tile (double-buffered)
    b += 2 * lane * 4                                # bias tile
    b += 2 * m * TC2 * itemsize                      # output tile (double-buffered)
    b += m * TC2 * 4                                 # f32 accumulator / epilogue values
    if use_im2col:
        b += m * _round_up(kkc1, lane) * itemsize    # persistent im2col scratch
        b += (TR - 1 + K) * Wp * c1l * itemsize      # strip-load temporaries
    else:
        b += 2 * m * c1l * itemsize                  # per-tap temporaries
    return b


def _choose_tiles(H_out, W_out, C2p, Hp, Wp, C1, K, itemsize, budget, img_bufs, use_im2col):
    """Largest MXU-friendly (TR, TC2) whose footprint fits the VMEM budget."""
    tc2_cands = [t for t in (512, 256, 128) if C2p % t == 0] or [C2p]
    m_targets = (512, 256, 128, 64, 32, 8)
    for tc2 in tc2_cands:
        for tm in m_targets:
            tr = _pick_row_tile(H_out, W_out, tm)
            if _footprint_bytes(Hp, Wp, C1, K, tr, W_out, tc2, itemsize,
                                img_bufs, use_im2col) <= budget:
                return tr, tc2
    # Nothing fits the budget cleanly -> smallest candidates (compiler may still manage).
    # TODO(synk): for very large spatial dims switch the image to halo'd row-strip DMA
    # (memory_space=pl.ANY) so the full padded image never has to sit in VMEM.
    return _pick_row_tile(H_out, W_out, m_targets[-1]), tc2_cands[-1]


def _conv_im2col_kernel(x_ref, w_ref, b_ref, o_ref, patch_ref, *, K, TR, W_out, C1, rt_axis):
    """Fused stride-1 conv + BN(shift) + SiLU for small C1 (wide-contraction im2col matmul).

    x_ref:     (1, Hp, Wp, C1)     padded NHWC image (resident across rt / c2 grid steps)
    w_ref:     (K*K*C1, TC2)       BN-scale-folded weight slab, rows ordered (kh, kw, c1)
    b_ref:     (1, TC2)            BN shift (f32)
    o_ref:     (1, TR*W_out, TC2)  output row strip, channels-last flat (lane-dense)
    patch_ref: (TR*W_out, K*K*C1)  im2col slab; built once per row strip, reused per C2 tile
    """
    rt = pl.program_id(rt_axis)

    # Build the im2col slab only on the first C2 tile of this (batch, row strip); the inner
    # (arbitrary) c2 axis then reuses it, so tap extraction is amortised over all C2 tiles.
    @pl.when(pl.program_id(2) == 0)
    def _build_patches():
        r0 = pl.multiple_of(rt * TR, TR)              # aligned-start hint for the strip load
        xs = x_ref[0, pl.ds(r0, TR - 1 + K), :, :]    # (rows_in, Wp, C1) halo'd input strip
        taps = []
        for kh in range(K):
            rows = xs[kh:kh + TR]                     # (TR, Wp, C1)
            for kw in range(K):
                taps.append(rows[:, kw:kw + W_out, :])  # (TR, W_out, C1)
        # Single slab store; built once per strip so the concat shuffle work is amortised
        # across every C2 tile (it is no longer per-step work).
        patch_ref[...] = jnp.concatenate(taps, axis=-1).reshape(TR * W_out, K * K * C1)

    acc = jnp.dot(patch_ref[...], w_ref[...], preferred_element_type=jnp.float32)
    y = acc + b_ref[...]                              # BN shift (scale folded into weights)
    y = y * jax.nn.sigmoid(y)                         # SiLU (EUP path)
    o_ref[0] = y.astype(o_ref.dtype)                  # lane-dense store


def _conv_direct_kernel(x_ref, w_ref, b_ref, o_ref, *, K, TR, W_out, C1, rt_axis):
    """Fused stride-1 conv + BN(shift) + SiLU for C1 >= 128 or k == 1.

    Contraction = C1 already fills the MXU depth, so no im2col slab is materialised:
    K*K accumulating matmuls straight from the resident image.
    """
    rt = pl.program_id(rt_axis)
    r0 = pl.multiple_of(rt * TR, TR)
    xs = x_ref[0, pl.ds(r0, TR - 1 + K), :, :]        # (rows_in, Wp, C1)
    acc = None
    for kh in range(K):
        rows = xs[kh:kh + TR]                         # (TR, Wp, C1)
        for kw in range(K):
            t = kh * K + kw
            tap = rows[:, kw:kw + W_out, :].reshape(TR * W_out, C1)
            part = jnp.dot(tap, w_ref[t * C1:(t + 1) * C1, :],
                           preferred_element_type=jnp.float32)
            acc = part if acc is None else acc + part
    y = acc + b_ref[...]
    y = y * jax.nn.sigmoid(y)
    o_ref[0] = y.astype(o_ref.dtype)


def conv_bn_silu(x_nchw, weight, gamma, beta, running_mean, running_var,
                 *, stride=1, padding=None, groups=1, dilation=1, eps=1e-5):
    """Pallas implementation of Conv.forward (conv -> BN(eval) -> SiLU).

    x_nchw:  (N, C1, H, W)   PyTorch NCHW layout
    weight:  (C2, C1, K, K)  conv weight (bias=False)
    BN params: (C2,) each (running statistics / inference semantics).
    """
    # TODO(synk): groups > 1 and dilation > 1 are not implemented (module defaults g=1, d=1).
    if groups != 1:
        raise NotImplementedError("groups > 1 is not implemented in the Pallas kernel")
    if dilation != 1:
        raise NotImplementedError("dilation > 1 is not implemented in the Pallas kernel")

    N, C1, H, W = x_nchw.shape
    C2, c1w, KH, KW = weight.shape
    assert c1w == C1 and KH == KW, "square kernel / matching channels expected"
    K, S = int(KH), int(stride)
    P = autopad(K, padding, dilation)

    H_out = (H + 2 * P - K) // S + 1
    W_out = (W + 2 * P - K) // S + 1

    # TODO(synk): in an NHWC pipeline these boundary relayout/pad passes disappear; the
    # module contract is NCHW so they are paid once here.
    x_nhwc = jnp.transpose(x_nchw, (0, 2, 3, 1))
    x_pad = jnp.pad(x_nhwc, ((0, 0), (P, P), (P, P), (0, 0)))
    w_hwio = jnp.transpose(weight, (2, 3, 1, 0))                  # (kh, kw, c1, c2)

    if S > 1:
        # Space-to-depth: a stride-S conv == a stride-1 conv over S*S*C1 "phase" channels.
        # Keeps all strided decimation out of the kernel (strided in-register gathers
        # serialize on the XLU) and reuses the proven stride-1 kernel path.
        Hp0, Wp0 = x_pad.shape[1], x_pad.shape[2]
        Hps, Wps = _round_up(Hp0, S), _round_up(Wp0, S)
        x_pad = jnp.pad(x_pad, ((0, 0), (0, Hps - Hp0), (0, Wps - Wp0), (0, 0)))
        Hq, Wq = Hps // S, Wps // S
        x_pad = x_pad.reshape(N, Hq, S, Wq, S, C1)
        x_pad = jnp.transpose(x_pad, (0, 1, 3, 2, 4, 5)).reshape(N, Hq, Wq, S * S * C1)
        K2 = (K - 1) // S + 1
        w_big = jnp.zeros((K2 * S, K2 * S, C1, C2), w_hwio.dtype).at[:K, :K].set(w_hwio)
        w_hwio = jnp.transpose(w_big.reshape(K2, S, K2, S, C1, C2),
                               (0, 2, 1, 3, 4, 5)).reshape(K2, K2, S * S * C1, C2)
        K, C1 = K2, S * S * C1

    Hp, Wp = x_pad.shape[1], x_pad.shape[2]
    KKC1 = K * K * C1

    # Fuse BatchNorm (inference): fold the scale into the weights, keep only the shift.
    scale = gamma / jnp.sqrt(running_var + eps)                   # (C2,)
    shift = beta - running_mean * scale                           # (C2,)
    C2p = _round_up(C2, 128)                                      # lane-dense output channels
    w_slab = w_hwio.reshape(KKC1, C2) * scale[None, :]
    w_slab = jnp.pad(w_slab.astype(x_pad.dtype), ((0, 0), (0, C2p - C2)))
    bias = jnp.pad(shift, (0, C2p - C2)).reshape(1, C2p).astype(jnp.float32)

    # Small C1 -> wide-contraction im2col matmul; deep layers / pointwise -> direct matmuls.
    use_im2col = (K > 1) and (C1 < 128)

    itemsize = jnp.dtype(x_pad.dtype).itemsize
    vmem_limit = int(0.85 * _vmem_capacity_bytes())               # ~54 MiB v7x, ~109 MiB v5e/v6e
    TR, TC2 = _choose_tiles(H_out, W_out, C2p, Hp, Wp, C1, K, itemsize,
                            budget=int(0.7 * vmem_limit),         # headroom for Mosaic scratch
                            img_bufs=2, use_im2col=use_im2col)    # conservative: 2 image bufs
    M = TR * W_out
    n_rt = H_out // TR
    n_c2 = C2p // TC2

    # Grid: image resident across (rt, c2); c2 innermost ("arbitrary") so the im2col scratch
    # built at c2 == 0 is reused for every C2 tile.  For N == 1 the row-strip axis leads so
    # the leading "parallel" axis has real extent (v7x megacore sharding).
    if N > 1:
        rt_axis = 1
        grid = (N, n_rt, n_c2)
        x_map = lambda n, rt, c2: (n, 0, 0, 0)
        w_map = lambda n, rt, c2: (0, c2)
        o_map = lambda n, rt, c2: (n, rt, c2)
    else:
        rt_axis = 0
        grid = (n_rt, 1, n_c2)
        x_map = lambda rt, n, c2: (n, 0, 0, 0)
        w_map = lambda rt, n, c2: (0, c2)
        o_map = lambda rt, n, c2: (n, rt, c2)

    if use_im2col:
        kernel = functools.partial(_conv_im2col_kernel, K=K, TR=TR, W_out=W_out,
                                   C1=C1, rt_axis=rt_axis)
        scratch = (pltpu.VMEM((M, KKC1), x_pad.dtype),)
    else:
        kernel = functools.partial(_conv_direct_kernel, K=K, TR=TR, W_out=W_out,
                                   C1=C1, rt_axis=rt_axis)
        scratch = ()

    def _call(single_buffer_image):
        if single_buffer_image:
            # The image's block index only changes at batch boundaries -> single-buffer it
            # (halves the largest VMEM consumer; matters most on v7x's 64 MiB VMEM).
            x_spec = pl.BlockSpec((1, Hp, Wp, C1), x_map, pipeline_mode=pl.Buffered(1))
        else:
            x_spec = pl.BlockSpec((1, Hp, Wp, C1), x_map)
        return pl.pallas_call(
            kernel,
            out_shape=jax.ShapeDtypeStruct((N, H_out * W_out, C2p), x_pad.dtype),
            grid_spec=pltpu.PrefetchScalarGridSpec(
                num_scalar_prefetch=0,
                grid=grid,
                in_specs=[
                    x_spec,
                    pl.BlockSpec((KKC1, TC2), w_map),
                    pl.BlockSpec((1, TC2), w_map),
                ],
                out_specs=pl.BlockSpec((1, M, TC2), o_map),
                scratch_shapes=scratch,
            ),
            compiler_params=pltpu.CompilerParams(
                dimension_semantics=("parallel", "parallel", "arbitrary"),
                vmem_limit_bytes=vmem_limit,
            ),
        )(x_pad, w_slab, bias)

    try:
        out_flat = _call(True)
    except Exception:
        # TODO(synk): pl.Buffered(1) (single-buffered resident image) not supported by this
        # jax/Mosaic build; fall back to default double buffering.
        out_flat = _call(False)

    # (N, H_out*W_out, C2p) -> NCHW (single wrapper-side relayout; padded channels dropped).
    out = out_flat[:, :, :C2].reshape(N, H_out, W_out, C2)
    return jnp.transpose(out, (0, 3, 1, 2))


def _reference(x_nchw, weight, gamma, beta, running_mean, running_var,
               *, stride=1, padding=None, dilation=1, eps=1e-5):
    K = weight.shape[-1]
    P = autopad(K, padding, dilation)
    y = jax.lax.conv_general_dilated(
        x_nchw, weight,
        window_strides=(stride, stride),
        padding=((P, P), (P, P)),
        rhs_dilation=(dilation, dilation),
        dimension_numbers=("NCHW", "OIHW", "NCHW"))
    scale = (gamma / jnp.sqrt(running_var + eps)).reshape(1, -1, 1, 1)
    shift = (beta - running_mean * gamma / jnp.sqrt(running_var + eps)).reshape(1, -1, 1, 1)
    y = y * scale + shift
    return y * jax.nn.sigmoid(y)


if __name__ == "__main__":
    key = jax.random.PRNGKey(0)

    # (N, C1, C2, H, W, K, S)
    configs = [
        (2, 4, 8, 16, 16, 3, 1),      # main example: Conv(4, 8, k=3, s=1)
        (1, 3, 16, 32, 32, 3, 1),     # N=1 grid order, odd C1, multiple row strips
        (2, 8, 8, 16, 16, 1, 1),      # pointwise conv (module default k=1) -> direct path
        (1, 4, 1024, 16, 16, 3, 1),   # multiple C2 tiles -> im2col scratch reused across c2
        (1, 128, 128, 8, 8, 3, 1),    # C1 >= 128 -> direct K*K-matmul path
        (1, 4, 8, 16, 16, 3, 2),      # stride 2 via wrapper space-to-depth
    ]
    for (N, C1, C2, H, W, K, S) in configs:
        key, kx, kwt, kg, kb, km, kv = jax.random.split(key, 7)
        x = jax.random.normal(kx, (N, C1, H, W), dtype=jnp.float32)
        weight = jax.random.normal(kwt, (C2, C1, K, K), dtype=jnp.float32) * 0.1
        gamma = jax.random.normal(kg, (C2,), dtype=jnp.float32) * 0.1 + 1.0
        beta = jax.random.normal(kb, (C2,), dtype=jnp.float32) * 0.1
        rmean = jax.random.normal(km, (C2,), dtype=jnp.float32) * 0.1
        rvar = jnp.abs(jax.random.normal(kv, (C2,), dtype=jnp.float32)) * 0.1 + 1.0

        out = conv_bn_silu(x, weight, gamma, beta, rmean, rvar, stride=S)
        out = jax.block_until_ready(out)
        ref = _reference(x, weight, gamma, beta, rmean, rvar, stride=S)

        P = autopad(K)
        H_out = (H + 2 * P - K) // S + 1
        W_out = (W + 2 * P - K) // S + 1
        assert out.shape == (N, C2, H_out, W_out), out.shape
        max_err = float(jnp.max(jnp.abs(out - ref)))
        assert jnp.allclose(out, ref, atol=2e-3, rtol=2e-3), \
            ((N, C1, C2, H, W, K, S), max_err)

    print("KERNEL_OK")
</pallas_src>

<mosaic_0001>
module attributes {stable_mosaic.version = 11 : i64} {
  func.func @_conv_im2col_kernel(%arg0: i32, %arg1: i32, %arg2: i32, %arg3: memref<1x18x18x4xf32, #tpu.memory_space<vmem>>, %arg4: memref<36x128xf32, #tpu.memory_space<vmem>>, %arg5: memref<1x128xf32, #tpu.memory_space<vmem>>, %arg6: memref<1x256x128xf32, #tpu.memory_space<vmem>>, %arg7: memref<256x36xf32, #tpu.memory_space<vmem>>) attributes {dimension_semantics = [#tpu.dimension_semantics<parallel>, #tpu.dimension_semantics<parallel>, #tpu.dimension_semantics<arbitrary>], iteration_bounds = array<i64: 2, 1, 1>, scalar_prefetch = 0 : i64, scratch_operands = 1 : i64, tpu.core_type = #tpu.core_type<tc>, window_params = [{pipeline_mode = #tpu.pipeline_mode<synchronous>, transform_indices = @transform_0, window_bounds = array<i64: 1, 18, 18, 4>}, {transform_indices = @transform_1, window_bounds = array<i64: 36, 128>}, {transform_indices = @transform_2, window_bounds = array<i64: 1, 128>}, {transform_indices = @transform_3, window_bounds = array<i64: 1, 256, 128>}]} {
    %c0_i32 = arith.constant 0 : i32
    %0 = arith.cmpi eq, %arg2, %c0_i32 : i32
    %1 = arith.extui %0 : i1 to i32
    %c0_i32_0 = arith.constant 0 : i32
    %2 = arith.cmpi ne, %1, %c0_i32_0 : i32
    scf.if %2 {
      %c16_i32 = arith.constant 16 : i32
      %18 = arith.muli %arg1, %c16_i32 : i32
      %19 = tpu.assume_multiple %18, 16 : i32
      %c0_10 = arith.constant 0 : index
      %20 = arith.index_cast %19 : i32 to index
      %c0_11 = arith.constant 0 : index
      %c0_12 = arith.constant 0 : index
      %21 = vector.load %arg3[%c0_10, %20, %c0_11, %c0_12] : memref<1x18x18x4xf32, #tpu.memory_space<vmem>>, vector<1x18x18x4xf32>
      %22 = vector.shape_cast %21 : vector<1x18x18x4xf32> to vector<18x18x4xf32>
      %23 = vector.extract_strided_slice %22 {offsets = [0, 0, 0], sizes = [16, 18, 4], strides = [1, 1, 1]} : vector<18x18x4xf32> to vector<16x18x4xf32>
      %24 = vector.extract_strided_slice %23 {offsets = [0, 0, 0], sizes = [16, 16, 4], strides = [1, 1, 1]} : vector<16x18x4xf32> to vector<16x16x4xf32>
      %25 = vector.extract_strided_slice %23 {offsets = [0, 1, 0], sizes = [16, 16, 4], strides = [1, 1, 1]} : vector<16x18x4xf32> to vector<16x16x4xf32>
      %26 = vector.extract_strided_slice %23 {offsets = [0, 2, 0], sizes = [16, 16, 4], strides = [1, 1, 1]} : vector<16x18x4xf32> to vector<16x16x4xf32>
      %27 = vector.extract_strided_slice %22 {offsets = [1, 0, 0], sizes = [16, 18, 4], strides = [1, 1, 1]} : vector<18x18x4xf32> to vector<16x18x4xf32>
      %28 = vector.extract_strided_slice %27 {offsets = [0, 0, 0], sizes = [16, 16, 4], strides = [1, 1, 1]} : vector<16x18x4xf32> to vector<16x16x4xf32>
      %29 = vector.extract_strided_slice %27 {offsets = [0, 1, 0], sizes = [16, 16, 4], strides = [1, 1, 1]} : vector<16x18x4xf32> to vector<16x16x4xf32>
      %30 = vector.extract_strided_slice %27 {offsets = [0, 2, 0], sizes = [16, 16, 4], strides = [1, 1, 1]} : vector<16x18x4xf32> to vector<16x16x4xf32>
      %31 = vector.extract_strided_slice %22 {offsets = [2, 0, 0], sizes = [16, 18, 4], strides = [1, 1, 1]} : vector<18x18x4xf32> to vector<16x18x4xf32>
      %32 = vector.extract_strided_slice %31 {offsets = [0, 0, 0], sizes = [16, 16, 4], strides = [1, 1, 1]} : vector<16x18x4xf32> to vector<16x16x4xf32>
      %33 = vector.extract_strided_slice %31 {offsets = [0, 1, 0], sizes = [16, 16, 4], strides = [1, 1, 1]} : vector<16x18x4xf32> to vector<16x16x4xf32>
      %34 = vector.extract_strided_slice %31 {offsets = [0, 2, 0], sizes = [16, 16, 4], strides = [1, 1, 1]} : vector<16x18x4xf32> to vector<16x16x4xf32>
      %35 = tpu.concatenate %24, %25, %26, %28, %29, %30, %32, %33, %34 in 2 : vector<16x16x4xf32>, vector<16x16x4xf32>, vector<16x16x4xf32>, vector<16x16x4xf32>, vector<16x16x4xf32>, vector<16x16x4xf32>, vector<16x16x4xf32>, vector<16x16x4xf32>, vector<16x16x4xf32> -> vector<16x16x36xf32>
      %36 = vector.shape_cast %35 : vector<16x16x36xf32> to vector<256x36xf32>
      %c0_13 = arith.constant 0 : index
      %c0_14 = arith.constant 0 : index
      %37 = vector.load %arg7[%c0_13, %c0_14] : memref<256x36xf32, #tpu.memory_space<vmem>>, vector<256x36xf32>
      tpu.vector_store %arg7[%c0_13, %c0_14], %36 {strides = array<i32>} : memref<256x36xf32, #tpu.memory_space<vmem>>, vector<256x36xf32>,
    } else {
    }
    %c0 = arith.constant 0 : index
    %c0_1 = arith.constant 0 : index
    %3 = vector.load %arg7[%c0, %c0_1] : memref<256x36xf32, #tpu.memory_space<vmem>>, vector<256x36xf32>
    %c0_2 = arith.constant 0 : index
    %c0_3 = arith.constant 0 : index
    %4 = vector.load %arg4[%c0_2, %c0_3] : memref<36x128xf32, #tpu.memory_space<vmem>>, vector<36x128xf32>
    %cst = arith.constant dense<0.000000e+00> : vector<256x128xf32>
    %5 = tpu.matmul %3, %4, %cst {dimension_numbers = #tpu.dot_dimension_numbers<[1], [0], [0], [1], [0, 0, 1, 1], [], []>} : vector<256x36xf32>, vector<36x128xf32>, vector<256x128xf32> -> vector<256x128xf32>
    %c0_4 = arith.constant 0 : index
    %c0_5 = arith.constant 0 : index
    %6 = vector.load %arg5[%c0_4, %c0_5] : memref<1x128xf32, #tpu.memory_space<vmem>>, vector<1x128xf32>
    %7 = vector.broadcast %6 : vector<1x128xf32> to vector<256x128xf32>
    %8 = arith.addf %5, %7 : vector<256x128xf32>
    %9 = arith.negf %8 : vector<256x128xf32>
    %10 = math.exp %9 : vector<256x128xf32>
    %cst_6 = arith.constant 1.000000e+00 : f32
    %11 = vector.broadcast %cst_6 : f32 to vector<256x128xf32>
    %12 = arith.addf %11, %10 : vector<256x128xf32>
    %13 = arith.divf %11, %12 : vector<256x128xf32>
    %14 = arith.mulf %8, %13 : vector<256x128xf32>
    %c0_7 = arith.constant 0 : index
    %c0_8 = arith.constant 0 : index
    %c0_9 = arith.constant 0 : index
    %15 = vector.load %arg6[%c0_7, %c0_8, %c0_9] : memref<1x256x128xf32, #tpu.memory_space<vmem>>, vector<1x256x128xf32>
    %16 = vector.shape_cast %15 : vector<1x256x128xf32> to vector<256x128xf32>
    %17 = vector.shape_cast %14 : vector<256x128xf32> to vector<1x256x128xf32>
    tpu.vector_store %arg6[%c0_7, %c0_8, %c0_9], %17 {strides = array<i32>} : memref<1x256x128xf32, #tpu.memory_space<vmem>>, vector<1x256x128xf32>,
    return
  }
  func.func @transform_0(%arg0: i32, %arg1: i32, %arg2: i32) -> (i32, i32, i32, i32) {
    %c0_i32 = arith.constant 0 : i32
    %c0_i32_0 = arith.constant 0 : i32
    %c0_i32_1 = arith.constant 0 : i32
    %c0_i32_2 = arith.constant 0 : i32
    return %arg0, %c0_i32, %c0_i32_0, %c0_i32_1 : i32, i32, i32, i32
  }
  func.func @transform_1(%arg0: i32, %arg1: i32, %arg2: i32) -> (i32, i32) {
    %c0_i32 = arith.constant 0 : i32
    %c0_i32_0 = arith.constant 0 : i32
    return %c0_i32, %arg2 : i32, i32
  }
  func.func @transform_2(%arg0: i32, %arg1: i32, %arg2: i32) -> (i32, i32) {
    %c0_i32 = arith.constant 0 : i32
    %c0_i32_0 = arith.constant 0 : i32
    return %c0_i32, %arg2 : i32, i32
  }
  func.func @transform_3(%arg0: i32, %arg1: i32, %arg2: i32) -> (i32, i32, i32) {
    %c0_i32 = arith.constant 0 : i32
    return %arg0, %arg1, %arg2 : i32, i32, i32
  }
}

module attributes {stable_mosaic.version = 11 : i64} {
  func.func @_conv_im2col_kernel(%arg0: i32, %arg1: i32, %arg2: i32, %arg3: memref<1x18x18x4xf32, #tpu.memory_space<vmem>>, %arg4: memref<36x128xf32, #tpu.memory_space<vmem>>, %arg5: memref<1x128xf32, #tpu.memory_space<vmem>>, %arg6: memref<1x256x128xf32, #tpu.memory_space<vmem>>, %arg7: memref<256x36xf32, #tpu.memory_space<vmem>>) attributes {dimension_semantics = [#tpu.dimension_semantics<parallel>, #tpu.dimension_semantics<parallel>, #tpu.dimension_semantics<arbitrary>], iteration_bounds = array<i64: 2, 1, 1>, scalar_prefetch = 0 : i64, scratch_operands = 1 : i64, tpu.core_type = #tpu.core_type<tc>, window_params = [{transform_indices = @transform_0, window_bounds = array<i64: 1, 18, 18, 4>}, {transform_indices = @transform_1, window_bounds = array<i64: 36, 128>}, {transform_indices = @transform_2, window_bounds = array<i64: 1, 128>}, {transform_indices = @transform_3, window_bounds = array<i64: 1, 256, 128>}]} {
    %c0_i32 = arith.constant 0 : i32
    %0 = arith.cmpi eq, %arg2, %c0_i32 : i32
    %1 = arith.extui %0 : i1 to i32
    %c0_i32_0 = arith.constant 0 : i32
    %2 = arith.cmpi ne, %1, %c0_i32_0 : i32
    scf.if %2 {
      %c16_i32 = arith.constant 16 : i32
      %18 = arith.muli %arg1, %c16_i32 : i32
      %19 = tpu.assume_multiple %18, 16 : i32
      %c0_10 = arith.constant 0 : index
      %20 = arith.index_cast %19 : i32 to index
      %c0_11 = arith.constant 0 : index
      %c0_12 = arith.constant 0 : index
      %21 = vector.load %arg3[%c0_10, %20, %c0_11, %c0_12] : memref<1x18x18x4xf32, #tpu.memory_space<vmem>>, vector<1x18x18x4xf32>
      %22 = vector.shape_cast %21 : vector<1x18x18x4xf32> to vector<18x18x4xf32>
      %23 = vector.extract_strided_slice %22 {offsets = [0, 0, 0], sizes = [16, 18, 4], strides = [1, 1, 1]} : vector<18x18x4xf32> to vector<16x18x4xf32>
      %24 = vector.extract_strided_slice %23 {offsets = [0, 0, 0], sizes = [16, 16, 4], strides = [1, 1, 1]} : vector<16x18x4xf32> to vector<16x16x4xf32>
      %25 = vector.extract_strided_slice %23 {offsets = [0, 1, 0], sizes = [16, 16, 4], strides = [1, 1, 1]} : vector<16x18x4xf32> to vector<16x16x4xf32>
      %26 = vector.extract_strided_slice %23 {offsets = [0, 2, 0], sizes = [16, 16, 4], strides = [1, 1, 1]} : vector<16x18x4xf32> to vector<16x16x4xf32>
      %27 = vector.extract_strided_slice %22 {offsets = [1, 0, 0], sizes = [16, 18, 4], strides = [1, 1, 1]} : vector<18x18x4xf32> to vector<16x18x4xf32>
      %28 = vector.extract_strided_slice %27 {offsets = [0, 0, 0], sizes = [16, 16, 4], strides = [1, 1, 1]} : vector<16x18x4xf32> to vector<16x16x4xf32>
      %29 = vector.extract_strided_slice %27 {offsets = [0, 1, 0], sizes = [16, 16, 4], strides = [1, 1, 1]} : vector<16x18x4xf32> to vector<16x16x4xf32>
      %30 = vector.extract_strided_slice %27 {offsets = [0, 2, 0], sizes = [16, 16, 4], strides = [1, 1, 1]} : vector<16x18x4xf32> to vector<16x16x4xf32>
      %31 = vector.extract_strided_slice %22 {offsets = [2, 0, 0], sizes = [16, 18, 4], strides = [1, 1, 1]} : vector<18x18x4xf32> to vector<16x18x4xf32>
      %32 = vector.extract_strided_slice %31 {offsets = [0, 0, 0], sizes = [16, 16, 4], strides = [1, 1, 1]} : vector<16x18x4xf32> to vector<16x16x4xf32>
      %33 = vector.extract_strided_slice %31 {offsets = [0, 1, 0], sizes = [16, 16, 4], strides = [1, 1, 1]} : vector<16x18x4xf32> to vector<16x16x4xf32>
      %34 = vector.extract_strided_slice %31 {offsets = [0, 2, 0], sizes = [16, 16, 4], strides = [1, 1, 1]} : vector<16x18x4xf32> to vector<16x16x4xf32>
      %35 = tpu.concatenate %24, %25, %26, %28, %29, %30, %32, %33, %34 in 2 : vector<16x16x4xf32>, vector<16x16x4xf32>, vector<16x16x4xf32>, vector<16x16x4xf32>, vector<16x16x4xf32>, vector<16x16x4xf32>, vector<16x16x4xf32>, vector<16x16x4xf32>, vector<16x16x4xf32> -> vector<16x16x36xf32>
      %36 = vector.shape_cast %35 : vector<16x16x36xf32> to vector<256x36xf32>
      %c0_13 = arith.constant 0 : index
      %c0_14 = arith.constant 0 : index
      %37 = vector.load %arg7[%c0_13, %c0_14] : memref<256x36xf32, #tpu.memory_space<vmem>>, vector<256x36xf32>
      tpu.vector_store %arg7[%c0_13, %c0_14], %36 {strides = array<i32>} : memref<256x36xf32, #tpu.memory_space<vmem>>, vector<256x36xf32>,
    } else {
    }
    %c0 = arith.constant 0 : index
    %c0_1 = arith.constant 0 : index
    %3 = vector.load %arg7[%c0, %c0_1] : memref<256x36xf32, #tpu.memory_space<vmem>>, vector<256x36xf32>
    %c0_2 = arith.constant 0 : index
    %c0_3 = arith.constant 0 : index
    %4 = vector.load %arg4[%c0_2, %c0_3] : memref<36x128xf32, #tpu.memory_space<vmem>>, vector<36x128xf32>
    %cst = arith.constant dense<0.000000e+00> : vector<256x128xf32>
    %5 = tpu.matmul %3, %4, %cst {dimension_numbers = #tpu.dot_dimension_numbers<[1], [0], [0], [1], [0, 0, 1, 1], [], []>} : vector<256x36xf32>, vector<36x128xf32>, vector<256x128xf32> -> vector<256x128xf32>
    %c0_4 = arith.constant 0 : index
    %c0_5 = arith.constant 0 : index
    %6 = vector.load %arg5[%c0_4, %c0_5] : memref<1x128xf32, #tpu.memory_space<vmem>>, vector<1x128xf32>
    %7 = vector.broadcast %6 : vector<1x128xf32> to vector<256x128xf32>
    %8 = arith.addf %5, %7 : vector<256x128xf32>
    %9 = arith.negf %8 : vector<256x128xf32>
    %10 = math.exp %9 : vector<256x128xf32>
    %cst_6 = arith.constant 1.000000e+00 : f32
    %11 = vector.broadcast %cst_6 : f32 to vector<256x128xf32>
    %12 = arith.addf %11, %10 : vector<256x128xf32>
    %13 = arith.divf %11, %12 : vector<256x128xf32>
    %14 = arith.mulf %8, %13 : vector<256x128xf32>
    %c0_7 = arith.constant 0 : index
    %c0_8 = arith.constant 0 : index
    %c0_9 = arith.constant 0 : index
    %15 = vector.load %arg6[%c0_7, %c0_8, %c0_9] : memref<1x256x128xf32, #tpu.memory_space<vmem>>, vector<1x256x128xf32>
    %16 = vector.shape_cast %15 : vector<1x256x128xf32> to vector<256x128xf32>
    %17 = vector.shape_cast %14 : vector<256x128xf32> to vector<1x256x128xf32>
    tpu.vector_store %arg6[%c0_7, %c0_8, %c0_9], %17 {strides = array<i32>} : memref<1x256x128xf32, #tpu.memory_space<vmem>>, vector<1x256x128xf32>,
    return
  }
  func.func @transform_0(%arg0: i32, %arg1: i32, %arg2: i32) -> (i32, i32, i32, i32) {
    %c0_i32 = arith.constant 0 : i32
    %c0_i32_0 = arith.constant 0 : i32
    %c0_i32_1 = arith.constant 0 : i32
    %c0_i32_2 = arith.constant 0 : i32
    return %arg0, %c0_i32, %c0_i32_0, %c0_i32_1 : i32, i32, i32, i32
  }
  func.func @transform_1(%arg0: i32, %arg1: i32, %arg2: i32) -> (i32, i32) {
    %c0_i32 = arith.constant 0 : i32
    %c0_i32_0 = arith.constant 0 : i32
    return %c0_i32, %arg2 : i32, i32
  }
  func.func @transform_2(%arg0: i32, %arg1: i32, %arg2: i32) -> (i32, i32) {
    %c0_i32 = arith.constant 0 : i32
    %c0_i32_0 = arith.constant 0 : i32
    return %c0_i32, %arg2 : i32, i32
  }
  func.func @transform_3(%arg0: i32, %arg1: i32, %arg2: i32) -> (i32, i32, i32) {
    %c0_i32 = arith.constant 0 : i32
    return %arg0, %arg1, %arg2 : i32, i32, i32
  }
}

</mosaic_0001>

<llo_original>
// kernel: tpu_custom_call.1
$region0: #{tpu_custom_call.1}
  #allocation0 [shape = 'u32[]', space=smem, size = 0x4, offset = 0x4, fixed_abs, tag = 'smem constant byte address 0x4 - core index']
  #allocation1 [shape = 'u32[72,128]{1,0:T(1,128)}', space=vmem, size = 0x9000, scoped, tag = 'internal scratch']
  #allocation2 [shape = 'f32[256,36]{1,0:T(8,128)}', space=vmem, size = 0x20000, scoped, tag = 'scratch operand']
  %s0 = inlined_call_operand.vmem [shape: f32[2,18,18,4], index: 0, kind: input, shape index: {}]
  %s1 = inlined_call_operand.vmem [shape: f32[36,128], index: 1, kind: input, shape index: {}]
  %s2 = inlined_call_operand.vmem [shape: f32[1,128], index: 2, kind: input, shape index: {}]
  %s3 = inlined_call_operand.hbm [shape: f32[2,256,128], index: 3, kind: output, shape index: {}]
  %s4 = sld [smem:[#allocation0]]
  $region49: #{tpu_custom_call.1} parent=0
    _
  %s6 = ssub.s32 1, %s4
  %s7 = scalar_select 0, %s6, %s4
  $region1: #{tpu_custom_call.1} parent=0
    #allocation3 [shape = 'u8[262144]{0}', space=vmem, size = 0x40000, scoped, tag = 'output window, operand 0']
    #allocation4 [shape = 's32[2]{0}', space=sflag, size = 0x8, scoped, tag = 'scoped memory for tpu_custom_call.1']
    %8 = vsyncpa [#allocation4], 0
    %s9 = scalar_lea.sflag [#allocation4], 1
    %10 = vsyncpa %s9, 0
    loop: start=0, step=1, limit=4
    $region2: #{tpu_custom_call.1} parent=1 // loop_pre_header
      _
    $region3: #{tpu_custom_call.1} parent=1 // loop_header
      %s12 = sphi 0, %s16
      %p13 = scmp.ge.s32.totalorder %s12, 4
      %s19 = sphi 0, %s38
      %s20 = sphi 0, %s34
      %s21 = sphi 0, %s30
      %s22 = sphi 0, %s19
      %s23 = sphi 0, %s20
      %s24 = sphi 0, %s21
      %s25 = sphi 0, %s22
      %s26 = sphi 0, %s23
      %s27 = sphi 0, %s24
      %s41 = sphi 0, %s43
      %s44 = sphi 0, %s41
      %s45 = sphi 0, %s44
      %s61 = sphi 0, %s45
      %s67 = sphi 0, %s69
      %s70 = sphi 0, %s67
      %s71 = sphi 0, %s70
      %s87 = sphi 0, %s71
      %s93 = sphi 0, %s95
      %s96 = sphi 0, %s93
      %s97 = sphi 0, %s96
      %s113 = sphi 0, %s97
      %s123 = sphi 0, %s125
      %s126 = sphi 0, %s123
      %s127 = sphi 0, %s126
      %s143 = sphi 0, %s127
    $region4: #{tpu_custom_call.1} parent=1 // loop_header_branch
      %15 = sbr.rel (%p13) target = $region8
    $region5: #{tpu_custom_call.1} parent=1 // loop_body
      %s17 = ssub.s32 %s12, 1
      %s18 = ssub.s32 %s12, 2
      %s28 = sadd.s32 1, %s21
      %p29 = scmp.ge.s32.totalorder %s28, 1
      %s30 = scalar_select %p29, 0, %s28
      %s31 = sadd.s32 1, %s20
      %s32 = scalar_select %p29, %s31, %s20
      %p33 = scmp.ge.s32.totalorder %s32, 1
      %s34 = scalar_select %p33, 0, %s32
      %s35 = sadd.s32 1, %s19
      %s36 = scalar_select %p33, %s35, %s19
      %p37 = scmp.ge.s32.totalorder %s36, 2
      %s38 = scalar_select %p37, 0, %s36
      %s39 = ssub.s32 %s19, %s38
      %p40 = scmp.eq.s32.totalorder %s39, 0
      %s42 = sadd.s32 %s41, 1
      %s43 = scalar_select %p40, %s41, %s42
      %p46 = pneg %p40
      %p47 = scmp.eq.s32.totalorder %s12, 1
      %p48 = por %p46, %p47
      %p49 = scmp.ne.s32.totalorder %s41, %s44
      %p50 = scmp.eq.s32.totalorder %s12, 0
      %p51 = por %p49, %p50
      %p52 = scmp.ne.s32.totalorder %s41, %s44
      %p53 = scmp.eq.s32.totalorder %s17, 1
      %p54 = por %p52, %p53
      %p55 = scmp.ne.s32.totalorder %s44, %s45
      %p56 = scmp.eq.s32.totalorder %s17, 0
      %p57 = por %p55, %p56
      %p58 = scmp.ne.s32.totalorder %s44, %s45
      %p59 = scmp.eq.s32.totalorder %s18, 1
      %p60 = por %p58, %p59
      %p62 = scmp.ne.s32.totalorder %s45, %s61
      %p63 = scmp.eq.s32.totalorder %s18, 0
      %p64 = por %p62, %p63
      %s65 = ssub.s32 %s21, %s30
      %p66 = scmp.eq.s32.totalorder %s65, 0
      %s68 = sadd.s32 %s67, 1
      %s69 = scalar_select %p66, %s67, %s68
      %p72 = pneg %p66
      %p73 = scmp.eq.s32.totalorder %s12, 1
      %p74 = por %p72, %p73
      %p75 = scmp.ne.s32.totalorder %s67, %s70
      %p76 = scmp.eq.s32.totalorder %s12, 0
      %p77 = por %p75, %p76
      %p78 = scmp.ne.s32.totalorder %s67, %s70
      %p79 = scmp.eq.s32.totalorder %s17, 1
      %p80 = por %p78, %p79
      %p81 = scmp.ne.s32.totalorder %s70, %s71
      %p82 = scmp.eq.s32.totalorder %s17, 0
      %p83 = por %p81, %p82
      %p84 = scmp.ne.s32.totalorder %s70, %s71
      %p85 = scmp.eq.s32.totalorder %s18, 1
      %p86 = por %p84, %p85
      %p88 = scmp.ne.s32.totalorder %s71, %s87
      %p89 = scmp.eq.s32.totalorder %s18, 0
      %p90 = por %p88, %p89
      %s91 = ssub.s32 %s21, %s30
      %p92 = scmp.eq.s32.totalorder %s91, 0
      %s94 = sadd.s32 %s93, 1
      %s95 = scalar_select %p92, %s93, %s94
      %p98 = pneg %p92
      %p99 = scmp.eq.s32.totalorder %s12, 1
      %p100 = por %p98, %p99
      %p101 = scmp.ne.s32.totalorder %s93, %s96
      %p102 = scmp.eq.s32.totalorder %s12, 0
      %p103 = por %p101, %p102
      %p104 = scmp.ne.s32.totalorder %s93, %s96
      %p105 = scmp.eq.s32.totalorder %s17, 1
      %p106 = por %p104, %p105
      %p107 = scmp.ne.s32.totalorder %s96, %s97
      %p108 = scmp.eq.s32.totalorder %s17, 0
      %p109 = por %p107, %p108
      %p110 = scmp.ne.s32.totalorder %s96, %s97
      %p111 = scmp.eq.s32.totalorder %s18, 1
      %p112 = por %p110, %p111
      %p114 = scmp.ne.s32.totalorder %s97, %s113
      %p115 = scmp.eq.s32.totalorder %s18, 0
      %p116 = por %p114, %p115
      %s117 = ssub.s32 %s19, %s38
      %s118 = ssub.s32 %s20, %s34
      %s119 = sor.u32 %s117, %s118
      %s120 = ssub.s32 %s21, %s30
      %s121 = sor.u32 %s119, %s120
      %p122 = scmp.eq.s32.totalorder %s121, 0
      %s124 = sadd.s32 %s123, 1
      %s125 = scalar_select %p122, %s123, %s124
      %p128 = pneg %p122
      %p129 = scmp.eq.s32.totalorder %s12, 1
      %p130 = por %p128, %p129
      %p131 = scmp.ne.s32.totalorder %s123, %s126
      %p132 = scmp.eq.s32.totalorder %s12, 0
      %p133 = por %p131, %p132
      %p134 = scmp.ne.s32.totalorder %s123, %s126
      %p135 = scmp.eq.s32.totalorder %s17, 1
      %p136 = por %p134, %p135
      %p137 = scmp.ne.s32.totalorder %s126, %s127
      %p138 = scmp.eq.s32.totalorder %s17, 0
      %p139 = por %p137, %p138
      %p140 = scmp.ne.s32.totalorder %s126, %s127
      %p141 = scmp.eq.s32.totalorder %s18, 1
      %p142 = por %p140, %p141
      %p144 = scmp.ne.s32.totalorder %s127, %s143
      %p145 = scmp.eq.s32.totalorder %s18, 0
      %p146 = por %p144, %p145
      %p147 = scmp.le.s32.totalorder 1, %s12
      %p148 = scmp.lt.s32.totalorder %s12, 3
      %p149 = pnand %p147, %p148
      %p150 = pneg %p149
      // Predicated region
      $region9: #{tpu_custom_call.1} parent=5 // pred_check
        _
      $region10: #{tpu_custom_call.1} parent=5 // pred_check_branch
        %152 = sbr.rel (%p149) target = $region12
      $region11: #{tpu_custom_call.1} parent=5 // pred_region
        %s153 = ssub.s32 %s12, 1
        // Predicated region
        $region13: #{tpu_custom_call.1} parent=11 // pred_check
          %p154 = pneg %p57
        $region14: #{tpu_custom_call.1} parent=11 // pred_check_branch
          %156 = sbr.rel (%p154) target = $region16
        $region15: #{tpu_custom_call.1} parent=11 // pred_region
          %p157 = scmp.lt.s32.totalorder %s22, 1
          %s158 = scalar_select %p157, %s22, 1
          %s159 = smul.addr %s158, 54
          %s160 = smul.addr %s159, 8
          %s161 = scalar_lea.vmem %s0, %s160
        $region16: #{tpu_custom_call.1} parent=11 // pred_fallthru
          _
        // Predicated region
        $region17: #{tpu_custom_call.1} parent=11 // pred_check
          %p162 = pneg %p83
        $region18: #{tpu_custom_call.1} parent=11 // pred_check_branch
          %164 = sbr.rel (%p162) target = $region20
        $region19: #{tpu_custom_call.1} parent=11 // pred_region
          %p165 = scmp.lt.s32.totalorder %s24, 0
          %s166 = scalar_select %p165, %s24, 0
          %s167 = smul.addr %s166, 8
          %s168 = scalar_lea.vmem %s1, %s167
        $region20: #{tpu_custom_call.1} parent=11 // pred_fallthru
          _
        // Predicated region
        $region21: #{tpu_custom_call.1} parent=11 // pred_check
          %p169 = pneg %p109
        $region22: #{tpu_custom_call.1} parent=11 // pred_check_branch
          %171 = sbr.rel (%p169) target = $region24
        $region23: #{tpu_custom_call.1} parent=11 // pred_region
          %p172 = scmp.lt.s32.totalorder %s24, 0
          %s173 = scalar_select %p172, %s24, 0
          %s174 = scalar_lea.vmem %s2, %s173
        $region24: #{tpu_custom_call.1} parent=11 // pred_fallthru
          _
      $region12: #{tpu_custom_call.1} parent=5 // pred_fallthru
        _
      %p175 = scmp.lt.s32.totalorder %s12, 2
      // Predicated region
      $region25: #{tpu_custom_call.1} parent=5 // pred_check
        %p176 = pneg %p175
      $region26: #{tpu_custom_call.1} parent=5 // pred_check_branch
        %178 = sbr.rel (%p176) target = $region28
      $region27: #{tpu_custom_call.1} parent=5 // pred_region
        _
      $region28: #{tpu_custom_call.1} parent=5 // pred_fallthru
        _
      %p179 = scmp.le.s32.totalorder 1, %s12
      %p180 = scmp.lt.s32.totalorder %s12, 3
      %p181 = pnand %p179, %p180
      %p182 = pneg %p181
      // Predicated region
      $region29: #{tpu_custom_call.1} parent=5 // pred_check
        _
      $region30: #{tpu_custom_call.1} parent=5 // pred_check_branch
        %184 = sbr.rel (%p181) target = $region32
      $region31: #{tpu_custom_call.1} parent=5 // pred_region
        %s185 = ssub.s32 %s12, 1
        %p186 = scmp.lt.s32.totalorder %s22, 1
        %s187 = scalar_select %p186, %s22, 1
        %s188 = smul.addr %s187, 54
        %s189 = smul.addr %s188, 8
        %s190 = scalar_lea.vmem %s0, %s189
        %p191 = pneg %p57
        %p192 = pneg %p54
        %p193 = scmp.lt.s32.totalorder %s24, 0
        %s194 = scalar_select %p193, %s24, 0
        %s195 = smul.addr %s194, 8
        %s196 = scalar_lea.vmem %s1, %s195
        %p197 = pneg %p83
        %p198 = pneg %p80
        %p199 = scmp.lt.s32.totalorder %s24, 0
        %s200 = scalar_select %p199, %s24, 0
        %s201 = scalar_lea.vmem %s2, %s200
        %p202 = pneg %p109
        %p203 = pneg %p106
        %p204 = pneg %p139
        %p205 = pneg %p136
        %s206 = sand.u32 %s126, 1
        %s207 = scalar_lea.sflag [#allocation4], %s206
        %s208 = sand.u32 %s126, 1
        %s209 = smul.addr %s208, 256
        %s210 = scalar_lea.vmem [#allocation3], %s209
        %p211 = scmp.lt.s32.totalorder %s22, 1
        %s212 = scalar_select %p211, %s22, 1
        %s213 = smul.addr %s212, 54
        %s214 = smul.addr %s213, 8
        %s215 = scalar_lea.vmem %s0, %s214
        %p216 = scmp.lt.s32.totalorder %s24, 0
        %s217 = scalar_select %p216, %s24, 0
        %s218 = smul.addr %s217, 8
        %s219 = scalar_lea.vmem %s1, %s218
        %p220 = scmp.lt.s32.totalorder %s24, 0
        %s221 = scalar_select %p220, %s24, 0
        %s222 = scalar_lea.vmem %s2, %s221
        %s223 = smul.u32 32, %s23
        %p224 = scmp.eq.s32.totalorder %s24, 0
        // Predicated region
        $region33: #{tpu_custom_call.1} parent=31 // pred_check
          %p225 = pneg %p224
        $region34: #{tpu_custom_call.1} parent=31 // pred_check_branch
          %227 = sbr.rel (%p225) target = $region36
        $region35: #{tpu_custom_call.1} parent=31 // pred_region
          %s228 = smul.u32 %s23, 16
          %s229 = smul.u32 %s228, 24
          %s230 = scalar_lea.vmem %s215, %s229
          %v231 = vld [vmem:[%s230] sm:$0xff]
          %v232 = vld [vmem:[%s230 + $0x8] sm:$0xff]
          %v233 = vld [vmem:[%s230 + $0x10] sm:$0x3]
          %v234 = vld [vmem:[%s230 + $0x18] sm:$0xff]
          %v235 = vld [vmem:[%s230 + $0x20] sm:$0xff]
          %v236 = vld [vmem:[%s230 + $0x28] sm:$0x3]
          %v237 = vld [vmem:[%s230 + $0x30] sm:$0xff]
          %v238 = vld [vmem:[%s230 + $0x38] sm:$0xff]
          %v239 = vld [vmem:[%s230 + $0x40] sm:$0x3]
          %v240 = vld [vmem:[%s230 + $0x48] sm:$0xff]
          %v241 = vld [vmem:[%s230 + $0x50] sm:$0xff]
          %v242 = vld [vmem:[%s230 + $0x58] sm:$0x3]
          %v243 = vld [vmem:[%s230 + $0x60] sm:$0xff]
          %v244 = vld [vmem:[%s230 + $0x68] sm:$0xff]
          %v245 = vld [vmem:[%s230 + $0x70] sm:$0x3]
          %v246 = vld [vmem:[%s230 + $0x78] sm:$0xff]
          %v247 = vld [vmem:[%s230 + $0x80] sm:$0xff]
          %v248 = vld [vmem:[%s230 + $0x88] sm:$0x3]
          %v249 = vld [vmem:[%s230 + $0x90] sm:$0xff]
          %v250 = vld [vmem:[%s230 + $0x98] sm:$0xff]
          %v251 = vld [vmem:[%s230 + $0xa0] sm:$0x3]
          %v252 = vld [vmem:[%s230 + $0xa8] sm:$0xff]
          %v253 = vld [vmem:[%s230 + $0xb0] sm:$0xff]
          %v254 = vld [vmem:[%s230 + $0xb8] sm:$0x3]
          %v255 = vld [vmem:[%s230 + $0xc0] sm:$0xff]
          %v256 = vld [vmem:[%s230 + $0xc8] sm:$0xff]
          %v257 = vld [vmem:[%s230 + $0xd0] sm:$0x3]
          %v258 = vld [vmem:[%s230 + $0xd8] sm:$0xff]
          %v259 = vld [vmem:[%s230 + $0xe0] sm:$0xff]
          %v260 = vld [vmem:[%s230 + $0xe8] sm:$0x3]
          %v261 = vld [vmem:[%s230 + $0xf0] sm:$0xff]
          %v262 = vld [vmem:[%s230 + $0xf8] sm:$0xff]
          %v263 = vld [vmem:[%s230 + $0x100] sm:$0x3]
          %v264 = vld [vmem:[%s230 + $0x108] sm:$0xff]
          %v265 = vld [vmem:[%s230 + $0x110] sm:$0xff]
          %v266 = vld [vmem:[%s230 + $0x118] sm:$0x3]
          %v267 = vld [vmem:[%s230 + $0x120] sm:$0xff]
          %v268 = vld [vmem:[%s230 + $0x128] sm:$0xff]
          %v269 = vld [vmem:[%s230 + $0x130] sm:$0x3]
          %v270 = vld [vmem:[%s230 + $0x138] sm:$0xff]
          %v271 = vld [vmem:[%s230 + $0x140] sm:$0xff]
          %v272 = vld [vmem:[%s230 + $0x148] sm:$0x3]
          %v273 = vld [vmem:[%s230 + $0x150] sm:$0xff]
          %v274 = vld [vmem:[%s230 + $0x158] sm:$0xff]
          %v275 = vld [vmem:[%s230 + $0x160] sm:$0x3]
          %v276 = vld [vmem:[%s230 + $0x168] sm:$0xff]
          %v277 = vld [vmem:[%s230 + $0x170] sm:$0xff]
          %v278 = vld [vmem:[%s230 + $0x178] sm:$0x3]
          %v279 = vld [vmem:[%s230 + $0x180] sm:$0xff]
          %v280 = vld [vmem:[%s230 + $0x188] sm:$0xff]
          %v281 = vld [vmem:[%s230 + $0x190] sm:$0x3]
          %v282 = vld [vmem:[%s230 + $0x198] sm:$0xff]
          %v283 = vld [vmem:[%s230 + $0x1a0] sm:$0xff]
          %v284 = vld [vmem:[%s230 + $0x1a8] sm:$0x3]
          %vm333 = vcmask 1046528
          %v334 = vrot.slane %v231, 1
          %v335 = vrot.slane %v232, 1
          %v336 = vsel %vm333, %v334, %v335
          %v337 = vrot.slane %v233, 1
          %v338 = vsel %vm333, %v335, %v337
          %v339 = vrot.slane %v234, 1
          %v340 = vrot.slane %v235, 1
          %v341 = vsel %vm333, %v339, %v340
          %v342 = vrot.slane %v236, 1
          %v343 = vsel %vm333, %v340, %v342
          %v344 = vrot.slane %v237, 1
          %v345 = vrot.slane %v238, 1
          %v346 = vsel %vm333, %v344, %v345
          %v347 = vrot.slane %v239, 1
          %v348 = vsel %vm333, %v345, %v347
          %v349 = vrot.slane %v240, 1
          %v350 = vrot.slane %v241, 1
          %v351 = vsel %vm333, %v349, %v350
          %v352 = vrot.slane %v242, 1
          %v353 = vsel %vm333, %v350, %v352
          %v354 = vrot.slane %v243, 1
          %v355 = vrot.slane %v244, 1
          %v356 = vsel %vm333, %v354, %v355
          %v357 = vrot.slane %v245, 1
          %v358 = vsel %vm333, %v355, %v357
          %v359 = vrot.slane %v246, 1
          %v360 = vrot.slane %v247, 1
          %v361 = vsel %vm333, %v359, %v360
          %v362 = vrot.slane %v248, 1
          %v363 = vsel %vm333, %v360, %v362
          %v364 = vrot.slane %v249, 1
          %v365 = vrot.slane %v250, 1
          %v366 = vsel %vm333, %v364, %v365
          %v367 = vrot.slane %v251, 1
          %v368 = vsel %vm333, %v365, %v367
          %v369 = vrot.slane %v252, 1
          %v370 = vrot.slane %v253, 1
          %v371 = vsel %vm333, %v369, %v370
          %v372 = vrot.slane %v254, 1
          %v373 = vsel %vm333, %v370, %v372
          %v374 = vrot.slane %v255, 1
          %v375 = vrot.slane %v256, 1
          %v376 = vsel %vm333, %v374, %v375
          %v377 = vrot.slane %v257, 1
          %v378 = vsel %vm333, %v375, %v377
          %v379 = vrot.slane %v258, 1
          %v380 = vrot.slane %v259, 1
          %v381 = vsel %vm333, %v379, %v380
          %v382 = vrot.slane %v260, 1
          %v383 = vsel %vm333, %v380, %v382
          %v384 = vrot.slane %v261, 1
          %v385 = vrot.slane %v262, 1
          %v386 = vsel %vm333, %v384, %v385
          %v387 = vrot.slane %v263, 1
          %v388 = vsel %vm333, %v385, %v387
          %v389 = vrot.slane %v264, 1
          %v390 = vrot.slane %v265, 1
          %v391 = vsel %vm333, %v389, %v390
          %v392 = vrot.slane %v266, 1
          %v393 = vsel %vm333, %v390, %v392
          %v394 = vrot.slane %v267, 1
          %v395 = vrot.slane %v268, 1
          %v396 = vsel %vm333, %v394, %v395
          %v397 = vrot.slane %v269, 1
          %v398 = vsel %vm333, %v395, %v397
          %v399 = vrot.slane %v270, 1
          %v400 = vrot.slane %v271, 1
          %v401 = vsel %vm333, %v399, %v400
          %v402 = vrot.slane %v272, 1
          %v403 = vsel %vm333, %v400, %v402
          %v404 = vrot.slane %v273, 1
          %v405 = vrot.slane %v274, 1
          %v406 = vsel %vm333, %v404, %v405
          %v407 = vrot.slane %v275, 1
          %v408 = vsel %vm333, %v405, %v407
          %v409 = vrot.slane %v276, 1
          %v410 = vrot.slane %v277, 1
          %v411 = vsel %vm333, %v409, %v410
          %v412 = vrot.slane %v278, 1
          %v413 = vsel %vm333, %v410, %v412
          %414 = vrot.lane.b32.xlu0 %v336, 4
          %v415 = vpop.permute.xlu0 %414
          %416 = vrot.lane.b32.xlu0 %v338, 4
          %v417 = vpop.permute.xlu0 %416
          %418 = vrot.lane.b32.xlu0 %v341, 4
          %v419 = vpop.permute.xlu0 %418
          %420 = vrot.lane.b32.xlu0 %v343, 4
          %v421 = vpop.permute.xlu0 %420
          %422 = vrot.lane.b32.xlu0 %v346, 4
          %v423 = vpop.permute.xlu0 %422
          %424 = vrot.lane.b32.xlu0 %v348, 4
          %v425 = vpop.permute.xlu0 %424
          %426 = vrot.lane.b32.xlu0 %v351, 4
          %v427 = vpop.permute.xlu0 %426
          %428 = vrot.lane.b32.xlu0 %v353, 4
          %v429 = vpop.permute.xlu0 %428
          %430 = vrot.lane.b32.xlu0 %v356, 4
          %v431 = vpop.permute.xlu0 %430
          %432 = vrot.lane.b32.xlu0 %v358, 4
          %v433 = vpop.permute.xlu0 %432
          %434 = vrot.lane.b32.xlu0 %v361, 4
          %v435 = vpop.permute.xlu0 %434
          %436 = vrot.lane.b32.xlu0 %v363, 4
          %v437 = vpop.permute.xlu0 %436
          %438 = vrot.lane.b32.xlu0 %v366, 4
          %v439 = vpop.permute.xlu0 %438
          %440 = vrot.lane.b32.xlu0 %v368, 4
          %v441 = vpop.permute.xlu0 %440
          %442 = vrot.lane.b32.xlu0 %v371, 4
          %v443 = vpop.permute.xlu0 %442
          %444 = vrot.lane.b32.xlu0 %v373, 4
          %v445 = vpop.permute.xlu0 %444
          %446 = vrot.lane.b32.xlu0 %v376, 4
          %v447 = vpop.permute.xlu0 %446
          %448 = vrot.lane.b32.xlu0 %v378, 4
          %v449 = vpop.permute.xlu0 %448
          %450 = vrot.lane.b32.xlu0 %v381, 4
          %v451 = vpop.permute.xlu0 %450
          %452 = vrot.lane.b32.xlu0 %v383, 4
          %v453 = vpop.permute.xlu0 %452
          %454 = vrot.lane.b32.xlu0 %v386, 4
          %v455 = vpop.permute.xlu0 %454
          %456 = vrot.lane.b32.xlu0 %v388, 4
          %v457 = vpop.permute.xlu0 %456
          %458 = vrot.lane.b32.xlu0 %v391, 4
          %v459 = vpop.permute.xlu0 %458
          %460 = vrot.lane.b32.xlu0 %v393, 4
          %v461 = vpop.permute.xlu0 %460
          %462 = vrot.lane.b32.xlu0 %v396, 4
          %v463 = vpop.permute.xlu0 %462
          %464 = vrot.lane.b32.xlu0 %v398, 4
          %v465 = vpop.permute.xlu0 %464
          %466 = vrot.lane.b32.xlu0 %v401, 4
          %v467 = vpop.permute.xlu0 %466
          %468 = vrot.lane.b32.xlu0 %v403, 4
          %v469 = vpop.permute.xlu0 %468
          %470 = vrot.lane.b32.xlu0 %v406, 4
          %v471 = vpop.permute.xlu0 %470
          %472 = vrot.lane.b32.xlu0 %v408, 4
          %v473 = vpop.permute.xlu0 %472
          %474 = vrot.lane.b32.xlu0 %v411, 4
          %v475 = vpop.permute.xlu0 %474
          %476 = vrot.lane.b32.xlu0 %v413, 4
          %v477 = vpop.permute.xlu0 %476
          %vm510 = vcmask 1045504
          %v511 = vrot.slane %v231, 2
          %v512 = vrot.slane %v232, 2
          %v513 = vsel %vm510, %v511, %v512
          %v514 = vrot.slane %v233, 2
          %v515 = vsel %vm510, %v512, %v514
          %v516 = vrot.slane %v234, 2
          %v517 = vrot.slane %v235, 2
          %v518 = vsel %vm510, %v516, %v517
          %v519 = vrot.slane %v236, 2
          %v520 = vsel %vm510, %v517, %v519
          %v521 = vrot.slane %v237, 2
          %v522 = vrot.slane %v238, 2
          %v523 = vsel %vm510, %v521, %v522
          %v524 = vrot.slane %v239, 2
          %v525 = vsel %vm510, %v522, %v524
          %v526 = vrot.slane %v240, 2
          %v527 = vrot.slane %v241, 2
          %v528 = vsel %vm510, %v526, %v527
          %v529 = vrot.slane %v242, 2
          %v530 = vsel %vm510, %v527, %v529
          %v531 = vrot.slane %v243, 2
          %v532 = vrot.slane %v244, 2
          %v533 = vsel %vm510, %v531, %v532
          %v534 = vrot.slane %v245, 2
          %v535 = vsel %vm510, %v532, %v534
          %v536 = vrot.slane %v246, 2
          %v537 = vrot.slane %v247, 2
          %v538 = vsel %vm510, %v536, %v537
          %v539 = vrot.slane %v248, 2
          %v540 = vsel %vm510, %v537, %v539
          %v541 = vrot.slane %v249, 2
          %v542 = vrot.slane %v250, 2
          %v543 = vsel %vm510, %v541, %v542
          %v544 = vrot.slane %v251, 2
          %v545 = vsel %vm510, %v542, %v544
          %v546 = vrot.slane %v252, 2
          %v547 = vrot.slane %v253, 2
          %v548 = vsel %vm510, %v546, %v547
          %v549 = vrot.slane %v254, 2
          %v550 = vsel %vm510, %v547, %v549
          %v551 = vrot.slane %v255, 2
          %v552 = vrot.slane %v256, 2
          %v553 = vsel %vm510, %v551, %v552
          %v554 = vrot.slane %v257, 2
          %v555 = vsel %vm510, %v552, %v554
          %v556 = vrot.slane %v258, 2
          %v557 = vrot.slane %v259, 2
          %v558 = vsel %vm510, %v556, %v557
          %v559 = vrot.slane %v260, 2
          %v560 = vsel %vm510, %v557, %v559
          %v561 = vrot.slane %v261, 2
          %v562 = vrot.slane %v262, 2
          %v563 = vsel %vm510, %v561, %v562
          %v564 = vrot.slane %v263, 2
          %v565 = vsel %vm510, %v562, %v564
          %v566 = vrot.slane %v264, 2
          %v567 = vrot.slane %v265, 2
          %v568 = vsel %vm510, %v566, %v567
          %v569 = vrot.slane %v266, 2
          %v570 = vsel %vm510, %v567, %v569
          %v571 = vrot.slane %v267, 2
          %v572 = vrot.slane %v268, 2
          %v573 = vsel %vm510, %v571, %v572
          %v574 = vrot.slane %v269, 2
          %v575 = vsel %vm510, %v572, %v574
          %v576 = vrot.slane %v270, 2
          %v577 = vrot.slane %v271, 2
          %v578 = vsel %vm510, %v576, %v577
          %v579 = vrot.slane %v272, 2
          %v580 = vsel %vm510, %v577, %v579
          %v581 = vrot.slane %v273, 2
          %v582 = vrot.slane %v274, 2
          %v583 = vsel %vm510, %v581, %v582
          %v584 = vrot.slane %v275, 2
          %v585 = vsel %vm510, %v582, %v584
          %v586 = vrot.slane %v276, 2
          %v587 = vrot.slane %v277, 2
          %v588 = vsel %vm510, %v586, %v587
          %v589 = vrot.slane %v278, 2
          %v590 = vsel %vm510, %v587, %v589
          %591 = vrot.lane.b32.xlu0 %v513, 8
          %v592 = vpop.permute.xlu0 %591
          %593 = vrot.lane.b32.xlu0 %v515, 8
          %v594 = vpop.permute.xlu0 %593
          %595 = vrot.lane.b32.xlu0 %v518, 8
          %v596 = vpop.permute.xlu0 %595
          %597 = vrot.lane.b32.xlu0 %v520, 8
          %v598 = vpop.permute.xlu0 %597
          %599 = vrot.lane.b32.xlu0 %v523, 8
          %v600 = vpop.permute.xlu0 %599
          %601 = vrot.lane.b32.xlu0 %v525, 8
          %v602 = vpop.permute.xlu0 %601
          %603 = vrot.lane.b32.xlu0 %v528, 8
          %v604 = vpop.permute.xlu0 %603
          %605 = vrot.lane.b32.xlu0 %v530, 8
          %v606 = vpop.permute.xlu0 %605
          %607 = vrot.lane.b32.xlu0 %v533, 8
          %v608 = vpop.permute.xlu0 %607
          %609 = vrot.lane.b32.xlu0 %v535, 8
          %v610 = vpop.permute.xlu0 %609
          %611 = vrot.lane.b32.xlu0 %v538, 8
          %v612 = vpop.permute.xlu0 %611
          %613 = vrot.lane.b32.xlu0 %v540, 8
          %v614 = vpop.permute.xlu0 %613
          %615 = vrot.lane.b32.xlu0 %v543, 8
          %v616 = vpop.permute.xlu0 %615
          %617 = vrot.lane.b32.xlu0 %v545, 8
          %v618 = vpop.permute.xlu0 %617
          %619 = vrot.lane.b32.xlu0 %v548, 8
          %v620 = vpop.permute.xlu0 %619
          %621 = vrot.lane.b32.xlu0 %v550, 8
          %v622 = vpop.permute.xlu0 %621
          %623 = vrot.lane.b32.xlu0 %v553, 8
          %v624 = vpop.permute.xlu0 %623
          %625 = vrot.lane.b32.xlu0 %v555, 8
          %v626 = vpop.permute.xlu0 %625
          %627 = vrot.lane.b32.xlu0 %v558, 8
          %v628 = vpop.permute.xlu0 %627
          %629 = vrot.lane.b32.xlu0 %v560, 8
          %v630 = vpop.permute.xlu0 %629
          %631 = vrot.lane.b32.xlu0 %v563, 8
          %v632 = vpop.permute.xlu0 %631
          %633 = vrot.lane.b32.xlu0 %v565, 8
          %v634 = vpop.permute.xlu0 %633
          %635 = vrot.lane.b32.xlu0 %v568, 8
          %v636 = vpop.permute.xlu0 %635
          %637 = vrot.lane.b32.xlu0 %v570, 8
          %v638 = vpop.permute.xlu0 %637
          %639 = vrot.lane.b32.xlu0 %v573, 8
          %v640 = vpop.permute.xlu0 %639
          %641 = vrot.lane.b32.xlu0 %v575, 8
          %v642 = vpop.permute.xlu0 %641
          %643 = vrot.lane.b32.xlu0 %v578, 8
          %v644 = vpop.permute.xlu0 %643
          %645 = vrot.lane.b32.xlu0 %v580, 8
          %v646 = vpop.permute.xlu0 %645
          %647 = vrot.lane.b32.xlu0 %v583, 8
          %v648 = vpop.permute.xlu0 %647
          %649 = vrot.lane.b32.xlu0 %v585, 8
          %v650 = vpop.permute.xlu0 %649
          %651 = vrot.lane.b32.xlu0 %v588, 8
          %v652 = vpop.permute.xlu0 %651
          %653 = vrot.lane.b32.xlu0 %v590, 8
          %v654 = vpop.permute.xlu0 %653
          %689 = vrot.lane.b32.xlu0 %v234, 12
          %v690 = vpop.permute.xlu0 %689
          %691 = vrot.lane.b32.xlu0 %v235, 12
          %v692 = vpop.permute.xlu0 %691
          %693 = vrot.lane.b32.xlu0 %v237, 12
          %v694 = vpop.permute.xlu0 %693
          %695 = vrot.lane.b32.xlu0 %v238, 12
          %v696 = vpop.permute.xlu0 %695
          %697 = vrot.lane.b32.xlu0 %v240, 12
          %v698 = vpop.permute.xlu0 %697
          %699 = vrot.lane.b32.xlu0 %v241, 12
          %v700 = vpop.permute.xlu0 %699
          %701 = vrot.lane.b32.xlu0 %v243, 12
          %v702 = vpop.permute.xlu0 %701
          %703 = vrot.lane.b32.xlu0 %v244, 12
          %v704 = vpop.permute.xlu0 %703
          %705 = vrot.lane.b32.xlu0 %v246, 12
          %v706 = vpop.permute.xlu0 %705
          %707 = vrot.lane.b32.xlu0 %v247, 12
          %v708 = vpop.permute.xlu0 %707
          %709 = vrot.lane.b32.xlu0 %v249, 12
          %v710 = vpop.permute.xlu0 %709
          %711 = vrot.lane.b32.xlu0 %v250, 12
          %v712 = vpop.permute.xlu0 %711
          %713 = vrot.lane.b32.xlu0 %v252, 12
          %v714 = vpop.permute.xlu0 %713
          %715 = vrot.lane.b32.xlu0 %v253, 12
          %v716 = vpop.permute.xlu0 %715
          %717 = vrot.lane.b32.xlu0 %v255, 12
          %v718 = vpop.permute.xlu0 %717
          %719 = vrot.lane.b32.xlu0 %v256, 12
          %v720 = vpop.permute.xlu0 %719
          %721 = vrot.lane.b32.xlu0 %v258, 12
          %v722 = vpop.permute.xlu0 %721
          %723 = vrot.lane.b32.xlu0 %v259, 12
          %v724 = vpop.permute.xlu0 %723
          %725 = vrot.lane.b32.xlu0 %v261, 12
          %v726 = vpop.permute.xlu0 %725
          %727 = vrot.lane.b32.xlu0 %v262, 12
          %v728 = vpop.permute.xlu0 %727
          %729 = vrot.lane.b32.xlu0 %v264, 12
          %v730 = vpop.permute.xlu0 %729
          %731 = vrot.lane.b32.xlu0 %v265, 12
          %v732 = vpop.permute.xlu0 %731
          %733 = vrot.lane.b32.xlu0 %v267, 12
          %v734 = vpop.permute.xlu0 %733
          %735 = vrot.lane.b32.xlu0 %v268, 12
          %v736 = vpop.permute.xlu0 %735
          %737 = vrot.lane.b32.xlu0 %v270, 12
          %v738 = vpop.permute.xlu0 %737
          %739 = vrot.lane.b32.xlu0 %v271, 12
          %v740 = vpop.permute.xlu0 %739
          %741 = vrot.lane.b32.xlu0 %v273, 12
          %v742 = vpop.permute.xlu0 %741
          %743 = vrot.lane.b32.xlu0 %v274, 12
          %v744 = vpop.permute.xlu0 %743
          %745 = vrot.lane.b32.xlu0 %v276, 12
          %v746 = vpop.permute.xlu0 %745
          %747 = vrot.lane.b32.xlu0 %v277, 12
          %v748 = vpop.permute.xlu0 %747
          %749 = vrot.lane.b32.xlu0 %v279, 12
          %v750 = vpop.permute.xlu0 %749
          %751 = vrot.lane.b32.xlu0 %v280, 12
          %v752 = vpop.permute.xlu0 %751
          %v786 = vrot.slane %v279, 1
          %v787 = vrot.slane %v280, 1
          %v788 = vsel %vm333, %v786, %v787
          %v789 = vrot.slane %v281, 1
          %v790 = vsel %vm333, %v787, %v789
          %791 = vrot.lane.b32.xlu0 %v341, 16
          %v792 = vpop.permute.xlu0 %791
          %793 = vrot.lane.b32.xlu0 %v343, 16
          %v794 = vpop.permute.xlu0 %793
          %795 = vrot.lane.b32.xlu0 %v346, 16
          %v796 = vpop.permute.xlu0 %795
          %797 = vrot.lane.b32.xlu0 %v348, 16
          %v798 = vpop.permute.xlu0 %797
          %799 = vrot.lane.b32.xlu0 %v351, 16
          %v800 = vpop.permute.xlu0 %799
          %801 = vrot.lane.b32.xlu0 %v353, 16
          %v802 = vpop.permute.xlu0 %801
          %803 = vrot.lane.b32.xlu0 %v356, 16
          %v804 = vpop.permute.xlu0 %803
          %805 = vrot.lane.b32.xlu0 %v358, 16
          %v806 = vpop.permute.xlu0 %805
          %807 = vrot.lane.b32.xlu0 %v361, 16
          %v808 = vpop.permute.xlu0 %807
          %809 = vrot.lane.b32.xlu0 %v363, 16
          %v810 = vpop.permute.xlu0 %809
          %811 = vrot.lane.b32.xlu0 %v366, 16
          %v812 = vpop.permute.xlu0 %811
          %813 = vrot.lane.b32.xlu0 %v368, 16
          %v814 = vpop.permute.xlu0 %813
          %815 = vrot.lane.b32.xlu0 %v371, 16
          %v816 = vpop.permute.xlu0 %815
          %817 = vrot.lane.b32.xlu0 %v373, 16
          %v818 = vpop.permute.xlu0 %817
          %819 = vrot.lane.b32.xlu0 %v376, 16
          %v820 = vpop.permute.xlu0 %819
          %821 = vrot.lane.b32.xlu0 %v378, 16
          %v822 = vpop.permute.xlu0 %821
          %823 = vrot.lane.b32.xlu0 %v381, 16
          %v824 = vpop.permute.xlu0 %823
          %825 = vrot.lane.b32.xlu0 %v383, 16
          %v826 = vpop.permute.xlu0 %825
          %827 = vrot.lane.b32.xlu0 %v386, 16
          %v828 = vpop.permute.xlu0 %827
          %829 = vrot.lane.b32.xlu0 %v388, 16
          %v830 = vpop.permute.xlu0 %829
          %831 = vrot.lane.b32.xlu0 %v391, 16
          %v832 = vpop.permute.xlu0 %831
          %833 = vrot.lane.b32.xlu0 %v393, 16
          %v834 = vpop.permute.xlu0 %833
          %835 = vrot.lane.b32.xlu0 %v396, 16
          %v836 = vpop.permute.xlu0 %835
          %837 = vrot.lane.b32.xlu0 %v398, 16
          %v838 = vpop.permute.xlu0 %837
          %839 = vrot.lane.b32.xlu0 %v401, 16
          %v840 = vpop.permute.xlu0 %839
          %841 = vrot.lane.b32.xlu0 %v403, 16
          %v842 = vpop.permute.xlu0 %841
          %843 = vrot.lane.b32.xlu0 %v406, 16
          %v844 = vpop.permute.xlu0 %843
          %845 = vrot.lane.b32.xlu0 %v408, 16
          %v846 = vpop.permute.xlu0 %845
          %847 = vrot.lane.b32.xlu0 %v411, 16
          %v848 = vpop.permute.xlu0 %847
          %849 = vrot.lane.b32.xlu0 %v413, 16
          %v850 = vpop.permute.xlu0 %849
          %851 = vrot.lane.b32.xlu0 %v788, 16
          %v852 = vpop.permute.xlu0 %851
          %853 = vrot.lane.b32.xlu0 %v790, 16
          %v854 = vpop.permute.xlu0 %853
          %v887 = vrot.slane %v279, 2
          %v888 = vrot.slane %v280, 2
          %v889 = vsel %vm510, %v887, %v888
          %v890 = vrot.slane %v281, 2
          %v891 = vsel %vm510, %v888, %v890
          %892 = vrot.lane.b32.xlu0 %v518, 20
          %v893 = vpop.permute.xlu0 %892
          %894 = vrot.lane.b32.xlu0 %v520, 20
          %v895 = vpop.permute.xlu0 %894
          %896 = vrot.lane.b32.xlu0 %v523, 20
          %v897 = vpop.permute.xlu0 %896
          %898 = vrot.lane.b32.xlu0 %v525, 20
          %v899 = vpop.permute.xlu0 %898
          %900 = vrot.lane.b32.xlu0 %v528, 20
          %v901 = vpop.permute.xlu0 %900
          %902 = vrot.lane.b32.xlu0 %v530, 20
          %v903 = vpop.permute.xlu0 %902
          %904 = vrot.lane.b32.xlu0 %v533, 20
          %v905 = vpop.permute.xlu0 %904
          %906 = vrot.lane.b32.xlu0 %v535, 20
          %v907 = vpop.permute.xlu0 %906
          %908 = vrot.lane.b32.xlu0 %v538, 20
          %v909 = vpop.permute.xlu0 %908
          %910 = vrot.lane.b32.xlu0 %v540, 20
          %v911 = vpop.permute.xlu0 %910
          %912 = vrot.lane.b32.xlu0 %v543, 20
          %v913 = vpop.permute.xlu0 %912
          %914 = vrot.lane.b32.xlu0 %v545, 20
          %v915 = vpop.permute.xlu0 %914
          %916 = vrot.lane.b32.xlu0 %v548, 20
          %v917 = vpop.permute.xlu0 %916
          %918 = vrot.lane.b32.xlu0 %v550, 20
          %v919 = vpop.permute.xlu0 %918
          %920 = vrot.lane.b32.xlu0 %v553, 20
          %v921 = vpop.permute.xlu0 %920
          %922 = vrot.lane.b32.xlu0 %v555, 20
          %v923 = vpop.permute.xlu0 %922
          %924 = vrot.lane.b32.xlu0 %v558, 20
          %v925 = vpop.permute.xlu0 %924
          %926 = vrot.lane.b32.xlu0 %v560, 20
          %v927 = vpop.permute.xlu0 %926
          %928 = vrot.lane.b32.xlu0 %v563, 20
          %v929 = vpop.permute.xlu0 %928
          %930 = vrot.lane.b32.xlu0 %v565, 20
          %v931 = vpop.permute.xlu0 %930
          %932 = vrot.lane.b32.xlu0 %v568, 20
          %v933 = vpop.permute.xlu0 %932
          %934 = vrot.lane.b32.xlu0 %v570, 20
          %v935 = vpop.permute.xlu0 %934
          %936 = vrot.lane.b32.xlu0 %v573, 20
          %v937 = vpop.permute.xlu0 %936
          %938 = vrot.lane.b32.xlu0 %v575, 20
          %v939 = vpop.permute.xlu0 %938
          %940 = vrot.lane.b32.xlu0 %v578, 20
          %v941 = vpop.permute.xlu0 %940
          %942 = vrot.lane.b32.xlu0 %v580, 20
          %v943 = vpop.permute.xlu0 %942
          %944 = vrot.lane.b32.xlu0 %v583, 20
          %v945 = vpop.permute.xlu0 %944
          %946 = vrot.lane.b32.xlu0 %v585, 20
          %v947 = vpop.permute.xlu0 %946
          %948 = vrot.lane.b32.xlu0 %v588, 20
          %v949 = vpop.permute.xlu0 %948
          %950 = vrot.lane.b32.xlu0 %v590, 20
          %v951 = vpop.permute.xlu0 %950
          %952 = vrot.lane.b32.xlu0 %v889, 20
          %v953 = vpop.permute.xlu0 %952
          %954 = vrot.lane.b32.xlu0 %v891, 20
          %v955 = vpop.permute.xlu0 %954
          %990 = vrot.lane.b32.xlu0 %v237, 24
          %v991 = vpop.permute.xlu0 %990
          %992 = vrot.lane.b32.xlu0 %v238, 24
          %v993 = vpop.permute.xlu0 %992
          %994 = vrot.lane.b32.xlu0 %v240, 24
          %v995 = vpop.permute.xlu0 %994
          %996 = vrot.lane.b32.xlu0 %v241, 24
          %v997 = vpop.permute.xlu0 %996
          %998 = vrot.lane.b32.xlu0 %v243, 24
          %v999 = vpop.permute.xlu0 %998
          %1000 = vrot.lane.b32.xlu0 %v244, 24
          %v1001 = vpop.permute.xlu0 %1000
          %1002 = vrot.lane.b32.xlu0 %v246, 24
          %v1003 = vpop.permute.xlu0 %1002
          %1004 = vrot.lane.b32.xlu0 %v247, 24
          %v1005 = vpop.permute.xlu0 %1004
          %1006 = vrot.lane.b32.xlu0 %v249, 24
          %v1007 = vpop.permute.xlu0 %1006
          %1008 = vrot.lane.b32.xlu0 %v250, 24
          %v1009 = vpop.permute.xlu0 %1008
          %1010 = vrot.lane.b32.xlu0 %v252, 24
          %v1011 = vpop.permute.xlu0 %1010
          %1012 = vrot.lane.b32.xlu0 %v253, 24
          %v1013 = vpop.permute.xlu0 %1012
          %1014 = vrot.lane.b32.xlu0 %v255, 24
          %v1015 = vpop.permute.xlu0 %1014
          %1016 = vrot.lane.b32.xlu0 %v256, 24
          %v1017 = vpop.permute.xlu0 %1016
          %1018 = vrot.lane.b32.xlu0 %v258, 24
          %v1019 = vpop.permute.xlu0 %1018
          %1020 = vrot.lane.b32.xlu0 %v259, 24
          %v1021 = vpop.permute.xlu0 %1020
          %1022 = vrot.lane.b32.xlu0 %v261, 24
          %v1023 = vpop.permute.xlu0 %1022
          %1024 = vrot.lane.b32.xlu0 %v262, 24
          %v1025 = vpop.permute.xlu0 %1024
          %1026 = vrot.lane.b32.xlu0 %v264, 24
          %v1027 = vpop.permute.xlu0 %1026
          %1028 = vrot.lane.b32.xlu0 %v265, 24
          %v1029 = vpop.permute.xlu0 %1028
          %1030 = vrot.lane.b32.xlu0 %v267, 24
          %v1031 = vpop.permute.xlu0 %1030
          %1032 = vrot.lane.b32.xlu0 %v268, 24
          %v1033 = vpop.permute.xlu0 %1032
          %1034 = vrot.lane.b32.xlu0 %v270, 24
          %v1035 = vpop.permute.xlu0 %1034
          %1036 = vrot.lane.b32.xlu0 %v271, 24
          %v1037 = vpop.permute.xlu0 %1036
          %1038 = vrot.lane.b32.xlu0 %v273, 24
          %v1039 = vpop.permute.xlu0 %1038
          %1040 = vrot.lane.b32.xlu0 %v274, 24
          %v1041 = vpop.permute.xlu0 %1040
          %1042 = vrot.lane.b32.xlu0 %v276, 24
          %v1043 = vpop.permute.xlu0 %1042
          %1044 = vrot.lane.b32.xlu0 %v277, 24
          %v1045 = vpop.permute.xlu0 %1044
          %1046 = vrot.lane.b32.xlu0 %v279, 24
          %v1047 = vpop.permute.xlu0 %1046
          %1048 = vrot.lane.b32.xlu0 %v280, 24
          %v1049 = vpop.permute.xlu0 %1048
          %1050 = vrot.lane.b32.xlu0 %v282, 24
          %v1051 = vpop.permute.xlu0 %1050
          %1052 = vrot.lane.b32.xlu0 %v283, 24
          %v1053 = vpop.permute.xlu0 %1052
          %v1087 = vrot.slane %v282, 1
          %v1088 = vrot.slane %v283, 1
          %v1089 = vsel %vm333, %v1087, %v1088
          %v1090 = vrot.slane %v284, 1
          %v1091 = vsel %vm333, %v1088, %v1090
          %1092 = vrot.lane.b32.xlu0 %v346, 28
          %v1093 = vpop.permute.xlu0 %1092
          %1094 = vrot.lane.b32.xlu0 %v348, 28
          %v1095 = vpop.permute.xlu0 %1094
          %1096 = vrot.lane.b32.xlu0 %v351, 28
          %v1097 = vpop.permute.xlu0 %1096
          %1098 = vrot.lane.b32.xlu0 %v353, 28
          %v1099 = vpop.permute.xlu0 %1098
          %1100 = vrot.lane.b32.xlu0 %v356, 28
          %v1101 = vpop.permute.xlu0 %1100
          %1102 = vrot.lane.b32.xlu0 %v358, 28
          %v1103 = vpop.permute.xlu0 %1102
          %1104 = vrot.lane.b32.xlu0 %v361, 28
          %v1105 = vpop.permute.xlu0 %1104
          %1106 = vrot.lane.b32.xlu0 %v363, 28
          %v1107 = vpop.permute.xlu0 %1106
          %1108 = vrot.lane.b32.xlu0 %v366, 28
          %v1109 = vpop.permute.xlu0 %1108
          %1110 = vrot.lane.b32.xlu0 %v368, 28
          %v1111 = vpop.permute.xlu0 %1110
          %1112 = vrot.lane.b32.xlu0 %v371, 28
          %v1113 = vpop.permute.xlu0 %1112
          %1114 = vrot.lane.b32.xlu0 %v373, 28
          %v1115 = vpop.permute.xlu0 %1114
          %1116 = vrot.lane.b32.xlu0 %v376, 28
          %v1117 = vpop.permute.xlu0 %1116
          %1118 = vrot.lane.b32.xlu0 %v378, 28
          %v1119 = vpop.permute.xlu0 %1118
          %1120 = vrot.lane.b32.xlu0 %v381, 28
          %v1121 = vpop.permute.xlu0 %1120
          %1122 = vrot.lane.b32.xlu0 %v383, 28
          %v1123 = vpop.permute.xlu0 %1122
          %1124 = vrot.lane.b32.xlu0 %v386, 28
          %v1125 = vpop.permute.xlu0 %1124
          %1126 = vrot.lane.b32.xlu0 %v388, 28
          %v1127 = vpop.permute.xlu0 %1126
          %1128 = vrot.lane.b32.xlu0 %v391, 28
          %v1129 = vpop.permute.xlu0 %1128
          %1130 = vrot.lane.b32.xlu0 %v393, 28
          %v1131 = vpop.permute.xlu0 %1130
          %1132 = vrot.lane.b32.xlu0 %v396, 28
          %v1133 = vpop.permute.xlu0 %1132
          %1134 = vrot.lane.b32.xlu0 %v398, 28
          %v1135 = vpop.permute.xlu0 %1134
          %1136 = vrot.lane.b32.xlu0 %v401, 28
          %v1137 = vpop.permute.xlu0 %1136
          %1138 = vrot.lane.b32.xlu0 %v403, 28
          %v1139 = vpop.permute.xlu0 %1138
          %1140 = vrot.lane.b32.xlu0 %v406, 28
          %v1141 = vpop.permute.xlu0 %1140
          %1142 = vrot.lane.b32.xlu0 %v408, 28
          %v1143 = vpop.permute.xlu0 %1142
          %1144 = vrot.lane.b32.xlu0 %v411, 28
          %v1145 = vpop.permute.xlu0 %1144
          %1146 = vrot.lane.b32.xlu0 %v413, 28
          %v1147 = vpop.permute.xlu0 %1146
          %1148 = vrot.lane.b32.xlu0 %v788, 28
          %v1149 = vpop.permute.xlu0 %1148
          %1150 = vrot.lane.b32.xlu0 %v790, 28
          %v1151 = vpop.permute.xlu0 %1150
          %1152 = vrot.lane.b32.xlu0 %v1089, 28
          %v1153 = vpop.permute.xlu0 %1152
          %1154 = vrot.lane.b32.xlu0 %v1091, 28
          %v1155 = vpop.permute.xlu0 %1154
          %v1188 = vrot.slane %v282, 2
          %v1189 = vrot.slane %v283, 2
          %v1190 = vsel %vm510, %v1188, %v1189
          %v1191 = vrot.slane %v284, 2
          %v1192 = vsel %vm510, %v1189, %v1191
          %1193 = vrot.lane.b32.xlu0 %v523, 32
          %v1194 = vpop.permute.xlu0 %1193
          %1195 = vrot.lane.b32.xlu0 %v525, 32
          %v1196 = vpop.permute.xlu0 %1195
          %1197 = vrot.lane.b32.xlu0 %v528, 32
          %v1198 = vpop.permute.xlu0 %1197
          %1199 = vrot.lane.b32.xlu0 %v530, 32
          %v1200 = vpop.permute.xlu0 %1199
          %1201 = vrot.lane.b32.xlu0 %v533, 32
          %v1202 = vpop.permute.xlu0 %1201
          %1203 = vrot.lane.b32.xlu0 %v535, 32
          %v1204 = vpop.permute.xlu0 %1203
          %1205 = vrot.lane.b32.xlu0 %v538, 32
          %v1206 = vpop.permute.xlu0 %1205
          %1207 = vrot.lane.b32.xlu0 %v540, 32
          %v1208 = vpop.permute.xlu0 %1207
          %1209 = vrot.lane.b32.xlu0 %v543, 32
          %v1210 = vpop.permute.xlu0 %1209
          %1211 = vrot.lane.b32.xlu0 %v545, 32
          %v1212 = vpop.permute.xlu0 %1211
          %1213 = vrot.lane.b32.xlu0 %v548, 32
          %v1214 = vpop.permute.xlu0 %1213
          %1215 = vrot.lane.b32.xlu0 %v550, 32
          %v1216 = vpop.permute.xlu0 %1215
          %1217 = vrot.lane.b32.xlu0 %v553, 32
          %v1218 = vpop.permute.xlu0 %1217
          %1219 = vrot.lane.b32.xlu0 %v555, 32
          %v1220 = vpop.permute.xlu0 %1219
          %1221 = vrot.lane.b32.xlu0 %v558, 32
          %v1222 = vpop.permute.xlu0 %1221
          %1223 = vrot.lane.b32.xlu0 %v560, 32
          %v1224 = vpop.permute.xlu0 %1223
          %1225 = vrot.lane.b32.xlu0 %v563, 32
          %v1226 = vpop.permute.xlu0 %1225
          %1227 = vrot.lane.b32.xlu0 %v565, 32
          %v1228 = vpop.permute.xlu0 %1227
          %1229 = vrot.lane.b32.xlu0 %v568, 32
          %v1230 = vpop.permute.xlu0 %1229
          %1231 = vrot.lane.b32.xlu0 %v570, 32
          %v1232 = vpop.permute.xlu0 %1231
          %1233 = vrot.lane.b32.xlu0 %v573, 32
          %v1234 = vpop.permute.xlu0 %1233
          %1235 = vrot.lane.b32.xlu0 %v575, 32
          %v1236 = vpop.permute.xlu0 %1235
          %1237 = vrot.lane.b32.xlu0 %v578, 32
          %v1238 = vpop.permute.xlu0 %1237
          %1239 = vrot.lane.b32.xlu0 %v580, 32
          %v1240 = vpop.permute.xlu0 %1239
          %1241 = vrot.lane.b32.xlu0 %v583, 32
          %v1242 = vpop.permute.xlu0 %1241
          %1243 = vrot.lane.b32.xlu0 %v585, 32
          %v1244 = vpop.permute.xlu0 %1243
          %1245 = vrot.lane.b32.xlu0 %v588, 32
          %v1246 = vpop.permute.xlu0 %1245
          %1247 = vrot.lane.b32.xlu0 %v590, 32
          %v1248 = vpop.permute.xlu0 %1247
          %1249 = vrot.lane.b32.xlu0 %v889, 32
          %v1250 = vpop.permute.xlu0 %1249
          %1251 = vrot.lane.b32.xlu0 %v891, 32
          %v1252 = vpop.permute.xlu0 %1251
          %1253 = vrot.lane.b32.xlu0 %v1190, 32
          %v1254 = vpop.permute.xlu0 %1253
          %1255 = vrot.lane.b32.xlu0 %v1192, 32
          %v1256 = vpop.permute.xlu0 %1255
          %vm1289 = vcmask 31744
          %v1290 = vsel %vm1289, %v231, %v415
          %v1291 = vsel %vm1289, %v232, %v417
          %v1292 = vsel %vm1289, %v234, %v419
          %v1293 = vsel %vm1289, %v235, %v421
          %v1294 = vsel %vm1289, %v237, %v423
          %v1295 = vsel %vm1289, %v238, %v425
          %v1296 = vsel %vm1289, %v240, %v427
          %v1297 = vsel %vm1289, %v241, %v429
          %v1298 = vsel %vm1289, %v243, %v431
          %v1299 = vsel %vm1289, %v244, %v433
          %v1300 = vsel %vm1289, %v246, %v435
          %v1301 = vsel %vm1289, %v247, %v437
          %v1302 = vsel %vm1289, %v249, %v439
          %v1303 = vsel %vm1289, %v250, %v441
          %v1304 = vsel %vm1289, %v252, %v443
          %v1305 = vsel %vm1289, %v253, %v445
          %v1306 = vsel %vm1289, %v255, %v447
          %v1307 = vsel %vm1289, %v256, %v449
          %v1308 = vsel %vm1289, %v258, %v451
          %v1309 = vsel %vm1289, %v259, %v453
          %v1310 = vsel %vm1289, %v261, %v455
          %v1311 = vsel %vm1289, %v262, %v457
          %v1312 = vsel %vm1289, %v264, %v459
          %v1313 = vsel %vm1289, %v265, %v461
          %v1314 = vsel %vm1289, %v267, %v463
          %v1315 = vsel %vm1289, %v268, %v465
          %v1316 = vsel %vm1289, %v270, %v467
          %v1317 = vsel %vm1289, %v271, %v469
          %v1318 = vsel %vm1289, %v273, %v471
          %v1319 = vsel %vm1289, %v274, %v473
          %v1320 = vsel %vm1289, %v276, %v475
          %v1321 = vsel %vm1289, %v277, %v477
          %vm1322 = vcmask 64512
          %v1323 = vsel %vm1322, %v1290, %v592
          %v1324 = vsel %vm1322, %v1291, %v594
          %v1325 = vsel %vm1322, %v1292, %v596
          %v1326 = vsel %vm1322, %v1293, %v598
          %v1327 = vsel %vm1322, %v1294, %v600
          %v1328 = vsel %vm1322, %v1295, %v602
          %v1329 = vsel %vm1322, %v1296, %v604
          %v1330 = vsel %vm1322, %v1297, %v606
          %v1331 = vsel %vm1322, %v1298, %v608
          %v1332 = vsel %vm1322, %v1299, %v610
          %v1333 = vsel %vm1322, %v1300, %v612
          %v1334 = vsel %vm1322, %v1301, %v614
          %v1335 = vsel %vm1322, %v1302, %v616
          %v1336 = vsel %vm1322, %v1303, %v618
          %v1337 = vsel %vm1322, %v1304, %v620
          %v1338 = vsel %vm1322, %v1305, %v622
          %v1339 = vsel %vm1322, %v1306, %v624
          %v1340 = vsel %vm1322, %v1307, %v626
          %v1341 = vsel %vm1322, %v1308, %v628
          %v1342 = vsel %vm1322, %v1309, %v630
          %v1343 = vsel %vm1322, %v1310, %v632
          %v1344 = vsel %vm1322, %v1311, %v634
          %v1345 = vsel %vm1322, %v1312, %v636
          %v1346 = vsel %vm1322, %v1313, %v638
          %v1347 = vsel %vm1322, %v1314, %v640
          %v1348 = vsel %vm1322, %v1315, %v642
          %v1349 = vsel %vm1322, %v1316, %v644
          %v1350 = vsel %vm1322, %v1317, %v646
          %v1351 = vsel %vm1322, %v1318, %v648
          %v1352 = vsel %vm1322, %v1319, %v650
          %v1353 = vsel %vm1322, %v1320, %v652
          %v1354 = vsel %vm1322, %v1321, %v654
          %vm1355 = vcmask 97280
          %v1356 = vsel %vm1355, %v1323, %v690
          %v1357 = vsel %vm1355, %v1324, %v692
          %v1358 = vsel %vm1355, %v1325, %v694
          %v1359 = vsel %vm1355, %v1326, %v696
          %v1360 = vsel %vm1355, %v1327, %v698
          %v1361 = vsel %vm1355, %v1328, %v700
          %v1362 = vsel %vm1355, %v1329, %v702
          %v1363 = vsel %vm1355, %v1330, %v704
          %v1364 = vsel %vm1355, %v1331, %v706
          %v1365 = vsel %vm1355, %v1332, %v708
          %v1366 = vsel %vm1355, %v1333, %v710
          %v1367 = vsel %vm1355, %v1334, %v712
          %v1368 = vsel %vm1355, %v1335, %v714
          %v1369 = vsel %vm1355, %v1336, %v716
          %v1370 = vsel %vm1355, %v1337, %v718
          %v1371 = vsel %vm1355, %v1338, %v720
          %v1372 = vsel %vm1355, %v1339, %v722
          %v1373 = vsel %vm1355, %v1340, %v724
          %v1374 = vsel %vm1355, %v1341, %v726
          %v1375 = vsel %vm1355, %v1342, %v728
          %v1376 = vsel %vm1355, %v1343, %v730
          %v1377 = vsel %vm1355, %v1344, %v732
          %v1378 = vsel %vm1355, %v1345, %v734
          %v1379 = vsel %vm1355, %v1346, %v736
          %v1380 = vsel %vm1355, %v1347, %v738
          %v1381 = vsel %vm1355, %v1348, %v740
          %v1382 = vsel %vm1355, %v1349, %v742
          %v1383 = vsel %vm1355, %v1350, %v744
          %v1384 = vsel %vm1355, %v1351, %v746
          %v1385 = vsel %vm1355, %v1352, %v748
          %v1386 = vsel %vm1355, %v1353, %v750
          %v1387 = vsel %vm1355, %v1354, %v752
          %vm1388 = vcmask 130048
          %v1389 = vsel %vm1388, %v1356, %v792
          %v1390 = vsel %vm1388, %v1357, %v794
          %v1391 = vsel %vm1388, %v1358, %v796
          %v1392 = vsel %vm1388, %v1359, %v798
          %v1393 = vsel %vm1388, %v1360, %v800
          %v1394 = vsel %vm1388, %v1361, %v802
          %v1395 = vsel %vm1388, %v1362, %v804
          %v1396 = vsel %vm1388, %v1363, %v806
          %v1397 = vsel %vm1388, %v1364, %v808
          %v1398 = vsel %vm1388, %v1365, %v810
          %v1399 = vsel %vm1388, %v1366, %v812
          %v1400 = vsel %vm1388, %v1367, %v814
          %v1401 = vsel %vm1388, %v1368, %v816
          %v1402 = vsel %vm1388, %v1369, %v818
          %v1403 = vsel %vm1388, %v1370, %v820
          %v1404 = vsel %vm1388, %v1371, %v822
          %v1405 = vsel %vm1388, %v1372, %v824
          %v1406 = vsel %vm1388, %v1373, %v826
          %v1407 = vsel %vm1388, %v1374, %v828
          %v1408 = vsel %vm1388, %v1375, %v830
          %v1409 = vsel %vm1388, %v1376, %v832
          %v1410 = vsel %vm1388, %v1377, %v834
          %v1411 = vsel %vm1388, %v1378, %v836
          %v1412 = vsel %vm1388, %v1379, %v838
          %v1413 = vsel %vm1388, %v1380, %v840
          %v1414 = vsel %vm1388, %v1381, %v842
          %v1415 = vsel %vm1388, %v1382, %v844
          %v1416 = vsel %vm1388, %v1383, %v846
          %v1417 = vsel %vm1388, %v1384, %v848
          %v1418 = vsel %vm1388, %v1385, %v850
          %v1419 = vsel %vm1388, %v1386, %v852
          %v1420 = vsel %vm1388, %v1387, %v854
          %vm1421 = vcmask 162816
          %v1422 = vsel %vm1421, %v1389, %v893
          %v1423 = vsel %vm1421, %v1390, %v895
          %v1424 = vsel %vm1421, %v1391, %v897
          %v1425 = vsel %vm1421, %v1392, %v899
          %v1426 = vsel %vm1421, %v1393, %v901
          %v1427 = vsel %vm1421, %v1394, %v903
          %v1428 = vsel %vm1421, %v1395, %v905
          %v1429 = vsel %vm1421, %v1396, %v907
          %v1430 = vsel %vm1421, %v1397, %v909
          %v1431 = vsel %vm1421, %v1398, %v911
          %v1432 = vsel %vm1421, %v1399, %v913
          %v1433 = vsel %vm1421, %v1400, %v915
          %v1434 = vsel %vm1421, %v1401, %v917
          %v1435 = vsel %vm1421, %v1402, %v919
          %v1436 = vsel %vm1421, %v1403, %v921
          %v1437 = vsel %vm1421, %v1404, %v923
          %v1438 = vsel %vm1421, %v1405, %v925
          %v1439 = vsel %vm1421, %v1406, %v927
          %v1440 = vsel %vm1421, %v1407, %v929
          %v1441 = vsel %vm1421, %v1408, %v931
          %v1442 = vsel %vm1421, %v1409, %v933
          %v1443 = vsel %vm1421, %v1410, %v935
          %v1444 = vsel %vm1421, %v1411, %v937
          %v1445 = vsel %vm1421, %v1412, %v939
          %v1446 = vsel %vm1421, %v1413, %v941
          %v1447 = vsel %vm1421, %v1414, %v943
          %v1448 = vsel %vm1421, %v1415, %v945
          %v1449 = vsel %vm1421, %v1416, %v947
          %v1450 = vsel %vm1421, %v1417, %v949
          %v1451 = vsel %vm1421, %v1418, %v951
          %v1452 = vsel %vm1421, %v1419, %v953
          %v1453 = vsel %vm1421, %v1420, %v955
          %vm1454 = vcmask 195584
          %v1455 = vsel %vm1454, %v1422, %v991
          %v1456 = vsel %vm1454, %v1423, %v993
          %v1457 = vsel %vm1454, %v1424, %v995
          %v1458 = vsel %vm1454, %v1425, %v997
          %v1459 = vsel %vm1454, %v1426, %v999
          %v1460 = vsel %vm1454, %v1427, %v1001
          %v1461 = vsel %vm1454, %v1428, %v1003
          %v1462 = vsel %vm1454, %v1429, %v1005
          %v1463 = vsel %vm1454, %v1430, %v1007
          %v1464 = vsel %vm1454, %v1431, %v1009
          %v1465 = vsel %vm1454, %v1432, %v1011
          %v1466 = vsel %vm1454, %v1433, %v1013
          %v1467 = vsel %vm1454, %v1434, %v1015
          %v1468 = vsel %vm1454, %v1435, %v1017
          %v1469 = vsel %vm1454, %v1436, %v1019
          %v1470 = vsel %vm1454, %v1437, %v1021
          %v1471 = vsel %vm1454, %v1438, %v1023
          %v1472 = vsel %vm1454, %v1439, %v1025
          %v1473 = vsel %vm1454, %v1440, %v1027
          %v1474 = vsel %vm1454, %v1441, %v1029
          %v1475 = vsel %vm1454, %v1442, %v1031
          %v1476 = vsel %vm1454, %v1443, %v1033
          %v1477 = vsel %vm1454, %v1444, %v1035
          %v1478 = vsel %vm1454, %v1445, %v1037
          %v1479 = vsel %vm1454, %v1446, %v1039
          %v1480 = vsel %vm1454, %v1447, %v1041
          %v1481 = vsel %vm1454, %v1448, %v1043
          %v1482 = vsel %vm1454, %v1449, %v1045
          %v1483 = vsel %vm1454, %v1450, %v1047
          %v1484 = vsel %vm1454, %v1451, %v1049
          %v1485 = vsel %vm1454, %v1452, %v1051
          %v1486 = vsel %vm1454, %v1453, %v1053
          %vm1487 = vcmask 228352
          %v1488 = vsel %vm1487, %v1455, %v1093
          %v1489 = vsel %vm1487, %v1456, %v1095
          %v1490 = vsel %vm1487, %v1457, %v1097
          %v1491 = vsel %vm1487, %v1458, %v1099
          %v1492 = vsel %vm1487, %v1459, %v1101
          %v1493 = vsel %vm1487, %v1460, %v1103
          %v1494 = vsel %vm1487, %v1461, %v1105
          %v1495 = vsel %vm1487, %v1462, %v1107
          %v1496 = vsel %vm1487, %v1463, %v1109
          %v1497 = vsel %vm1487, %v1464, %v1111
          %v1498 = vsel %vm1487, %v1465, %v1113
          %v1499 = vsel %vm1487, %v1466, %v1115
          %v1500 = vsel %vm1487, %v1467, %v1117
          %v1501 = vsel %vm1487, %v1468, %v1119
          %v1502 = vsel %vm1487, %v1469, %v1121
          %v1503 = vsel %vm1487, %v1470, %v1123
          %v1504 = vsel %vm1487, %v1471, %v1125
          %v1505 = vsel %vm1487, %v1472, %v1127
          %v1506 = vsel %vm1487, %v1473, %v1129
          %v1507 = vsel %vm1487, %v1474, %v1131
          %v1508 = vsel %vm1487, %v1475, %v1133
          %v1509 = vsel %vm1487, %v1476, %v1135
          %v1510 = vsel %vm1487, %v1477, %v1137
          %v1511 = vsel %vm1487, %v1478, %v1139
          %v1512 = vsel %vm1487, %v1479, %v1141
          %v1513 = vsel %vm1487, %v1480, %v1143
          %v1514 = vsel %vm1487, %v1481, %v1145
          %v1515 = vsel %vm1487, %v1482, %v1147
          %v1516 = vsel %vm1487, %v1483, %v1149
          %v1517 = vsel %vm1487, %v1484, %v1151
          %v1518 = vsel %vm1487, %v1485, %v1153
          %v1519 = vsel %vm1487, %v1486, %v1155
          %vm1520 = vcmask 261120
          %v1521 = vsel %vm1520, %v1488, %v1194
          %v1522 = vsel %vm1520, %v1489, %v1196
          %v1523 = vsel %vm1520, %v1490, %v1198
          %v1524 = vsel %vm1520, %v1491, %v1200
          %v1525 = vsel %vm1520, %v1492, %v1202
          %v1526 = vsel %vm1520, %v1493, %v1204
          %v1527 = vsel %vm1520, %v1494, %v1206
          %v1528 = vsel %vm1520, %v1495, %v1208
          %v1529 = vsel %vm1520, %v1496, %v1210
          %v1530 = vsel %vm1520, %v1497, %v1212
          %v1531 = vsel %vm1520, %v1498, %v1214
          %v1532 = vsel %vm1520, %v1499, %v1216
          %v1533 = vsel %vm1520, %v1500, %v1218
          %v1534 = vsel %vm1520, %v1501, %v1220
          %v1535 = vsel %vm1520, %v1502, %v1222
          %v1536 = vsel %vm1520, %v1503, %v1224
          %v1537 = vsel %vm1520, %v1504, %v1226
          %v1538 = vsel %vm1520, %v1505, %v1228
          %v1539 = vsel %vm1520, %v1506, %v1230
          %v1540 = vsel %vm1520, %v1507, %v1232
          %v1541 = vsel %vm1520, %v1508, %v1234
          %v1542 = vsel %vm1520, %v1509, %v1236
          %v1543 = vsel %vm1520, %v1510, %v1238
          %v1544 = vsel %vm1520, %v1511, %v1240
          %v1545 = vsel %vm1520, %v1512, %v1242
          %v1546 = vsel %vm1520, %v1513, %v1244
          %v1547 = vsel %vm1520, %v1514, %v1246
          %v1548 = vsel %vm1520, %v1515, %v1248
          %v1549 = vsel %vm1520, %v1516, %v1250
          %v1550 = vsel %vm1520, %v1517, %v1252
          %v1551 = vsel %vm1520, %v1518, %v1254
          %v1552 = vsel %vm1520, %v1519, %v1256
          %vm1553 = vcmask 293888
          %1554 = vst.msk [vmem:[#allocation2] sm:$0xff] %vm1553, %v1521
          %1555 = vst.msk [vmem:[#allocation2 + $0x8] sm:$0xff] %vm1553, %v1522
          %1556 = vst.msk [vmem:[#allocation2 + $0x10] sm:$0xff] %vm1553, %v1523
          %1557 = vst.msk [vmem:[#allocation2 + $0x18] sm:$0xff] %vm1553, %v1524
          %1558 = vst.msk [vmem:[#allocation2 + $0x20] sm:$0xff] %vm1553, %v1525
          %1559 = vst.msk [vmem:[#allocation2 + $0x28] sm:$0xff] %vm1553, %v1526
          %1560 = vst.msk [vmem:[#allocation2 + $0x30] sm:$0xff] %vm1553, %v1527
          %1561 = vst.msk [vmem:[#allocation2 + $0x38] sm:$0xff] %vm1553, %v1528
          %1562 = vst.msk [vmem:[#allocation2 + $0x40] sm:$0xff] %vm1553, %v1529
          %1563 = vst.msk [vmem:[#allocation2 + $0x48] sm:$0xff] %vm1553, %v1530
          %1564 = vst.msk [vmem:[#allocation2 + $0x50] sm:$0xff] %vm1553, %v1531
          %1565 = vst.msk [vmem:[#allocation2 + $0x58] sm:$0xff] %vm1553, %v1532
          %1566 = vst.msk [vmem:[#allocation2 + $0x60] sm:$0xff] %vm1553, %v1533
          %1567 = vst.msk [vmem:[#allocation2 + $0x68] sm:$0xff] %vm1553, %v1534
          %1568 = vst.msk [vmem:[#allocation2 + $0x70] sm:$0xff] %vm1553, %v1535
          %1569 = vst.msk [vmem:[#allocation2 + $0x78] sm:$0xff] %vm1553, %v1536
          %1570 = vst.msk [vmem:[#allocation2 + $0x80] sm:$0xff] %vm1553, %v1537
          %1571 = vst.msk [vmem:[#allocation2 + $0x88] sm:$0xff] %vm1553, %v1538
          %1572 = vst.msk [vmem:[#allocation2 + $0x90] sm:$0xff] %vm1553, %v1539
          %1573 = vst.msk [vmem:[#allocation2 + $0x98] sm:$0xff] %vm1553, %v1540
          %1574 = vst.msk [vmem:[#allocation2 + $0xa0] sm:$0xff] %vm1553, %v1541
          %1575 = vst.msk [vmem:[#allocation2 + $0xa8] sm:$0xff] %vm1553, %v1542
          %1576 = vst.msk [vmem:[#allocation2 + $0xb0] sm:$0xff] %vm1553, %v1543
          %1577 = vst.msk [vmem:[#allocation2 + $0xb8] sm:$0xff] %vm1553, %v1544
          %1578 = vst.msk [vmem:[#allocation2 + $0xc0] sm:$0xff] %vm1553, %v1545
          %1579 = vst.msk [vmem:[#allocation2 + $0xc8] sm:$0xff] %vm1553, %v1546
          %1580 = vst.msk [vmem:[#allocation2 + $0xd0] sm:$0xff] %vm1553, %v1547
          %1581 = vst.msk [vmem:[#allocation2 + $0xd8] sm:$0xff] %vm1553, %v1548
          %1582 = vst.msk [vmem:[#allocation2 + $0xe0] sm:$0xff] %vm1553, %v1549
          %1583 = vst.msk [vmem:[#allocation2 + $0xe8] sm:$0xff] %vm1553, %v1550
          %1584 = vst.msk [vmem:[#allocation2 + $0xf0] sm:$0xff] %vm1553, %v1551
          %1585 = vst.msk [vmem:[#allocation2 + $0xf8] sm:$0xff] %vm1553, %v1552
        $region36: #{tpu_custom_call.1} parent=31 // pred_fallthru
          _
        %v1586 = vld [vmem:[#allocation2] sm:$0xff]
        %v1587 = vld [vmem:[#allocation2 + $0x8] sm:$0xff]
        %v1588 = vld [vmem:[#allocation2 + $0x10] sm:$0xff]
        %v1589 = vld [vmem:[#allocation2 + $0x18] sm:$0xff]
        %v1590 = vld [vmem:[#allocation2 + $0x20] sm:$0xff]
        %v1591 = vld [vmem:[#allocation2 + $0x28] sm:$0xff]
        %v1592 = vld [vmem:[#allocation2 + $0x30] sm:$0xff]
        %v1593 = vld [vmem:[#allocation2 + $0x38] sm:$0xff]
        %v1594 = vld [vmem:[#allocation2 + $0x40] sm:$0xff]
        %v1595 = vld [vmem:[#allocation2 + $0x48] sm:$0xff]
        %v1596 = vld [vmem:[#allocation2 + $0x50] sm:$0xff]
        %v1597 = vld [vmem:[#allocation2 + $0x58] sm:$0xff]
        %v1598 = vld [vmem:[#allocation2 + $0x60] sm:$0xff]
        %v1599 = vld [vmem:[#allocation2 + $0x68] sm:$0xff]
        %v1600 = vld [vmem:[#allocation2 + $0x70] sm:$0xff]
        %v1601 = vld [vmem:[#allocation2 + $0x78] sm:$0xff]
        %v1602 = vld [vmem:[#allocation2 + $0x80] sm:$0xff]
        %v1603 = vld [vmem:[#allocation2 + $0x88] sm:$0xff]
        %v1604 = vld [vmem:[#allocation2 + $0x90] sm:$0xff]
        %v1605 = vld [vmem:[#allocation2 + $0x98] sm:$0xff]
        %v1606 = vld [vmem:[#allocation2 + $0xa0] sm:$0xff]
        %v1607 = vld [vmem:[#allocation2 + $0xa8] sm:$0xff]
        %v1608 = vld [vmem:[#allocation2 + $0xb0] sm:$0xff]
        %v1609 = vld [vmem:[#allocation2 + $0xb8] sm:$0xff]
        %v1610 = vld [vmem:[#allocation2 + $0xc0] sm:$0xff]
        %v1611 = vld [vmem:[#allocation2 + $0xc8] sm:$0xff]
        %v1612 = vld [vmem:[#allocation2 + $0xd0] sm:$0xff]
        %v1613 = vld [vmem:[#allocation2 + $0xd8] sm:$0xff]
        %v1614 = vld [vmem:[#allocation2 + $0xe0] sm:$0xff]
        %v1615 = vld [vmem:[#allocation2 + $0xe8] sm:$0xff]
        %v1616 = vld [vmem:[#allocation2 + $0xf0] sm:$0xff]
        %v1617 = vld [vmem:[#allocation2 + $0xf8] sm:$0xff]
        %v1618 = vld [vmem:[%s219] sm:$0xff]
        %v1619 = vld [vmem:[%s219 + $0x8] sm:$0xff]
        %v1620 = vld [vmem:[%s219 + $0x10] sm:$0xff]
        %v1621 = vld [vmem:[%s219 + $0x18] sm:$0xff]
        %v1622 = vld [vmem:[%s219 + $0x20] sm:$0xf]
        %v1623 = vld [vmem:[%s222] sm:$0x1]
        %v1625 = vperm.slane %v1623, 0
        %vm1627 = vcmask 293888
        %v1629 = vsel %vm1627, %v1586, 0
        %v1632 = vsel %vm1627, %v1587, 0
        %v1635 = vsel %vm1627, %v1588, 0
        %v1638 = vsel %vm1627, %v1589, 0
        %v1641 = vsel %vm1627, %v1590, 0
        %v1644 = vsel %vm1627, %v1591, 0
        %v1647 = vsel %vm1627, %v1592, 0
        %v1650 = vsel %vm1627, %v1593, 0
        %v1653 = vsel %vm1627, %v1594, 0
        %v1656 = vsel %vm1627, %v1595, 0
        %v1659 = vsel %vm1627, %v1596, 0
        %v1662 = vsel %vm1627, %v1597, 0
        %v1665 = vsel %vm1627, %v1598, 0
        %v1668 = vsel %vm1627, %v1599, 0
        %v1671 = vsel %vm1627, %v1600, 0
        %v1674 = vsel %vm1627, %v1601, 0
        %v1677 = vsel %vm1627, %v1602, 0
        %v1680 = vsel %vm1627, %v1603, 0
        %v1683 = vsel %vm1627, %v1604, 0
        %v1686 = vsel %vm1627, %v1605, 0
        %v1689 = vsel %vm1627, %v1606, 0
        %v1692 = vsel %vm1627, %v1607, 0
        %v1695 = vsel %vm1627, %v1608, 0
        %v1698 = vsel %vm1627, %v1609, 0
        %v1701 = vsel %vm1627, %v1610, 0
        %v1704 = vsel %vm1627, %v1611, 0
        %v1707 = vsel %vm1627, %v1612, 0
        %v1710 = vsel %vm1627, %v1613, 0
        %v1713 = vsel %vm1627, %v1614, 0
        %v1716 = vsel %vm1627, %v1615, 0
        %v1719 = vsel %vm1627, %v1616, 0
        %v1722 = vsel %vm1627, %v1617, 0
        %vm1724 = vcmask 1043456
        %v1726 = vsel %vm1724, %v1622, 0
        %1728 = vmatpush.msra.mxu0 0.0
        %1729 = vmatpush.msra.mxu0 0.0
        %1730 = vmatpush.msra.mxu0 0.0
        %1731 = vmatpush.msra.mxu0 0.0
        %1732 = vmatpush.msra.mxu0 0.0
        %1733 = vmatpush.msra.mxu0 0.0
        %1734 = vmatpush.msra.mxu0 0.0
        %1735 = vmatpush.msra.mxu0 0.0
        %1736 = vmatpush.msra.mxu0 0.0
        %1737 = vmatpush.msra.mxu0 0.0
        %1738 = vmatpush.msra.mxu0 0.0
        %1739 = vmatpush.msra.mxu0 %v1726
        %1740 = vmatpush.msra.mxu0 %v1621
        %1741 = vmatpush.msra.mxu0 %v1620
        %1742 = vmatpush.msra.mxu0 %v1619
        %1743 = vmatpush.msra.mxu0 %v1618
        %1744 = vmatmul.f32.gmra.mxu0 %v1629
        %v1745 = vpop.f32.mrf.mxu0
        %v1746 = vadd.f32 %v1625, %v1745
        %1747 = vmatmul.f32.gmra.mxu0 %v1632
        %v1748 = vpop.f32.mrf.mxu0
        %v1749 = vadd.f32 %v1625, %v1748
        %1750 = vmatmul.f32.gmra.mxu0 %v1635
        %v1751 = vpop.f32.mrf.mxu0
        %v1752 = vadd.f32 %v1625, %v1751
        %1753 = vmatmul.f32.gmra.mxu0 %v1638
        %v1754 = vpop.f32.mrf.mxu0
        %v1755 = vadd.f32 %v1625, %v1754
        %1756 = vmatmul.f32.gmra.mxu0 %v1641
        %v1757 = vpop.f32.mrf.mxu0
        %v1758 = vadd.f32 %v1625, %v1757
        %1759 = vmatmul.f32.gmra.mxu0 %v1644
        %v1760 = vpop.f32.mrf.mxu0
        %v1761 = vadd.f32 %v1625, %v1760
        %1762 = vmatmul.f32.gmra.mxu0 %v1647
        %v1763 = vpop.f32.mrf.mxu0
        %v1764 = vadd.f32 %v1625, %v1763
        %1765 = vmatmul.f32.gmra.mxu0 %v1650
        %v1766 = vpop.f32.mrf.mxu0
        %v1767 = vadd.f32 %v1625, %v1766
        %1768 = vmatmul.f32.gmra.mxu0 %v1653
        %v1769 = vpop.f32.mrf.mxu0
        %v1770 = vadd.f32 %v1625, %v1769
        %1771 = vmatmul.f32.gmra.mxu0 %v1656
        %v1772 = vpop.f32.mrf.mxu0
        %v1773 = vadd.f32 %v1625, %v1772
        %1774 = vmatmul.f32.gmra.mxu0 %v1659
        %v1775 = vpop.f32.mrf.mxu0
        %v1776 = vadd.f32 %v1625, %v1775
        %1777 = vmatmul.f32.gmra.mxu0 %v1662
        %v1778 = vpop.f32.mrf.mxu0
        %v1779 = vadd.f32 %v1625, %v1778
        %1780 = vmatmul.f32.gmra.mxu0 %v1665
        %v1781 = vpop.f32.mrf.mxu0
        %v1782 = vadd.f32 %v1625, %v1781
        %1783 = vmatmul.f32.gmra.mxu0 %v1668
        %v1784 = vpop.f32.mrf.mxu0
        %v1785 = vadd.f32 %v1625, %v1784
        %1786 = vmatmul.f32.gmra.mxu0 %v1671
        %v1787 = vpop.f32.mrf.mxu0
        %v1788 = vadd.f32 %v1625, %v1787
        %1789 = vmatmul.f32.gmra.mxu0 %v1674
        %v1790 = vpop.f32.mrf.mxu0
        %v1791 = vadd.f32 %v1625, %v1790
        %1792 = vmatmul.f32.gmra.mxu0 %v1677
        %v1793 = vpop.f32.mrf.mxu0
        %v1794 = vadd.f32 %v1625, %v1793
        %1795 = vmatmul.f32.gmra.mxu0 %v1680
        %v1796 = vpop.f32.mrf.mxu0
        %v1797 = vadd.f32 %v1625, %v1796
        %1798 = vmatmul.f32.gmra.mxu0 %v1683
        %v1799 = vpop.f32.mrf.mxu0
        %v1800 = vadd.f32 %v1625, %v1799
        %1801 = vmatmul.f32.gmra.mxu0 %v1686
        %v1802 = vpop.f32.mrf.mxu0
        %v1803 = vadd.f32 %v1625, %v1802
        %1804 = vmatmul.f32.gmra.mxu0 %v1689
        %v1805 = vpop.f32.mrf.mxu0
        %v1806 = vadd.f32 %v1625, %v1805
        %1807 = vmatmul.f32.gmra.mxu0 %v1692
        %v1808 = vpop.f32.mrf.mxu0
        %v1809 = vadd.f32 %v1625, %v1808
        %1810 = vmatmul.f32.gmra.mxu0 %v1695
        %v1811 = vpop.f32.mrf.mxu0
        %v1812 = vadd.f32 %v1625, %v1811
        %1813 = vmatmul.f32.gmra.mxu0 %v1698
        %v1814 = vpop.f32.mrf.mxu0
        %v1815 = vadd.f32 %v1625, %v1814
        %1816 = vmatmul.f32.gmra.mxu0 %v1701
        %v1817 = vpop.f32.mrf.mxu0
        %v1818 = vadd.f32 %v1625, %v1817
        %1819 = vmatmul.f32.gmra.mxu0 %v1704
        %v1820 = vpop.f32.mrf.mxu0
        %v1821 = vadd.f32 %v1625, %v1820
        %1822 = vmatmul.f32.gmra.mxu0 %v1707
        %v1823 = vpop.f32.mrf.mxu0
        %v1824 = vadd.f32 %v1625, %v1823
        %1825 = vmatmul.f32.gmra.mxu0 %v1710
        %v1826 = vpop.f32.mrf.mxu0
        %v1827 = vadd.f32 %v1625, %v1826
        %1828 = vmatmul.f32.gmra.mxu0 %v1713
        %v1829 = vpop.f32.mrf.mxu0
        %v1830 = vadd.f32 %v1625, %v1829
        %1831 = vmatmul.f32.gmra.mxu0 %v1716
        %v1832 = vpop.f32.mrf.mxu0
        %v1833 = vadd.f32 %v1625, %v1832
        %1834 = vmatmul.f32.gmra.mxu0 %v1719
        %v1835 = vpop.f32.mrf.mxu0
        %v1836 = vadd.f32 %v1625, %v1835
        %1837 = vmatmul.f32.gmra.mxu0 %v1722
        %v1838 = vpop.f32.mrf.mxu0
        %v1839 = vadd.f32 %v1625, %v1838
        %1840 = vdwg.mxu0
        %v1841 = vxor.u32 %v1746, 2147483648
        %v1842 = vxor.u32 %v1749, 2147483648
        %v1843 = vxor.u32 %v1752, 2147483648
        %v1844 = vxor.u32 %v1755, 2147483648
        %v1845 = vxor.u32 %v1758, 2147483648
        %v1846 = vxor.u32 %v1761, 2147483648
        %v1847 = vxor.u32 %v1764, 2147483648
        %v1848 = vxor.u32 %v1767, 2147483648
        %v1849 = vxor.u32 %v1770, 2147483648
        %v1850 = vxor.u32 %v1773, 2147483648
        %v1851 = vxor.u32 %v1776, 2147483648
        %v1852 = vxor.u32 %v1779, 2147483648
        %v1853 = vxor.u32 %v1782, 2147483648
        %v1854 = vxor.u32 %v1785, 2147483648
        %v1855 = vxor.u32 %v1788, 2147483648
        %v1856 = vxor.u32 %v1791, 2147483648
        %v1857 = vxor.u32 %v1794, 2147483648
        %v1858 = vxor.u32 %v1797, 2147483648
        %v1859 = vxor.u32 %v1800, 2147483648
        %v1860 = vxor.u32 %v1803, 2147483648
        %v1861 = vxor.u32 %v1806, 2147483648
        %v1862 = vxor.u32 %v1809, 2147483648
        %v1863 = vxor.u32 %v1812, 2147483648
        %v1864 = vxor.u32 %v1815, 2147483648
        %v1865 = vxor.u32 %v1818, 2147483648
        %v1866 = vxor.u32 %v1821, 2147483648
        %v1867 = vxor.u32 %v1824, 2147483648
        %v1868 = vxor.u32 %v1827, 2147483648
        %v1869 = vxor.u32 %v1830, 2147483648
        %v1870 = vxor.u32 %v1833, 2147483648
        %v1871 = vxor.u32 %v1836, 2147483648
        %v1872 = vxor.u32 %v1839, 2147483648
        %v1873 = vmul.f32 %v1841, 1.442695
        %v1874 = vpow.pop %v1873
        %v1875 = vmul.f32 %v1842, 1.442695
        %v1876 = vpow.pop %v1875
        %v1877 = vmul.f32 %v1843, 1.442695
        %v1878 = vpow.pop %v1877
        %v1879 = vmul.f32 %v1844, 1.442695
        %v1880 = vpow.pop %v1879
        %v1881 = vmul.f32 %v1845, 1.442695
        %v1882 = vpow.pop %v1881
        %v1883 = vmul.f32 %v1846, 1.442695
        %v1884 = vpow.pop %v1883
        %v1885 = vmul.f32 %v1847, 1.442695
        %v1886 = vpow.pop %v1885
        %v1887 = vmul.f32 %v1848, 1.442695
        %v1888 = vpow.pop %v1887
        %v1889 = vmul.f32 %v1849, 1.442695
        %v1890 = vpow.pop %v1889
        %v1891 = vmul.f32 %v1850, 1.442695
        %v1892 = vpow.pop %v1891
        %v1893 = vmul.f32 %v1851, 1.442695
        %v1894 = vpow.pop %v1893
        %v1895 = vmul.f32 %v1852, 1.442695
        %v1896 = vpow.pop %v1895
        %v1897 = vmul.f32 %v1853, 1.442695
        %v1898 = vpow.pop %v1897
        %v1899 = vmul.f32 %v1854, 1.442695
        %v1900 = vpow.pop %v1899
        %v1901 = vmul.f32 %v1855, 1.442695
        %v1902 = vpow.pop %v1901
        %v1903 = vmul.f32 %v1856, 1.442695
        %v1904 = vpow.pop %v1903
        %v1905 = vmul.f32 %v1857, 1.442695
        %v1906 = vpow.pop %v1905
        %v1907 = vmul.f32 %v1858, 1.442695
        %v1908 = vpow.pop %v1907
        %v1909 = vmul.f32 %v1859, 1.442695
        %v1910 = vpow.pop %v1909
        %v1911 = vmul.f32 %v1860, 1.442695
        %v1912 = vpow.pop %v1911
        %v1913 = vmul.f32 %v1861, 1.442695
        %v1914 = vpow.pop %v1913
        %v1915 = vmul.f32 %v1862, 1.442695
        %v1916 = vpow.pop %v1915
        %v1917 = vmul.f32 %v1863, 1.442695
        %v1918 = vpow.pop %v1917
        %v1919 = vmul.f32 %v1864, 1.442695
        %v1920 = vpow.pop %v1919
        %v1921 = vmul.f32 %v1865, 1.442695
        %v1922 = vpow.pop %v1921
        %v1923 = vmul.f32 %v1866, 1.442695
        %v1924 = vpow.pop %v1923
        %v1925 = vmul.f32 %v1867, 1.442695
        %v1926 = vpow.pop %v1925
        %v1927 = vmul.f32 %v1868, 1.442695
        %v1928 = vpow.pop %v1927
        %v1929 = vmul.f32 %v1869, 1.442695
        %v1930 = vpow.pop %v1929
        %v1931 = vmul.f32 %v1870, 1.442695
        %v1932 = vpow.pop %v1931
        %v1933 = vmul.f32 %v1871, 1.442695
        %v1934 = vpow.pop %v1933
        %v1935 = vmul.f32 %v1872, 1.442695
        %v1936 = vpow.pop %v1935
        %v1937 = vadd.f32 %v1874, 1.0
        %v1938 = vadd.f32 %v1876, 1.0
        %v1939 = vadd.f32 %v1878, 1.0
        %v1940 = vadd.f32 %v1880, 1.0
        %v1941 = vadd.f32 %v1882, 1.0
        %v1942 = vadd.f32 %v1884, 1.0
        %v1943 = vadd.f32 %v1886, 1.0
        %v1944 = vadd.f32 %v1888, 1.0
        %v1945 = vadd.f32 %v1890, 1.0
        %v1946 = vadd.f32 %v1892, 1.0
        %v1947 = vadd.f32 %v1894, 1.0
        %v1948 = vadd.f32 %v1896, 1.0
        %v1949 = vadd.f32 %v1898, 1.0
        %v1950 = vadd.f32 %v1900, 1.0
        %v1951 = vadd.f32 %v1902, 1.0
        %v1952 = vadd.f32 %v1904, 1.0
        %v1953 = vadd.f32 %v1906, 1.0
        %v1954 = vadd.f32 %v1908, 1.0
        %v1955 = vadd.f32 %v1910, 1.0
        %v1956 = vadd.f32 %v1912, 1.0
        %v1957 = vadd.f32 %v1914, 1.0
        %v1958 = vadd.f32 %v1916, 1.0
        %v1959 = vadd.f32 %v1918, 1.0
        %v1960 = vadd.f32 %v1920, 1.0
        %v1961 = vadd.f32 %v1922, 1.0
        %v1962 = vadd.f32 %v1924, 1.0
        %v1963 = vadd.f32 %v1926, 1.0
        %v1964 = vadd.f32 %v1928, 1.0
        %v1965 = vadd.f32 %v1930, 1.0
        %v1966 = vadd.f32 %v1932, 1.0
        %v1967 = vadd.f32 %v1934, 1.0
        %v1968 = vadd.f32 %v1936, 1.0
        %v1969 = vrcp.pop %v1937
        %v1970 = vmul.f32 %v1937, %v1969
        %v1971 = vsub.f32 1.0, %v1970
        %v1972 = vmul.f32 %v1969, %v1971
        %v1973 = vadd.f32 %v1969, %v1972
        %vm1974 = vweird.f32 %v1937
        %vm1975 = vweird.f32 %v1969
        %vm1976 = vmor %vm1974, %vm1975
        %v1977 = vsel %vm1976, %v1969, %v1973
        %v1978 = vand.u32 2147483647, %v1937
        %vm1979 = vcmp.eq.f32.partialorder %v1978, 8.507059e+37
        %v1980 = vand.u32 %v1937, 2147483648
        %v1981 = vor.u32 1.1754944e-38, %v1980
        %v1982 = vsel %vm1979, %v1981, %v1977
        %v1983 = vmul.f32 1.0, %v1982
        %v1984 = vrcp.pop %v1938
        %v1985 = vmul.f32 %v1938, %v1984
        %v1986 = vsub.f32 1.0, %v1985
        %v1987 = vmul.f32 %v1984, %v1986
        %v1988 = vadd.f32 %v1984, %v1987
        %vm1989 = vweird.f32 %v1938
        %vm1990 = vweird.f32 %v1984
        %vm1991 = vmor %vm1989, %vm1990
        %v1992 = vsel %vm1991, %v1984, %v1988
        %v1993 = vand.u32 2147483647, %v1938
        %vm1994 = vcmp.eq.f32.partialorder %v1993, 8.507059e+37
        %v1995 = vand.u32 %v1938, 2147483648
        %v1996 = vor.u32 1.1754944e-38, %v1995
        %v1997 = vsel %vm1994, %v1996, %v1992
        %v1998 = vmul.f32 1.0, %v1997
        %v1999 = vrcp.pop %v1939
        %v2000 = vmul.f32 %v1939, %v1999
        %v2001 = vsub.f32 1.0, %v2000
        %v2002 = vmul.f32 %v1999, %v2001
        %v2003 = vadd.f32 %v1999, %v2002
        %vm2004 = vweird.f32 %v1939
        %vm2005 = vweird.f32 %v1999
        %vm2006 = vmor %vm2004, %vm2005
        %v2007 = vsel %vm2006, %v1999, %v2003
        %v2008 = vand.u32 2147483647, %v1939
        %vm2009 = vcmp.eq.f32.partialorder %v2008, 8.507059e+37
        %v2010 = vand.u32 %v1939, 2147483648
        %v2011 = vor.u32 1.1754944e-38, %v2010
        %v2012 = vsel %vm2009, %v2011, %v2007
        %v2013 = vmul.f32 1.0, %v2012
        %v2014 = vrcp.pop %v1940
        %v2015 = vmul.f32 %v1940, %v2014
        %v2016 = vsub.f32 1.0, %v2015
        %v2017 = vmul.f32 %v2014, %v2016
        %v2018 = vadd.f32 %v2014, %v2017
        %vm2019 = vweird.f32 %v1940
        %vm2020 = vweird.f32 %v2014
        %vm2021 = vmor %vm2019, %vm2020
        %v2022 = vsel %vm2021, %v2014, %v2018
        %v2023 = vand.u32 2147483647, %v1940
        %vm2024 = vcmp.eq.f32.partialorder %v2023, 8.507059e+37
        %v2025 = vand.u32 %v1940, 2147483648
        %v2026 = vor.u32 1.1754944e-38, %v2025
        %v2027 = vsel %vm2024, %v2026, %v2022
        %v2028 = vmul.f32 1.0, %v2027
        %v2029 = vrcp.pop %v1941
        %v2030 = vmul.f32 %v1941, %v2029
        %v2031 = vsub.f32 1.0, %v2030
        %v2032 = vmul.f32 %v2029, %v2031
        %v2033 = vadd.f32 %v2029, %v2032
        %vm2034 = vweird.f32 %v1941
        %vm2035 = vweird.f32 %v2029
        %vm2036 = vmor %vm2034, %vm2035
        %v2037 = vsel %vm2036, %v2029, %v2033
        %v2038 = vand.u32 2147483647, %v1941
        %vm2039 = vcmp.eq.f32.partialorder %v2038, 8.507059e+37
        %v2040 = vand.u32 %v1941, 2147483648
        %v2041 = vor.u32 1.1754944e-38, %v2040
        %v2042 = vsel %vm2039, %v2041, %v2037
        %v2043 = vmul.f32 1.0, %v2042
        %v2044 = vrcp.pop %v1942
        %v2045 = vmul.f32 %v1942, %v2044
        %v2046 = vsub.f32 1.0, %v2045
        %v2047 = vmul.f32 %v2044, %v2046
        %v2048 = vadd.f32 %v2044, %v2047
        %vm2049 = vweird.f32 %v1942
        %vm2050 = vweird.f32 %v2044
        %vm2051 = vmor %vm2049, %vm2050
        %v2052 = vsel %vm2051, %v2044, %v2048
        %v2053 = vand.u32 2147483647, %v1942
        %vm2054 = vcmp.eq.f32.partialorder %v2053, 8.507059e+37
        %v2055 = vand.u32 %v1942, 2147483648
        %v2056 = vor.u32 1.1754944e-38, %v2055
        %v2057 = vsel %vm2054, %v2056, %v2052
        %v2058 = vmul.f32 1.0, %v2057
        %v2059 = vrcp.pop %v1943
        %v2060 = vmul.f32 %v1943, %v2059
        %v2061 = vsub.f32 1.0, %v2060
        %v2062 = vmul.f32 %v2059, %v2061
        %v2063 = vadd.f32 %v2059, %v2062
        %vm2064 = vweird.f32 %v1943
        %vm2065 = vweird.f32 %v2059
        %vm2066 = vmor %vm2064, %vm2065
        %v2067 = vsel %vm2066, %v2059, %v2063
        %v2068 = vand.u32 2147483647, %v1943
        %vm2069 = vcmp.eq.f32.partialorder %v2068, 8.507059e+37
        %v2070 = vand.u32 %v1943, 2147483648
        %v2071 = vor.u32 1.1754944e-38, %v2070
        %v2072 = vsel %vm2069, %v2071, %v2067
        %v2073 = vmul.f32 1.0, %v2072
        %v2074 = vrcp.pop %v1944
        %v2075 = vmul.f32 %v1944, %v2074
        %v2076 = vsub.f32 1.0, %v2075
        %v2077 = vmul.f32 %v2074, %v2076
        %v2078 = vadd.f32 %v2074, %v2077
        %vm2079 = vweird.f32 %v1944
        %vm2080 = vweird.f32 %v2074
        %vm2081 = vmor %vm2079, %vm2080
        %v2082 = vsel %vm2081, %v2074, %v2078
        %v2083 = vand.u32 2147483647, %v1944
        %vm2084 = vcmp.eq.f32.partialorder %v2083, 8.507059e+37
        %v2085 = vand.u32 %v1944, 2147483648
        %v2086 = vor.u32 1.1754944e-38, %v2085
        %v2087 = vsel %vm2084, %v2086, %v2082
        %v2088 = vmul.f32 1.0, %v2087
        %v2089 = vrcp.pop %v1945
        %v2090 = vmul.f32 %v1945, %v2089
        %v2091 = vsub.f32 1.0, %v2090
        %v2092 = vmul.f32 %v2089, %v2091
        %v2093 = vadd.f32 %v2089, %v2092
        %vm2094 = vweird.f32 %v1945
        %vm2095 = vweird.f32 %v2089
        %vm2096 = vmor %vm2094, %vm2095
        %v2097 = vsel %vm2096, %v2089, %v2093
        %v2098 = vand.u32 2147483647, %v1945
        %vm2099 = vcmp.eq.f32.partialorder %v2098, 8.507059e+37
        %v2100 = vand.u32 %v1945, 2147483648
        %v2101 = vor.u32 1.1754944e-38, %v2100
        %v2102 = vsel %vm2099, %v2101, %v2097
        %v2103 = vmul.f32 1.0, %v2102
        %v2104 = vrcp.pop %v1946
        %v2105 = vmul.f32 %v1946, %v2104
        %v2106 = vsub.f32 1.0, %v2105
        %v2107 = vmul.f32 %v2104, %v2106
        %v2108 = vadd.f32 %v2104, %v2107
        %vm2109 = vweird.f32 %v1946
        %vm2110 = vweird.f32 %v2104
        %vm2111 = vmor %vm2109, %vm2110
        %v2112 = vsel %vm2111, %v2104, %v2108
        %v2113 = vand.u32 2147483647, %v1946
        %vm2114 = vcmp.eq.f32.partialorder %v2113, 8.507059e+37
        %v2115 = vand.u32 %v1946, 2147483648
        %v2116 = vor.u32 1.1754944e-38, %v2115
        %v2117 = vsel %vm2114, %v2116, %v2112
        %v2118 = vmul.f32 1.0, %v2117
        %v2119 = vrcp.pop %v1947
        %v2120 = vmul.f32 %v1947, %v2119
        %v2121 = vsub.f32 1.0, %v2120
        %v2122 = vmul.f32 %v2119, %v2121
        %v2123 = vadd.f32 %v2119, %v2122
        %vm2124 = vweird.f32 %v1947
        %vm2125 = vweird.f32 %v2119
        %vm2126 = vmor %vm2124, %vm2125
        %v2127 = vsel %vm2126, %v2119, %v2123
        %v2128 = vand.u32 2147483647, %v1947
        %vm2129 = vcmp.eq.f32.partialorder %v2128, 8.507059e+37
        %v2130 = vand.u32 %v1947, 2147483648
        %v2131 = vor.u32 1.1754944e-38, %v2130
        %v2132 = vsel %vm2129, %v2131, %v2127
        %v2133 = vmul.f32 1.0, %v2132
        %v2134 = vrcp.pop %v1948
        %v2135 = vmul.f32 %v1948, %v2134
        %v2136 = vsub.f32 1.0, %v2135
        %v2137 = vmul.f32 %v2134, %v2136
        %v2138 = vadd.f32 %v2134, %v2137
        %vm2139 = vweird.f32 %v1948
        %vm2140 = vweird.f32 %v2134
        %vm2141 = vmor %vm2139, %vm2140
        %v2142 = vsel %vm2141, %v2134, %v2138
        %v2143 = vand.u32 2147483647, %v1948
        %vm2144 = vcmp.eq.f32.partialorder %v2143, 8.507059e+37
        %v2145 = vand.u32 %v1948, 2147483648
        %v2146 = vor.u32 1.1754944e-38, %v2145
        %v2147 = vsel %vm2144, %v2146, %v2142
        %v2148 = vmul.f32 1.0, %v2147
        %v2149 = vrcp.pop %v1949
        %v2150 = vmul.f32 %v1949, %v2149
        %v2151 = vsub.f32 1.0, %v2150
        %v2152 = vmul.f32 %v2149, %v2151
        %v2153 = vadd.f32 %v2149, %v2152
        %vm2154 = vweird.f32 %v1949
        %vm2155 = vweird.f32 %v2149
        %vm2156 = vmor %vm2154, %vm2155
        %v2157 = vsel %vm2156, %v2149, %v2153
        %v2158 = vand.u32 2147483647, %v1949
        %vm2159 = vcmp.eq.f32.partialorder %v2158, 8.507059e+37
        %v2160 = vand.u32 %v1949, 2147483648
        %v2161 = vor.u32 1.1754944e-38, %v2160
        %v2162 = vsel %vm2159, %v2161, %v2157
        %v2163 = vmul.f32 1.0, %v2162
        %v2164 = vrcp.pop %v1950
        %v2165 = vmul.f32 %v1950, %v2164
        %v2166 = vsub.f32 1.0, %v2165
        %v2167 = vmul.f32 %v2164, %v2166
        %v2168 = vadd.f32 %v2164, %v2167
        %vm2169 = vweird.f32 %v1950
        %vm2170 = vweird.f32 %v2164
        %vm2171 = vmor %vm2169, %vm2170
        %v2172 = vsel %vm2171, %v2164, %v2168
        %v2173 = vand.u32 2147483647, %v1950
        %vm2174 = vcmp.eq.f32.partialorder %v2173, 8.507059e+37
        %v2175 = vand.u32 %v1950, 2147483648
        %v2176 = vor.u32 1.1754944e-38, %v2175
        %v2177 = vsel %vm2174, %v2176, %v2172
        %v2178 = vmul.f32 1.0, %v2177
        %v2179 = vrcp.pop %v1951
        %v2180 = vmul.f32 %v1951, %v2179
        %v2181 = vsub.f32 1.0, %v2180
        %v2182 = vmul.f32 %v2179, %v2181
        %v2183 = vadd.f32 %v2179, %v2182
        %vm2184 = vweird.f32 %v1951
        %vm2185 = vweird.f32 %v2179
        %vm2186 = vmor %vm2184, %vm2185
        %v2187 = vsel %vm2186, %v2179, %v2183
        %v2188 = vand.u32 2147483647, %v1951
        %vm2189 = vcmp.eq.f32.partialorder %v2188, 8.507059e+37
        %v2190 = vand.u32 %v1951, 2147483648
        %v2191 = vor.u32 1.1754944e-38, %v2190
        %v2192 = vsel %vm2189, %v2191, %v2187
        %v2193 = vmul.f32 1.0, %v2192
        %v2194 = vrcp.pop %v1952
        %v2195 = vmul.f32 %v1952, %v2194
        %v2196 = vsub.f32 1.0, %v2195
        %v2197 = vmul.f32 %v2194, %v2196
        %v2198 = vadd.f32 %v2194, %v2197
        %vm2199 = vweird.f32 %v1952
        %vm2200 = vweird.f32 %v2194
        %vm2201 = vmor %vm2199, %vm2200
        %v2202 = vsel %vm2201, %v2194, %v2198
        %v2203 = vand.u32 2147483647, %v1952
        %vm2204 = vcmp.eq.f32.partialorder %v2203, 8.507059e+37
        %v2205 = vand.u32 %v1952, 2147483648
        %v2206 = vor.u32 1.1754944e-38, %v2205
        %v2207 = vsel %vm2204, %v2206, %v2202
        %v2208 = vmul.f32 1.0, %v2207
        %v2209 = vrcp.pop %v1953
        %v2210 = vmul.f32 %v1953, %v2209
        %v2211 = vsub.f32 1.0, %v2210
        %v2212 = vmul.f32 %v2209, %v2211
        %v2213 = vadd.f32 %v2209, %v2212
        %vm2214 = vweird.f32 %v1953
        %vm2215 = vweird.f32 %v2209
        %vm2216 = vmor %vm2214, %vm2215
        %v2217 = vsel %vm2216, %v2209, %v2213
        %v2218 = vand.u32 2147483647, %v1953
        %vm2219 = vcmp.eq.f32.partialorder %v2218, 8.507059e+37
        %v2220 = vand.u32 %v1953, 2147483648
        %v2221 = vor.u32 1.1754944e-38, %v2220
        %v2222 = vsel %vm2219, %v2221, %v2217
        %v2223 = vmul.f32 1.0, %v2222
        %v2224 = vrcp.pop %v1954
        %v2225 = vmul.f32 %v1954, %v2224
        %v2226 = vsub.f32 1.0, %v2225
        %v2227 = vmul.f32 %v2224, %v2226
        %v2228 = vadd.f32 %v2224, %v2227
        %vm2229 = vweird.f32 %v1954
        %vm2230 = vweird.f32 %v2224
        %vm2231 = vmor %vm2229, %vm2230
        %v2232 = vsel %vm2231, %v2224, %v2228
        %v2233 = vand.u32 2147483647, %v1954
        %vm2234 = vcmp.eq.f32.partialorder %v2233, 8.507059e+37
        %v2235 = vand.u32 %v1954, 2147483648
        %v2236 = vor.u32 1.1754944e-38, %v2235
        %v2237 = vsel %vm2234, %v2236, %v2232
        %v2238 = vmul.f32 1.0, %v2237
        %v2239 = vrcp.pop %v1955
        %v2240 = vmul.f32 %v1955, %v2239
        %v2241 = vsub.f32 1.0, %v2240
        %v2242 = vmul.f32 %v2239, %v2241
        %v2243 = vadd.f32 %v2239, %v2242
        %vm2244 = vweird.f32 %v1955
        %vm2245 = vweird.f32 %v2239
        %vm2246 = vmor %vm2244, %vm2245
        %v2247 = vsel %vm2246, %v2239, %v2243
        %v2248 = vand.u32 2147483647, %v1955
        %vm2249 = vcmp.eq.f32.partialorder %v2248, 8.507059e+37
        %v2250 = vand.u32 %v1955, 2147483648
        %v2251 = vor.u32 1.1754944e-38, %v2250
        %v2252 = vsel %vm2249, %v2251, %v2247
        %v2253 = vmul.f32 1.0, %v2252
        %v2254 = vrcp.pop %v1956
        %v2255 = vmul.f32 %v1956, %v2254
        %v2256 = vsub.f32 1.0, %v2255
        %v2257 = vmul.f32 %v2254, %v2256
        %v2258 = vadd.f32 %v2254, %v2257
        %vm2259 = vweird.f32 %v1956
        %vm2260 = vweird.f32 %v2254
        %vm2261 = vmor %vm2259, %vm2260
        %v2262 = vsel %vm2261, %v2254, %v2258
        %v2263 = vand.u32 2147483647, %v1956
        %vm2264 = vcmp.eq.f32.partialorder %v2263, 8.507059e+37
        %v2265 = vand.u32 %v1956, 2147483648
        %v2266 = vor.u32 1.1754944e-38, %v2265
        %v2267 = vsel %vm2264, %v2266, %v2262
        %v2268 = vmul.f32 1.0, %v2267
        %v2269 = vrcp.pop %v1957
        %v2270 = vmul.f32 %v1957, %v2269
        %v2271 = vsub.f32 1.0, %v2270
        %v2272 = vmul.f32 %v2269, %v2271
        %v2273 = vadd.f32 %v2269, %v2272
        %vm2274 = vweird.f32 %v1957
        %vm2275 = vweird.f32 %v2269
        %vm2276 = vmor %vm2274, %vm2275
        %v2277 = vsel %vm2276, %v2269, %v2273
        %v2278 = vand.u32 2147483647, %v1957
        %vm2279 = vcmp.eq.f32.partialorder %v2278, 8.507059e+37
        %v2280 = vand.u32 %v1957, 2147483648
        %v2281 = vor.u32 1.1754944e-38, %v2280
        %v2282 = vsel %vm2279, %v2281, %v2277
        %v2283 = vmul.f32 1.0, %v2282
        %v2284 = vrcp.pop %v1958
        %v2285 = vmul.f32 %v1958, %v2284
        %v2286 = vsub.f32 1.0, %v2285
        %v2287 = vmul.f32 %v2284, %v2286
        %v2288 = vadd.f32 %v2284, %v2287
        %vm2289 = vweird.f32 %v1958
        %vm2290 = vweird.f32 %v2284
        %vm2291 = vmor %vm2289, %vm2290
        %v2292 = vsel %vm2291, %v2284, %v2288
        %v2293 = vand.u32 2147483647, %v1958
        %vm2294 = vcmp.eq.f32.partialorder %v2293, 8.507059e+37
        %v2295 = vand.u32 %v1958, 2147483648
        %v2296 = vor.u32 1.1754944e-38, %v2295
        %v2297 = vsel %vm2294, %v2296, %v2292
        %v2298 = vmul.f32 1.0, %v2297
        %v2299 = vrcp.pop %v1959
        %v2300 = vmul.f32 %v1959, %v2299
        %v2301 = vsub.f32 1.0, %v2300
        %v2302 = vmul.f32 %v2299, %v2301
        %v2303 = vadd.f32 %v2299, %v2302
        %vm2304 = vweird.f32 %v1959
        %vm2305 = vweird.f32 %v2299
        %vm2306 = vmor %vm2304, %vm2305
        %v2307 = vsel %vm2306, %v2299, %v2303
        %v2308 = vand.u32 2147483647, %v1959
        %vm2309 = vcmp.eq.f32.partialorder %v2308, 8.507059e+37
        %v2310 = vand.u32 %v1959, 2147483648
        %v2311 = vor.u32 1.1754944e-38, %v2310
        %v2312 = vsel %vm2309, %v2311, %v2307
        %v2313 = vmul.f32 1.0, %v2312
        %v2314 = vrcp.pop %v1960
        %v2315 = vmul.f32 %v1960, %v2314
        %v2316 = vsub.f32 1.0, %v2315
        %v2317 = vmul.f32 %v2314, %v2316
        %v2318 = vadd.f32 %v2314, %v2317
        %vm2319 = vweird.f32 %v1960
        %vm2320 = vweird.f32 %v2314
        %vm2321 = vmor %vm2319, %vm2320
        %v2322 = vsel %vm2321, %v2314, %v2318
        %v2323 = vand.u32 2147483647, %v1960
        %vm2324 = vcmp.eq.f32.partialorder %v2323, 8.507059e+37
        %v2325 = vand.u32 %v1960, 2147483648
        %v2326 = vor.u32 1.1754944e-38, %v2325
        %v2327 = vsel %vm2324, %v2326, %v2322
        %v2328 = vmul.f32 1.0, %v2327
        %v2329 = vrcp.pop %v1961
        %v2330 = vmul.f32 %v1961, %v2329
        %v2331 = vsub.f32 1.0, %v2330
        %v2332 = vmul.f32 %v2329, %v2331
        %v2333 = vadd.f32 %v2329, %v2332
        %vm2334 = vweird.f32 %v1961
        %vm2335 = vweird.f32 %v2329
        %vm2336 = vmor %vm2334, %vm2335
        %v2337 = vsel %vm2336, %v2329, %v2333
        %v2338 = vand.u32 2147483647, %v1961
        %vm2339 = vcmp.eq.f32.partialorder %v2338, 8.507059e+37
        %v2340 = vand.u32 %v1961, 2147483648
        %v2341 = vor.u32 1.1754944e-38, %v2340
        %v2342 = vsel %vm2339, %v2341, %v2337
        %v2343 = vmul.f32 1.0, %v2342
        %v2344 = vrcp.pop %v1962
        %v2345 = vmul.f32 %v1962, %v2344
        %v2346 = vsub.f32 1.0, %v2345
        %v2347 = vmul.f32 %v2344, %v2346
        %v2348 = vadd.f32 %v2344, %v2347
        %vm2349 = vweird.f32 %v1962
        %vm2350 = vweird.f32 %v2344
        %vm2351 = vmor %vm2349, %vm2350
        %v2352 = vsel %vm2351, %v2344, %v2348
        %v2353 = vand.u32 2147483647, %v1962
        %vm2354 = vcmp.eq.f32.partialorder %v2353, 8.507059e+37
        %v2355 = vand.u32 %v1962, 2147483648
        %v2356 = vor.u32 1.1754944e-38, %v2355
        %v2357 = vsel %vm2354, %v2356, %v2352
        %v2358 = vmul.f32 1.0, %v2357
        %v2359 = vrcp.pop %v1963
        %v2360 = vmul.f32 %v1963, %v2359
        %v2361 = vsub.f32 1.0, %v2360
        %v2362 = vmul.f32 %v2359, %v2361
        %v2363 = vadd.f32 %v2359, %v2362
        %vm2364 = vweird.f32 %v1963
        %vm2365 = vweird.f32 %v2359
        %vm2366 = vmor %vm2364, %vm2365
        %v2367 = vsel %vm2366, %v2359, %v2363
        %v2368 = vand.u32 2147483647, %v1963
        %vm2369 = vcmp.eq.f32.partialorder %v2368, 8.507059e+37
        %v2370 = vand.u32 %v1963, 2147483648
        %v2371 = vor.u32 1.1754944e-38, %v2370
        %v2372 = vsel %vm2369, %v2371, %v2367
        %v2373 = vmul.f32 1.0, %v2372
        %v2374 = vrcp.pop %v1964
        %v2375 = vmul.f32 %v1964, %v2374
        %v2376 = vsub.f32 1.0, %v2375
        %v2377 = vmul.f32 %v2374, %v2376
        %v2378 = vadd.f32 %v2374, %v2377
        %vm2379 = vweird.f32 %v1964
        %vm2380 = vweird.f32 %v2374
        %vm2381 = vmor %vm2379, %vm2380
        %v2382 = vsel %vm2381, %v2374, %v2378
        %v2383 = vand.u32 2147483647, %v1964
        %vm2384 = vcmp.eq.f32.partialorder %v2383, 8.507059e+37
        %v2385 = vand.u32 %v1964, 2147483648
        %v2386 = vor.u32 1.1754944e-38, %v2385
        %v2387 = vsel %vm2384, %v2386, %v2382
        %v2388 = vmul.f32 1.0, %v2387
        %v2389 = vrcp.pop %v1965
        %v2390 = vmul.f32 %v1965, %v2389
        %v2391 = vsub.f32 1.0, %v2390
        %v2392 = vmul.f32 %v2389, %v2391
        %v2393 = vadd.f32 %v2389, %v2392
        %vm2394 = vweird.f32 %v1965
        %vm2395 = vweird.f32 %v2389
        %vm2396 = vmor %vm2394, %vm2395
        %v2397 = vsel %vm2396, %v2389, %v2393
        %v2398 = vand.u32 2147483647, %v1965
        %vm2399 = vcmp.eq.f32.partialorder %v2398, 8.507059e+37
        %v2400 = vand.u32 %v1965, 2147483648
        %v2401 = vor.u32 1.1754944e-38, %v2400
        %v2402 = vsel %vm2399, %v2401, %v2397
        %v2403 = vmul.f32 1.0, %v2402
        %v2404 = vrcp.pop %v1966
        %v2405 = vmul.f32 %v1966, %v2404
        %v2406 = vsub.f32 1.0, %v2405
        %v2407 = vmul.f32 %v2404, %v2406
        %v2408 = vadd.f32 %v2404, %v2407
        %vm2409 = vweird.f32 %v1966
        %vm2410 = vweird.f32 %v2404
        %vm2411 = vmor %vm2409, %vm2410
        %v2412 = vsel %vm2411, %v2404, %v2408
        %v2413 = vand.u32 2147483647, %v1966
        %vm2414 = vcmp.eq.f32.partialorder %v2413, 8.507059e+37
        %v2415 = vand.u32 %v1966, 2147483648
        %v2416 = vor.u32 1.1754944e-38, %v2415
        %v2417 = vsel %vm2414, %v2416, %v2412
        %v2418 = vmul.f32 1.0, %v2417
        %v2419 = vrcp.pop %v1967
        %v2420 = vmul.f32 %v1967, %v2419
        %v2421 = vsub.f32 1.0, %v2420
        %v2422 = vmul.f32 %v2419, %v2421
        %v2423 = vadd.f32 %v2419, %v2422
        %vm2424 = vweird.f32 %v1967
        %vm2425 = vweird.f32 %v2419
        %vm2426 = vmor %vm2424, %vm2425
        %v2427 = vsel %vm2426, %v2419, %v2423
        %v2428 = vand.u32 2147483647, %v1967
        %vm2429 = vcmp.eq.f32.partialorder %v2428, 8.507059e+37
        %v2430 = vand.u32 %v1967, 2147483648
        %v2431 = vor.u32 1.1754944e-38, %v2430
        %v2432 = vsel %vm2429, %v2431, %v2427
        %v2433 = vmul.f32 1.0, %v2432
        %v2434 = vrcp.pop %v1968
        %v2435 = vmul.f32 %v1968, %v2434
        %v2436 = vsub.f32 1.0, %v2435
        %v2437 = vmul.f32 %v2434, %v2436
        %v2438 = vadd.f32 %v2434, %v2437
        %vm2439 = vweird.f32 %v1968
        %vm2440 = vweird.f32 %v2434
        %vm2441 = vmor %vm2439, %vm2440
        %v2442 = vsel %vm2441, %v2434, %v2438
        %v2443 = vand.u32 2147483647, %v1968
        %vm2444 = vcmp.eq.f32.partialorder %v2443, 8.507059e+37
        %v2445 = vand.u32 %v1968, 2147483648
        %v2446 = vor.u32 1.1754944e-38, %v2445
        %v2447 = vsel %vm2444, %v2446, %v2442
        %v2448 = vmul.f32 1.0, %v2447
        %v2449 = vmul.f32 %v1746, %v1983
        %v2450 = vmul.f32 %v1749, %v1998
        %v2451 = vmul.f32 %v1752, %v2013
        %v2452 = vmul.f32 %v1755, %v2028
        %v2453 = vmul.f32 %v1758, %v2043
        %v2454 = vmul.f32 %v1761, %v2058
        %v2455 = vmul.f32 %v1764, %v2073
        %v2456 = vmul.f32 %v1767, %v2088
        %v2457 = vmul.f32 %v1770, %v2103
        %v2458 = vmul.f32 %v1773, %v2118
        %v2459 = vmul.f32 %v1776, %v2133
        %v2460 = vmul.f32 %v1779, %v2148
        %v2461 = vmul.f32 %v1782, %v2163
        %v2462 = vmul.f32 %v1785, %v2178
        %v2463 = vmul.f32 %v1788, %v2193
        %v2464 = vmul.f32 %v1791, %v2208
        %v2465 = vmul.f32 %v1794, %v2223
        %v2466 = vmul.f32 %v1797, %v2238
        %v2467 = vmul.f32 %v1800, %v2253
        %v2468 = vmul.f32 %v1803, %v2268
        %v2469 = vmul.f32 %v1806, %v2283
        %v2470 = vmul.f32 %v1809, %v2298
        %v2471 = vmul.f32 %v1812, %v2313
        %v2472 = vmul.f32 %v1815, %v2328
        %v2473 = vmul.f32 %v1818, %v2343
        %v2474 = vmul.f32 %v1821, %v2358
        %v2475 = vmul.f32 %v1824, %v2373
        %v2476 = vmul.f32 %v1827, %v2388
        %v2477 = vmul.f32 %v1830, %v2403
        %v2478 = vmul.f32 %v1833, %v2418
        %v2479 = vmul.f32 %v1836, %v2433
        %v2480 = vmul.f32 %v1839, %v2448
        %2481 = vst [vmem:[%s210] sm:$0xff] %v2449
        %2482 = vst [vmem:[%s210 + $0x8] sm:$0xff] %v2450
        %2483 = vst [vmem:[%s210 + $0x10] sm:$0xff] %v2451
        %2484 = vst [vmem:[%s210 + $0x18] sm:$0xff] %v2452
        %2485 = vst [vmem:[%s210 + $0x20] sm:$0xff] %v2453
        %2486 = vst [vmem:[%s210 + $0x28] sm:$0xff] %v2454
        %2487 = vst [vmem:[%s210 + $0x30] sm:$0xff] %v2455
        %2488 = vst [vmem:[%s210 + $0x38] sm:$0xff] %v2456
        %2489 = vst [vmem:[%s210 + $0x40] sm:$0xff] %v2457
        %2490 = vst [vmem:[%s210 + $0x48] sm:$0xff] %v2458
        %2491 = vst [vmem:[%s210 + $0x50] sm:$0xff] %v2459
        %2492 = vst [vmem:[%s210 + $0x58] sm:$0xff] %v2460
        %2493 = vst [vmem:[%s210 + $0x60] sm:$0xff] %v2461
        %2494 = vst [vmem:[%s210 + $0x68] sm:$0xff] %v2462
        %2495 = vst [vmem:[%s210 + $0x70] sm:$0xff] %v2463
        %2496 = vst [vmem:[%s210 + $0x78] sm:$0xff] %v2464
        %2497 = vst [vmem:[%s210 + $0x80] sm:$0xff] %v2465
        %2498 = vst [vmem:[%s210 + $0x88] sm:$0xff] %v2466
        %2499 = vst [vmem:[%s210 + $0x90] sm:$0xff] %v2467
        %2500 = vst [vmem:[%s210 + $0x98] sm:$0xff] %v2468
        %2501 = vst [vmem:[%s210 + $0xa0] sm:$0xff] %v2469
        %2502 = vst [vmem:[%s210 + $0xa8] sm:$0xff] %v2470
        %2503 = vst [vmem:[%s210 + $0xb0] sm:$0xff] %v2471
        %2504 = vst [vmem:[%s210 + $0xb8] sm:$0xff] %v2472
        %2505 = vst [vmem:[%s210 + $0xc0] sm:$0xff] %v2473
        %2506 = vst [vmem:[%s210 + $0xc8] sm:$0xff] %v2474
        %2507 = vst [vmem:[%s210 + $0xd0] sm:$0xff] %v2475
        %2508 = vst [vmem:[%s210 + $0xd8] sm:$0xff] %v2476
        %2509 = vst [vmem:[%s210 + $0xe0] sm:$0xff] %v2477
        %2510 = vst [vmem:[%s210 + $0xe8] sm:$0xff] %v2478
        %2511 = vst [vmem:[%s210 + $0xf0] sm:$0xff] %v2479
        %2512 = vst [vmem:[%s210 + $0xf8] sm:$0xff] %v2480
        %s2513 = sand.u32 %s126, 1
        %s2514 = scalar_lea.sflag [#allocation4], %s2513
        %s2515 = sand.u32 %s126, 1
        %s2516 = smul.addr %s2515, 256
        %s2517 = scalar_lea.vmem [#allocation3], %s2516
        // Predicated region
        $region37: #{tpu_custom_call.1} parent=31 // pred_check
          %p2518 = pneg %p136
        $region38: #{tpu_custom_call.1} parent=31 // pred_check_branch
          %2520 = sbr.rel (%p2518) target = $region40
        $region39: #{tpu_custom_call.1} parent=31 // pred_region
          %s2521 = smul.u32 32, %s23
          %2523 = vsyncadd %s2514, 0
          %s2524 = sadd.s32 %s24, %s2521
          %s2525 = smul.addr %s22, 32
          %s2526 = sadd.s32 %s2524, %s2525
          %s2527 = smul.addr %s2526, 8
          %s2528 = scalar_lea.hbm %s3, %s2527
          %s2529 = sshll.u32 %s2517, 4
          %s2530 = int_to_ptr.vmem [resolvable:$true] %s2529
          %s2531 = sshll.u32 %s2528, 4
          %s2532 = int_to_ptr.hbm [resolvable:$true] %s2531
          %2537 = dma.vmem_to_hbm [thread:$0]  %s2530, 4096, %s2532, %s2514, 128, 128, 8
        $region40: #{tpu_custom_call.1} parent=31 // pred_fallthru
          _
      $region32: #{tpu_custom_call.1} parent=5 // pred_fallthru
        _
      %p2538 = scmp.le.s32.totalorder 2, %s12
      // Predicated region
      $region41: #{tpu_custom_call.1} parent=5 // pred_check
        %p2539 = pneg %p2538
      $region42: #{tpu_custom_call.1} parent=5 // pred_check_branch
        %2541 = sbr.rel (%p2539) target = $region44
      $region43: #{tpu_custom_call.1} parent=5 // pred_region
        %s2542 = ssub.s32 %s12, 2
        // Predicated region
        $region45: #{tpu_custom_call.1} parent=43 // pred_check
          %p2543 = pneg %p142
        $region46: #{tpu_custom_call.1} parent=43 // pred_check_branch
          %2545 = sbr.rel (%p2543) target = $region48
        $region47: #{tpu_custom_call.1} parent=43 // pred_region
          %s2546 = sand.u32 %s127, 1
          %s2547 = scalar_lea.sflag [#allocation4], %s2546
          %s2548 = sand.u32 %s127, 1
          %s2549 = smul.addr %s2548, 256
          %s2550 = scalar_lea.vmem [#allocation3], %s2549
          %2552 = dma.done %s2547, 4096
        $region48: #{tpu_custom_call.1} parent=43 // pred_fallthru
          _
      $region44: #{tpu_custom_call.1} parent=5 // pred_fallthru
        _
    $region6: #{tpu_custom_call.1} parent=1 // loop_footer
      %s16 = sadd.s32 1, %s12
    $region7: #{tpu_custom_call.1} parent=1 // loop_footer_branch
      %11 = sbr.rel target = $region3
    $region8: #{tpu_custom_call.1} parent=1 // loop_exit
      _
    %2553 = vsyncpa [#allocation4], 1
    %s2554 = scalar_lea.sflag [#allocation4], 1
    %2555 = vsyncpa %s2554, 1

// kernel: tpu_custom_call.1
$region0: #{tpu_custom_call.1}
  #allocation0 [shape = 'u32[]', space=smem, size = 0x4, offset = 0x4, fixed_abs, tag = 'smem constant byte address 0x4 - core index']
  #allocation1 [shape = 'u32[72,128]{1,0:T(1,128)}', space=vmem, size = 0x9000, scoped, tag = 'internal scratch']
  #allocation2 [shape = 'f32[256,36]{1,0:T(8,128)}', space=vmem, size = 0x20000, scoped, tag = 'scratch operand']
  %s0 = inlined_call_operand.vmem [shape: f32[2,18,18,4], index: 0, kind: input, shape index: {}]
  %s1 = inlined_call_operand.vmem [shape: f32[36,128], index: 1, kind: input, shape index: {}]
  %s2 = inlined_call_operand.vmem [shape: f32[1,128], index: 2, kind: input, shape index: {}]
  %s3 = inlined_call_operand.hbm [shape: f32[2,256,128], index: 3, kind: output, shape index: {}]
  %s4 = sld [smem:[#allocation0]]
  $region49: #{tpu_custom_call.1} parent=0
    _
  %s6 = ssub.s32 1, %s4
  %s7 = scalar_select 0, %s6, %s4
  $region1: #{tpu_custom_call.1} parent=0
    #allocation3 [shape = 'u8[262144]{0}', space=vmem, size = 0x40000, scoped, tag = 'output window, operand 0']
    #allocation4 [shape = 's32[2]{0}', space=sflag, size = 0x8, scoped, tag = 'scoped memory for tpu_custom_call.1']
    %8 = vsyncpa [#allocation4], 0
    %s9 = scalar_lea.sflag [#allocation4], 1
    %10 = vsyncpa %s9, 0
    loop: start=0, step=1, limit=4
    $region2: #{tpu_custom_call.1} parent=1 // loop_pre_header
      _
    $region3: #{tpu_custom_call.1} parent=1 // loop_header
      %s12 = sphi 0, %s16
      %p13 = scmp.ge.s32.totalorder %s12, 4
      %s19 = sphi 0, %s38
      %s20 = sphi 0, %s34
      %s21 = sphi 0, %s30
      %s22 = sphi 0, %s19
      %s23 = sphi 0, %s20
      %s24 = sphi 0, %s21
      %s25 = sphi 0, %s22
      %s26 = sphi 0, %s23
      %s27 = sphi 0, %s24
      %s41 = sphi 0, %s43
      %s44 = sphi 0, %s41
      %s45 = sphi 0, %s44
      %s61 = sphi 0, %s45
      %s67 = sphi 0, %s69
      %s70 = sphi 0, %s67
      %s71 = sphi 0, %s70
      %s87 = sphi 0, %s71
      %s93 = sphi 0, %s95
      %s96 = sphi 0, %s93
      %s97 = sphi 0, %s96
      %s113 = sphi 0, %s97
      %s123 = sphi 0, %s125
      %s126 = sphi 0, %s123
      %s127 = sphi 0, %s126
      %s143 = sphi 0, %s127
    $region4: #{tpu_custom_call.1} parent=1 // loop_header_branch
      %15 = sbr.rel (%p13) target = $region8
    $region5: #{tpu_custom_call.1} parent=1 // loop_body
      %s17 = ssub.s32 %s12, 1
      %s18 = ssub.s32 %s12, 2
      %s28 = sadd.s32 1, %s21
      %p29 = scmp.ge.s32.totalorder %s28, 1
      %s30 = scalar_select %p29, 0, %s28
      %s31 = sadd.s32 1, %s20
      %s32 = scalar_select %p29, %s31, %s20
      %p33 = scmp.ge.s32.totalorder %s32, 1
      %s34 = scalar_select %p33, 0, %s32
      %s35 = sadd.s32 1, %s19
      %s36 = scalar_select %p33, %s35, %s19
      %p37 = scmp.ge.s32.totalorder %s36, 2
      %s38 = scalar_select %p37, 0, %s36
      %s39 = ssub.s32 %s19, %s38
      %p40 = scmp.eq.s32.totalorder %s39, 0
      %s42 = sadd.s32 %s41, 1
      %s43 = scalar_select %p40, %s41, %s42
      %p46 = pneg %p40
      %p47 = scmp.eq.s32.totalorder %s12, 1
      %p48 = por %p46, %p47
      %p49 = scmp.ne.s32.totalorder %s41, %s44
      %p50 = scmp.eq.s32.totalorder %s12, 0
      %p51 = por %p49, %p50
      %p52 = scmp.ne.s32.totalorder %s41, %s44
      %p53 = scmp.eq.s32.totalorder %s17, 1
      %p54 = por %p52, %p53
      %p55 = scmp.ne.s32.totalorder %s44, %s45
      %p56 = scmp.eq.s32.totalorder %s17, 0
      %p57 = por %p55, %p56
      %p58 = scmp.ne.s32.totalorder %s44, %s45
      %p59 = scmp.eq.s32.totalorder %s18, 1
      %p60 = por %p58, %p59
      %p62 = scmp.ne.s32.totalorder %s45, %s61
      %p63 = scmp.eq.s32.totalorder %s18, 0
      %p64 = por %p62, %p63
      %s65 = ssub.s32 %s21, %s30
      %p66 = scmp.eq.s32.totalorder %s65, 0
      %s68 = sadd.s32 %s67, 1
      %s69 = scalar_select %p66, %s67, %s68
      %p72 = pneg %p66
      %p73 = scmp.eq.s32.totalorder %s12, 1
      %p74 = por %p72, %p73
      %p75 = scmp.ne.s32.totalorder %s67, %s70
      %p76 = scmp.eq.s32.totalorder %s12, 0
      %p77 = por %p75, %p76
      %p78 = scmp.ne.s32.totalorder %s67, %s70
      %p79 = scmp.eq.s32.totalorder %s17, 1
      %p80 = por %p78, %p79
      %p81 = scmp.ne.s32.totalorder %s70, %s71
      %p82 = scmp.eq.s32.totalorder %s17, 0
      %p83 = por %p81, %p82
      %p84 = scmp.ne.s32.totalorder %s70, %s71
      %p85 = scmp.eq.s32.totalorder %s18, 1
      %p86 = por %p84, %p85
      %p88 = scmp.ne.s32.totalorder %s71, %s87
      %p89 = scmp.eq.s32.totalorder %s18, 0
      %p90 = por %p88, %p89
      %s91 = ssub.s32 %s21, %s30
      %p92 = scmp.eq.s32.totalorder %s91, 0
      %s94 = sadd.s32 %s93, 1
      %s95 = scalar_select %p92, %s93, %s94
      %p98 = pneg %p92
      %p99 = scmp.eq.s32.totalorder %s12, 1
      %p100 = por %p98, %p99
      %p101 = scmp.ne.s32.totalorder %s93, %s96
      %p102 = scmp.eq.s32.totalorder %s12, 0
      %p103 = por %p101, %p102
      %p104 = scmp.ne.s32.totalorder %s93, %s96
      %p105 = scmp.eq.s32.totalorder %s17, 1
      %p106 = por %p104, %p105
      %p107 = scmp.ne.s32.totalorder %s96, %s97
      %p108 = scmp.eq.s32.totalorder %s17, 0
      %p109 = por %p107, %p108
      %p110 = scmp.ne.s32.totalorder %s96, %s97
      %p111 = scmp.eq.s32.totalorder %s18, 1
      %p112 = por %p110, %p111
      %p114 = scmp.ne.s32.totalorder %s97, %s113
      %p115 = scmp.eq.s32.totalorder %s18, 0
      %p116 = por %p114, %p115
      %s117 = ssub.s32 %s19, %s38
      %s118 = ssub.s32 %s20, %s34
      %s119 = sor.u32 %s117, %s118
      %s120 = ssub.s32 %s21, %s30
      %s121 = sor.u32 %s119, %s120
      %p122 = scmp.eq.s32.totalorder %s121, 0
      %s124 = sadd.s32 %s123, 1
      %s125 = scalar_select %p122, %s123, %s124
      %p128 = pneg %p122
      %p129 = scmp.eq.s32.totalorder %s12, 1
      %p130 = por %p128, %p129
      %p131 = scmp.ne.s32.totalorder %s123, %s126
      %p132 = scmp.eq.s32.totalorder %s12, 0
      %p133 = por %p131, %p132
      %p134 = scmp.ne.s32.totalorder %s123, %s126
      %p135 = scmp.eq.s32.totalorder %s17, 1
      %p136 = por %p134, %p135
      %p137 = scmp.ne.s32.totalorder %s126, %s127
      %p138 = scmp.eq.s32.totalorder %s17, 0
      %p139 = por %p137, %p138
      %p140 = scmp.ne.s32.totalorder %s126, %s127
      %p141 = scmp.eq.s32.totalorder %s18, 1
      %p142 = por %p140, %p141
      %p144 = scmp.ne.s32.totalorder %s127, %s143
      %p145 = scmp.eq.s32.totalorder %s18, 0
      %p146 = por %p144, %p145
      %p147 = scmp.le.s32.totalorder 1, %s12
      %p148 = scmp.lt.s32.totalorder %s12, 3
      %p149 = pnand %p147, %p148
      %p150 = pneg %p149
      // Predicated region
      $region9: #{tpu_custom_call.1} parent=5 // pred_check
        _
      $region10: #{tpu_custom_call.1} parent=5 // pred_check_branch
        %152 = sbr.rel (%p149) target = $region12
      $region11: #{tpu_custom_call.1} parent=5 // pred_region
        %s153 = ssub.s32 %s12, 1
        // Predicated region
        $region13: #{tpu_custom_call.1} parent=11 // pred_check
          %p154 = pneg %p83
        $region14: #{tpu_custom_call.1} parent=11 // pred_check_branch
          %156 = sbr.rel (%p154) target = $region16
        $region15: #{tpu_custom_call.1} parent=11 // pred_region
          %p157 = scmp.lt.s32.totalorder %s24, 0
          %s158 = scalar_select %p157, %s24, 0
          %s159 = smul.addr %s158, 8
          %s160 = scalar_lea.vmem %s1, %s159
        $region16: #{tpu_custom_call.1} parent=11 // pred_fallthru
          _
        // Predicated region
        $region17: #{tpu_custom_call.1} parent=11 // pred_check
          %p161 = pneg %p109
        $region18: #{tpu_custom_call.1} parent=11 // pred_check_branch
          %163 = sbr.rel (%p161) target = $region20
        $region19: #{tpu_custom_call.1} parent=11 // pred_region
          %p164 = scmp.lt.s32.totalorder %s24, 0
          %s165 = scalar_select %p164, %s24, 0
          %s166 = scalar_lea.vmem %s2, %s165
        $region20: #{tpu_custom_call.1} parent=11 // pred_fallthru
          _
      $region12: #{tpu_custom_call.1} parent=5 // pred_fallthru
        _
      %p167 = scmp.lt.s32.totalorder %s12, 2
      // Predicated region
      $region21: #{tpu_custom_call.1} parent=5 // pred_check
        %p168 = pneg %p167
      $region22: #{tpu_custom_call.1} parent=5 // pred_check_branch
        %170 = sbr.rel (%p168) target = $region24
      $region23: #{tpu_custom_call.1} parent=5 // pred_region
        // Predicated region
        $region25: #{tpu_custom_call.1} parent=23 // pred_check
          %p171 = pneg %p51
        $region26: #{tpu_custom_call.1} parent=23 // pred_check_branch
          %173 = sbr.rel (%p171) target = $region28
        $region27: #{tpu_custom_call.1} parent=23 // pred_region
          %p174 = scmp.lt.s32.totalorder %s19, 1
          %s175 = scalar_select %p174, %s19, 1
          %s176 = smul.addr %s175, 54
          %s177 = smul.addr %s176, 8
          %s178 = scalar_lea.vmem %s0, %s177
        $region28: #{tpu_custom_call.1} parent=23 // pred_fallthru
          _
      $region24: #{tpu_custom_call.1} parent=5 // pred_fallthru
        _
      %p179 = scmp.le.s32.totalorder 1, %s12
      %p180 = scmp.lt.s32.totalorder %s12, 3
      %p181 = pnand %p179, %p180
      %p182 = pneg %p181
      // Predicated region
      $region29: #{tpu_custom_call.1} parent=5 // pred_check
        _
      $region30: #{tpu_custom_call.1} parent=5 // pred_check_branch
        %184 = sbr.rel (%p181) target = $region32
      $region31: #{tpu_custom_call.1} parent=5 // pred_region
        %s185 = ssub.s32 %s12, 1
        %p186 = scmp.lt.s32.totalorder %s22, 1
        %s187 = scalar_select %p186, %s22, 1
        %s188 = smul.addr %s187, 54
        %s189 = smul.addr %s188, 8
        %s190 = scalar_lea.vmem %s0, %s189
        %p191 = pneg %p57
        %p192 = pneg %p54
        %p193 = scmp.lt.s32.totalorder %s24, 0
        %s194 = scalar_select %p193, %s24, 0
        %s195 = smul.addr %s194, 8
        %s196 = scalar_lea.vmem %s1, %s195
        %p197 = pneg %p83
        %p198 = pneg %p80
        %p199 = scmp.lt.s32.totalorder %s24, 0
        %s200 = scalar_select %p199, %s24, 0
        %s201 = scalar_lea.vmem %s2, %s200
        %p202 = pneg %p109
        %p203 = pneg %p106
        %p204 = pneg %p139
        %p205 = pneg %p136
        %s206 = sand.u32 %s126, 1
        %s207 = scalar_lea.sflag [#allocation4], %s206
        %s208 = sand.u32 %s126, 1
        %s209 = smul.addr %s208, 256
        %s210 = scalar_lea.vmem [#allocation3], %s209
        %p211 = scmp.lt.s32.totalorder %s22, 1
        %s212 = scalar_select %p211, %s22, 1
        %s213 = smul.addr %s212, 54
        %s214 = smul.addr %s213, 8
        %s215 = scalar_lea.vmem %s0, %s214
        %p216 = scmp.lt.s32.totalorder %s24, 0
        %s217 = scalar_select %p216, %s24, 0
        %s218 = smul.addr %s217, 8
        %s219 = scalar_lea.vmem %s1, %s218
        %p220 = scmp.lt.s32.totalorder %s24, 0
        %s221 = scalar_select %p220, %s24, 0
        %s222 = scalar_lea.vmem %s2, %s221
        %s223 = smul.u32 32, %s23
        %p224 = scmp.eq.s32.totalorder %s24, 0
        // Predicated region
        $region33: #{tpu_custom_call.1} parent=31 // pred_check
          %p225 = pneg %p224
        $region34: #{tpu_custom_call.1} parent=31 // pred_check_branch
          %227 = sbr.rel (%p225) target = $region36
        $region35: #{tpu_custom_call.1} parent=31 // pred_region
          %s228 = smul.u32 %s23, 16
          %s229 = smul.u32 %s228, 24
          %s230 = scalar_lea.vmem %s215, %s229
          %v231 = vld [vmem:[%s230] sm:$0xff]
          %v232 = vld [vmem:[%s230 + $0x8] sm:$0xff]
          %v233 = vld [vmem:[%s230 + $0x10] sm:$0x3]
          %v234 = vld [vmem:[%s230 + $0x18] sm:$0xff]
          %v235 = vld [vmem:[%s230 + $0x20] sm:$0xff]
          %v236 = vld [vmem:[%s230 + $0x28] sm:$0x3]
          %v237 = vld [vmem:[%s230 + $0x30] sm:$0xff]
          %v238 = vld [vmem:[%s230 + $0x38] sm:$0xff]
          %v239 = vld [vmem:[%s230 + $0x40] sm:$0x3]
          %v240 = vld [vmem:[%s230 + $0x48] sm:$0xff]
          %v241 = vld [vmem:[%s230 + $0x50] sm:$0xff]
          %v242 = vld [vmem:[%s230 + $0x58] sm:$0x3]
          %v243 = vld [vmem:[%s230 + $0x60] sm:$0xff]
          %v244 = vld [vmem:[%s230 + $0x68] sm:$0xff]
          %v245 = vld [vmem:[%s230 + $0x70] sm:$0x3]
          %v246 = vld [vmem:[%s230 + $0x78] sm:$0xff]
          %v247 = vld [vmem:[%s230 + $0x80] sm:$0xff]
          %v248 = vld [vmem:[%s230 + $0x88] sm:$0x3]
          %v249 = vld [vmem:[%s230 + $0x90] sm:$0xff]
          %v250 = vld [vmem:[%s230 + $0x98] sm:$0xff]
          %v251 = vld [vmem:[%s230 + $0xa0] sm:$0x3]
          %v252 = vld [vmem:[%s230 + $0xa8] sm:$0xff]
          %v253 = vld [vmem:[%s230 + $0xb0] sm:$0xff]
          %v254 = vld [vmem:[%s230 + $0xb8] sm:$0x3]
          %v255 = vld [vmem:[%s230 + $0xc0] sm:$0xff]
          %v256 = vld [vmem:[%s230 + $0xc8] sm:$0xff]
          %v257 = vld [vmem:[%s230 + $0xd0] sm:$0x3]
          %v258 = vld [vmem:[%s230 + $0xd8] sm:$0xff]
          %v259 = vld [vmem:[%s230 + $0xe0] sm:$0xff]
          %v260 = vld [vmem:[%s230 + $0xe8] sm:$0x3]
          %v261 = vld [vmem:[%s230 + $0xf0] sm:$0xff]
          %v262 = vld [vmem:[%s230 + $0xf8] sm:$0xff]
          %v263 = vld [vmem:[%s230 + $0x100] sm:$0x3]
          %v264 = vld [vmem:[%s230 + $0x108] sm:$0xff]
          %v265 = vld [vmem:[%s230 + $0x110] sm:$0xff]
          %v266 = vld [vmem:[%s230 + $0x118] sm:$0x3]
          %v267 = vld [vmem:[%s230 + $0x120] sm:$0xff]
          %v268 = vld [vmem:[%s230 + $0x128] sm:$0xff]
          %v269 = vld [vmem:[%s230 + $0x130] sm:$0x3]
          %v270 = vld [vmem:[%s230 + $0x138] sm:$0xff]
          %v271 = vld [vmem:[%s230 + $0x140] sm:$0xff]
          %v272 = vld [vmem:[%s230 + $0x148] sm:$0x3]
          %v273 = vld [vmem:[%s230 + $0x150] sm:$0xff]
          %v274 = vld [vmem:[%s230 + $0x158] sm:$0xff]
          %v275 = vld [vmem:[%s230 + $0x160] sm:$0x3]
          %v276 = vld [vmem:[%s230 + $0x168] sm:$0xff]
          %v277 = vld [vmem:[%s230 + $0x170] sm:$0xff]
          %v278 = vld [vmem:[%s230 + $0x178] sm:$0x3]
          %v279 = vld [vmem:[%s230 + $0x180] sm:$0xff]
          %v280 = vld [vmem:[%s230 + $0x188] sm:$0xff]
          %v281 = vld [vmem:[%s230 + $0x190] sm:$0x3]
          %v282 = vld [vmem:[%s230 + $0x198] sm:$0xff]
          %v283 = vld [vmem:[%s230 + $0x1a0] sm:$0xff]
          %v284 = vld [vmem:[%s230 + $0x1a8] sm:$0x3]
          %vm333 = vcmask 1046528
          %v334 = vrot.slane %v231, 1
          %v335 = vrot.slane %v232, 1
          %v336 = vsel %vm333, %v334, %v335
          %v337 = vrot.slane %v233, 1
          %v338 = vsel %vm333, %v335, %v337
          %v339 = vrot.slane %v234, 1
          %v340 = vrot.slane %v235, 1
          %v341 = vsel %vm333, %v339, %v340
          %v342 = vrot.slane %v236, 1
          %v343 = vsel %vm333, %v340, %v342
          %v344 = vrot.slane %v237, 1
          %v345 = vrot.slane %v238, 1
          %v346 = vsel %vm333, %v344, %v345
          %v347 = vrot.slane %v239, 1
          %v348 = vsel %vm333, %v345, %v347
          %v349 = vrot.slane %v240, 1
          %v350 = vrot.slane %v241, 1
          %v351 = vsel %vm333, %v349, %v350
          %v352 = vrot.slane %v242, 1
          %v353 = vsel %vm333, %v350, %v352
          %v354 = vrot.slane %v243, 1
          %v355 = vrot.slane %v244, 1
          %v356 = vsel %vm333, %v354, %v355
          %v357 = vrot.slane %v245, 1
          %v358 = vsel %vm333, %v355, %v357
          %v359 = vrot.slane %v246, 1
          %v360 = vrot.slane %v247, 1
          %v361 = vsel %vm333, %v359, %v360
          %v362 = vrot.slane %v248, 1
          %v363 = vsel %vm333, %v360, %v362
          %v364 = vrot.slane %v249, 1
          %v365 = vrot.slane %v250, 1
          %v366 = vsel %vm333, %v364, %v365
          %v367 = vrot.slane %v251, 1
          %v368 = vsel %vm333, %v365, %v367
          %v369 = vrot.slane %v252, 1
          %v370 = vrot.slane %v253, 1
          %v371 = vsel %vm333, %v369, %v370
          %v372 = vrot.slane %v254, 1
          %v373 = vsel %vm333, %v370, %v372
          %v374 = vrot.slane %v255, 1
          %v375 = vrot.slane %v256, 1
          %v376 = vsel %vm333, %v374, %v375
          %v377 = vrot.slane %v257, 1
          %v378 = vsel %vm333, %v375, %v377
          %v379 = vrot.slane %v258, 1
          %v380 = vrot.slane %v259, 1
          %v381 = vsel %vm333, %v379, %v380
          %v382 = vrot.slane %v260, 1
          %v383 = vsel %vm333, %v380, %v382
          %v384 = vrot.slane %v261, 1
          %v385 = vrot.slane %v262, 1
          %v386 = vsel %vm333, %v384, %v385
          %v387 = vrot.slane %v263, 1
          %v388 = vsel %vm333, %v385, %v387
          %v389 = vrot.slane %v264, 1
          %v390 = vrot.slane %v265, 1
          %v391 = vsel %vm333, %v389, %v390
          %v392 = vrot.slane %v266, 1
          %v393 = vsel %vm333, %v390, %v392
          %v394 = vrot.slane %v267, 1
          %v395 = vrot.slane %v268, 1
          %v396 = vsel %vm333, %v394, %v395
          %v397 = vrot.slane %v269, 1
          %v398 = vsel %vm333, %v395, %v397
          %v399 = vrot.slane %v270, 1
          %v400 = vrot.slane %v271, 1
          %v401 = vsel %vm333, %v399, %v400
          %v402 = vrot.slane %v272, 1
          %v403 = vsel %vm333, %v400, %v402
          %v404 = vrot.slane %v273, 1
          %v405 = vrot.slane %v274, 1
          %v406 = vsel %vm333, %v404, %v405
          %v407 = vrot.slane %v275, 1
          %v408 = vsel %vm333, %v405, %v407
          %v409 = vrot.slane %v276, 1
          %v410 = vrot.slane %v277, 1
          %v411 = vsel %vm333, %v409, %v410
          %v412 = vrot.slane %v278, 1
          %v413 = vsel %vm333, %v410, %v412
          %414 = vrot.lane.b32.xlu0 %v336, 4
          %v415 = vpop.permute.xlu0 %414
          %416 = vrot.lane.b32.xlu0 %v338, 4
          %v417 = vpop.permute.xlu0 %416
          %418 = vrot.lane.b32.xlu0 %v341, 4
          %v419 = vpop.permute.xlu0 %418
          %420 = vrot.lane.b32.xlu0 %v343, 4
          %v421 = vpop.permute.xlu0 %420
          %422 = vrot.lane.b32.xlu0 %v346, 4
          %v423 = vpop.permute.xlu0 %422
          %424 = vrot.lane.b32.xlu0 %v348, 4
          %v425 = vpop.permute.xlu0 %424
          %426 = vrot.lane.b32.xlu0 %v351, 4
          %v427 = vpop.permute.xlu0 %426
          %428 = vrot.lane.b32.xlu0 %v353, 4
          %v429 = vpop.permute.xlu0 %428
          %430 = vrot.lane.b32.xlu0 %v356, 4
          %v431 = vpop.permute.xlu0 %430
          %432 = vrot.lane.b32.xlu0 %v358, 4
          %v433 = vpop.permute.xlu0 %432
          %434 = vrot.lane.b32.xlu0 %v361, 4
          %v435 = vpop.permute.xlu0 %434
          %436 = vrot.lane.b32.xlu0 %v363, 4
          %v437 = vpop.permute.xlu0 %436
          %438 = vrot.lane.b32.xlu0 %v366, 4
          %v439 = vpop.permute.xlu0 %438
          %440 = vrot.lane.b32.xlu0 %v368, 4
          %v441 = vpop.permute.xlu0 %440
          %442 = vrot.lane.b32.xlu0 %v371, 4
          %v443 = vpop.permute.xlu0 %442
          %444 = vrot.lane.b32.xlu0 %v373, 4
          %v445 = vpop.permute.xlu0 %444
          %446 = vrot.lane.b32.xlu0 %v376, 4
          %v447 = vpop.permute.xlu0 %446
          %448 = vrot.lane.b32.xlu0 %v378, 4
          %v449 = vpop.permute.xlu0 %448
          %450 = vrot.lane.b32.xlu0 %v381, 4
          %v451 = vpop.permute.xlu0 %450
          %452 = vrot.lane.b32.xlu0 %v383, 4
          %v453 = vpop.permute.xlu0 %452
          %454 = vrot.lane.b32.xlu0 %v386, 4
          %v455 = vpop.permute.xlu0 %454
          %456 = vrot.lane.b32.xlu0 %v388, 4
          %v457 = vpop.permute.xlu0 %456
          %458 = vrot.lane.b32.xlu0 %v391, 4
          %v459 = vpop.permute.xlu0 %458
          %460 = vrot.lane.b32.xlu0 %v393, 4
          %v461 = vpop.permute.xlu0 %460
          %462 = vrot.lane.b32.xlu0 %v396, 4
          %v463 = vpop.permute.xlu0 %462
          %464 = vrot.lane.b32.xlu0 %v398, 4
          %v465 = vpop.permute.xlu0 %464
          %466 = vrot.lane.b32.xlu0 %v401, 4
          %v467 = vpop.permute.xlu0 %466
          %468 = vrot.lane.b32.xlu0 %v403, 4
          %v469 = vpop.permute.xlu0 %468
          %470 = vrot.lane.b32.xlu0 %v406, 4
          %v471 = vpop.permute.xlu0 %470
          %472 = vrot.lane.b32.xlu0 %v408, 4
          %v473 = vpop.permute.xlu0 %472
          %474 = vrot.lane.b32.xlu0 %v411, 4
          %v475 = vpop.permute.xlu0 %474
          %476 = vrot.lane.b32.xlu0 %v413, 4
          %v477 = vpop.permute.xlu0 %476
          %vm510 = vcmask 1045504
          %v511 = vrot.slane %v231, 2
          %v512 = vrot.slane %v232, 2
          %v513 = vsel %vm510, %v511, %v512
          %v514 = vrot.slane %v233, 2
          %v515 = vsel %vm510, %v512, %v514
          %v516 = vrot.slane %v234, 2
          %v517 = vrot.slane %v235, 2
          %v518 = vsel %vm510, %v516, %v517
          %v519 = vrot.slane %v236, 2
          %v520 = vsel %vm510, %v517, %v519
          %v521 = vrot.slane %v237, 2
          %v522 = vrot.slane %v238, 2
          %v523 = vsel %vm510, %v521, %v522
          %v524 = vrot.slane %v239, 2
          %v525 = vsel %vm510, %v522, %v524
          %v526 = vrot.slane %v240, 2
          %v527 = vrot.slane %v241, 2
          %v528 = vsel %vm510, %v526, %v527
          %v529 = vrot.slane %v242, 2
          %v530 = vsel %vm510, %v527, %v529
          %v531 = vrot.slane %v243, 2
          %v532 = vrot.slane %v244, 2
          %v533 = vsel %vm510, %v531, %v532
          %v534 = vrot.slane %v245, 2
          %v535 = vsel %vm510, %v532, %v534
          %v536 = vrot.slane %v246, 2
          %v537 = vrot.slane %v247, 2
          %v538 = vsel %vm510, %v536, %v537
          %v539 = vrot.slane %v248, 2
          %v540 = vsel %vm510, %v537, %v539
          %v541 = vrot.slane %v249, 2
          %v542 = vrot.slane %v250, 2
          %v543 = vsel %vm510, %v541, %v542
          %v544 = vrot.slane %v251, 2
          %v545 = vsel %vm510, %v542, %v544
          %v546 = vrot.slane %v252, 2
          %v547 = vrot.slane %v253, 2
          %v548 = vsel %vm510, %v546, %v547
          %v549 = vrot.slane %v254, 2
          %v550 = vsel %vm510, %v547, %v549
          %v551 = vrot.slane %v255, 2
          %v552 = vrot.slane %v256, 2
          %v553 = vsel %vm510, %v551, %v552
          %v554 = vrot.slane %v257, 2
          %v555 = vsel %vm510, %v552, %v554
          %v556 = vrot.slane %v258, 2
          %v557 = vrot.slane %v259, 2
          %v558 = vsel %vm510, %v556, %v557
          %v559 = vrot.slane %v260, 2
          %v560 = vsel %vm510, %v557, %v559
          %v561 = vrot.slane %v261, 2
          %v562 = vrot.slane %v262, 2
          %v563 = vsel %vm510, %v561, %v562
          %v564 = vrot.slane %v263, 2
          %v565 = vsel %vm510, %v562, %v564
          %v566 = vrot.slane %v264, 2
          %v567 = vrot.slane %v265, 2
          %v568 = vsel %vm510, %v566, %v567
          %v569 = vrot.slane %v266, 2
          %v570 = vsel %vm510, %v567, %v569
          %v571 = vrot.slane %v267, 2
          %v572 = vrot.slane %v268, 2
          %v573 = vsel %vm510, %v571, %v572
          %v574 = vrot.slane %v269, 2
          %v575 = vsel %vm510, %v572, %v574
          %v576 = vrot.slane %v270, 2
          %v577 = vrot.slane %v271, 2
          %v578 = vsel %vm510, %v576, %v577
          %v579 = vrot.slane %v272, 2
          %v580 = vsel %vm510, %v577, %v579
          %v581 = vrot.slane %v273, 2
          %v582 = vrot.slane %v274, 2
          %v583 = vsel %vm510, %v581, %v582
          %v584 = vrot.slane %v275, 2
          %v585 = vsel %vm510, %v582, %v584
          %v586 = vrot.slane %v276, 2
          %v587 = vrot.slane %v277, 2
          %v588 = vsel %vm510, %v586, %v587
          %v589 = vrot.slane %v278, 2
          %v590 = vsel %vm510, %v587, %v589
          %591 = vrot.lane.b32.xlu0 %v513, 8
          %v592 = vpop.permute.xlu0 %591
          %593 = vrot.lane.b32.xlu0 %v515, 8
          %v594 = vpop.permute.xlu0 %593
          %595 = vrot.lane.b32.xlu0 %v518, 8
          %v596 = vpop.permute.xlu0 %595
          %597 = vrot.lane.b32.xlu0 %v520, 8
          %v598 = vpop.permute.xlu0 %597
          %599 = vrot.lane.b32.xlu0 %v523, 8
          %v600 = vpop.permute.xlu0 %599
          %601 = vrot.lane.b32.xlu0 %v525, 8
          %v602 = vpop.permute.xlu0 %601
          %603 = vrot.lane.b32.xlu0 %v528, 8
          %v604 = vpop.permute.xlu0 %603
          %605 = vrot.lane.b32.xlu0 %v530, 8
          %v606 = vpop.permute.xlu0 %605
          %607 = vrot.lane.b32.xlu0 %v533, 8
          %v608 = vpop.permute.xlu0 %607
          %609 = vrot.lane.b32.xlu0 %v535, 8
          %v610 = vpop.permute.xlu0 %609
          %611 = vrot.lane.b32.xlu0 %v538, 8
          %v612 = vpop.permute.xlu0 %611
          %613 = vrot.lane.b32.xlu0 %v540, 8
          %v614 = vpop.permute.xlu0 %613
          %615 = vrot.lane.b32.xlu0 %v543, 8
          %v616 = vpop.permute.xlu0 %615
          %617 = vrot.lane.b32.xlu0 %v545, 8
          %v618 = vpop.permute.xlu0 %617
          %619 = vrot.lane.b32.xlu0 %v548, 8
          %v620 = vpop.permute.xlu0 %619
          %621 = vrot.lane.b32.xlu0 %v550, 8
          %v622 = vpop.permute.xlu0 %621
          %623 = vrot.lane.b32.xlu0 %v553, 8
          %v624 = vpop.permute.xlu0 %623
          %625 = vrot.lane.b32.xlu0 %v555, 8
          %v626 = vpop.permute.xlu0 %625
          %627 = vrot.lane.b32.xlu0 %v558, 8
          %v628 = vpop.permute.xlu0 %627
          %629 = vrot.lane.b32.xlu0 %v560, 8
          %v630 = vpop.permute.xlu0 %629
          %631 = vrot.lane.b32.xlu0 %v563, 8
          %v632 = vpop.permute.xlu0 %631
          %633 = vrot.lane.b32.xlu0 %v565, 8
          %v634 = vpop.permute.xlu0 %633
          %635 = vrot.lane.b32.xlu0 %v568, 8
          %v636 = vpop.permute.xlu0 %635
          %637 = vrot.lane.b32.xlu0 %v570, 8
          %v638 = vpop.permute.xlu0 %637
          %639 = vrot.lane.b32.xlu0 %v573, 8
          %v640 = vpop.permute.xlu0 %639
          %641 = vrot.lane.b32.xlu0 %v575, 8
          %v642 = vpop.permute.xlu0 %641
          %643 = vrot.lane.b32.xlu0 %v578, 8
          %v644 = vpop.permute.xlu0 %643
          %645 = vrot.lane.b32.xlu0 %v580, 8
          %v646 = vpop.permute.xlu0 %645
          %647 = vrot.lane.b32.xlu0 %v583, 8
          %v648 = vpop.permute.xlu0 %647
          %649 = vrot.lane.b32.xlu0 %v585, 8
          %v650 = vpop.permute.xlu0 %649
          %651 = vrot.lane.b32.xlu0 %v588, 8
          %v652 = vpop.permute.xlu0 %651
          %653 = vrot.lane.b32.xlu0 %v590, 8
          %v654 = vpop.permute.xlu0 %653
          %689 = vrot.lane.b32.xlu0 %v234, 12
          %v690 = vpop.permute.xlu0 %689
          %691 = vrot.lane.b32.xlu0 %v235, 12
          %v692 = vpop.permute.xlu0 %691
          %693 = vrot.lane.b32.xlu0 %v237, 12
          %v694 = vpop.permute.xlu0 %693
          %695 = vrot.lane.b32.xlu0 %v238, 12
          %v696 = vpop.permute.xlu0 %695
          %697 = vrot.lane.b32.xlu0 %v240, 12
          %v698 = vpop.permute.xlu0 %697
          %699 = vrot.lane.b32.xlu0 %v241, 12
          %v700 = vpop.permute.xlu0 %699
          %701 = vrot.lane.b32.xlu0 %v243, 12
          %v702 = vpop.permute.xlu0 %701
          %703 = vrot.lane.b32.xlu0 %v244, 12
          %v704 = vpop.permute.xlu0 %703
          %705 = vrot.lane.b32.xlu0 %v246, 12
          %v706 = vpop.permute.xlu0 %705
          %707 = vrot.lane.b32.xlu0 %v247, 12
          %v708 = vpop.permute.xlu0 %707
          %709 = vrot.lane.b32.xlu0 %v249, 12
          %v710 = vpop.permute.xlu0 %709
          %711 = vrot.lane.b32.xlu0 %v250, 12
          %v712 = vpop.permute.xlu0 %711
          %713 = vrot.lane.b32.xlu0 %v252, 12
          %v714 = vpop.permute.xlu0 %713
          %715 = vrot.lane.b32.xlu0 %v253, 12
          %v716 = vpop.permute.xlu0 %715
          %717 = vrot.lane.b32.xlu0 %v255, 12
          %v718 = vpop.permute.xlu0 %717
          %719 = vrot.lane.b32.xlu0 %v256, 12
          %v720 = vpop.permute.xlu0 %719
          %721 = vrot.lane.b32.xlu0 %v258, 12
          %v722 = vpop.permute.xlu0 %721
          %723 = vrot.lane.b32.xlu0 %v259, 12
          %v724 = vpop.permute.xlu0 %723
          %725 = vrot.lane.b32.xlu0 %v261, 12
          %v726 = vpop.permute.xlu0 %725
          %727 = vrot.lane.b32.xlu0 %v262, 12
          %v728 = vpop.permute.xlu0 %727
          %729 = vrot.lane.b32.xlu0 %v264, 12
          %v730 = vpop.permute.xlu0 %729
          %731 = vrot.lane.b32.xlu0 %v265, 12
          %v732 = vpop.permute.xlu0 %731
          %733 = vrot.lane.b32.xlu0 %v267, 12
          %v734 = vpop.permute.xlu0 %733
          %735 = vrot.lane.b32.xlu0 %v268, 12
          %v736 = vpop.permute.xlu0 %735
          %737 = vrot.lane.b32.xlu0 %v270, 12
          %v738 = vpop.permute.xlu0 %737
          %739 = vrot.lane.b32.xlu0 %v271, 12
          %v740 = vpop.permute.xlu0 %739
          %741 = vrot.lane.b32.xlu0 %v273, 12
          %v742 = vpop.permute.xlu0 %741
          %743 = vrot.lane.b32.xlu0 %v274, 12
          %v744 = vpop.permute.xlu0 %743
          %745 = vrot.lane.b32.xlu0 %v276, 12
          %v746 = vpop.permute.xlu0 %745
          %747 = vrot.lane.b32.xlu0 %v277, 12
          %v748 = vpop.permute.xlu0 %747
          %749 = vrot.lane.b32.xlu0 %v279, 12
          %v750 = vpop.permute.xlu0 %749
          %751 = vrot.lane.b32.xlu0 %v280, 12
          %v752 = vpop.permute.xlu0 %751
          %v786 = vrot.slane %v279, 1
          %v787 = vrot.slane %v280, 1
          %v788 = vsel %vm333, %v786, %v787
          %v789 = vrot.slane %v281, 1
          %v790 = vsel %vm333, %v787, %v789
          %791 = vrot.lane.b32.xlu0 %v341, 16
          %v792 = vpop.permute.xlu0 %791
          %793 = vrot.lane.b32.xlu0 %v343, 16
          %v794 = vpop.permute.xlu0 %793
          %795 = vrot.lane.b32.xlu0 %v346, 16
          %v796 = vpop.permute.xlu0 %795
          %797 = vrot.lane.b32.xlu0 %v348, 16
          %v798 = vpop.permute.xlu0 %797
          %799 = vrot.lane.b32.xlu0 %v351, 16
          %v800 = vpop.permute.xlu0 %799
          %801 = vrot.lane.b32.xlu0 %v353, 16
          %v802 = vpop.permute.xlu0 %801
          %803 = vrot.lane.b32.xlu0 %v356, 16
          %v804 = vpop.permute.xlu0 %803
          %805 = vrot.lane.b32.xlu0 %v358, 16
          %v806 = vpop.permute.xlu0 %805
          %807 = vrot.lane.b32.xlu0 %v361, 16
          %v808 = vpop.permute.xlu0 %807
          %809 = vrot.lane.b32.xlu0 %v363, 16
          %v810 = vpop.permute.xlu0 %809
          %811 = vrot.lane.b32.xlu0 %v366, 16
          %v812 = vpop.permute.xlu0 %811
          %813 = vrot.lane.b32.xlu0 %v368, 16
          %v814 = vpop.permute.xlu0 %813
          %815 = vrot.lane.b32.xlu0 %v371, 16
          %v816 = vpop.permute.xlu0 %815
          %817 = vrot.lane.b32.xlu0 %v373, 16
          %v818 = vpop.permute.xlu0 %817
          %819 = vrot.lane.b32.xlu0 %v376, 16
          %v820 = vpop.permute.xlu0 %819
          %821 = vrot.lane.b32.xlu0 %v378, 16
          %v822 = vpop.permute.xlu0 %821
          %823 = vrot.lane.b32.xlu0 %v381, 16
          %v824 = vpop.permute.xlu0 %823
          %825 = vrot.lane.b32.xlu0 %v383, 16
          %v826 = vpop.permute.xlu0 %825
          %827 = vrot.lane.b32.xlu0 %v386, 16
          %v828 = vpop.permute.xlu0 %827
          %829 = vrot.lane.b32.xlu0 %v388, 16
          %v830 = vpop.permute.xlu0 %829
          %831 = vrot.lane.b32.xlu0 %v391, 16
          %v832 = vpop.permute.xlu0 %831
          %833 = vrot.lane.b32.xlu0 %v393, 16
          %v834 = vpop.permute.xlu0 %833
          %835 = vrot.lane.b32.xlu0 %v396, 16
          %v836 = vpop.permute.xlu0 %835
          %837 = vrot.lane.b32.xlu0 %v398, 16
          %v838 = vpop.permute.xlu0 %837
          %839 = vrot.lane.b32.xlu0 %v401, 16
          %v840 = vpop.permute.xlu0 %839
          %841 = vrot.lane.b32.xlu0 %v403, 16
          %v842 = vpop.permute.xlu0 %841
          %843 = vrot.lane.b32.xlu0 %v406, 16
          %v844 = vpop.permute.xlu0 %843
          %845 = vrot.lane.b32.xlu0 %v408, 16
          %v846 = vpop.permute.xlu0 %845
          %847 = vrot.lane.b32.xlu0 %v411, 16
          %v848 = vpop.permute.xlu0 %847
          %849 = vrot.lane.b32.xlu0 %v413, 16
          %v850 = vpop.permute.xlu0 %849
          %851 = vrot.lane.b32.xlu0 %v788, 16
          %v852 = vpop.permute.xlu0 %851
          %853 = vrot.lane.b32.xlu0 %v790, 16
          %v854 = vpop.permute.xlu0 %853
          %v887 = vrot.slane %v279, 2
          %v888 = vrot.slane %v280, 2
          %v889 = vsel %vm510, %v887, %v888
          %v890 = vrot.slane %v281, 2
          %v891 = vsel %vm510, %v888, %v890
          %892 = vrot.lane.b32.xlu0 %v518, 20
          %v893 = vpop.permute.xlu0 %892
          %894 = vrot.lane.b32.xlu0 %v520, 20
          %v895 = vpop.permute.xlu0 %894
          %896 = vrot.lane.b32.xlu0 %v523, 20
          %v897 = vpop.permute.xlu0 %896
          %898 = vrot.lane.b32.xlu0 %v525, 20
          %v899 = vpop.permute.xlu0 %898
          %900 = vrot.lane.b32.xlu0 %v528, 20
          %v901 = vpop.permute.xlu0 %900
          %902 = vrot.lane.b32.xlu0 %v530, 20
          %v903 = vpop.permute.xlu0 %902
          %904 = vrot.lane.b32.xlu0 %v533, 20
          %v905 = vpop.permute.xlu0 %904
          %906 = vrot.lane.b32.xlu0 %v535, 20
          %v907 = vpop.permute.xlu0 %906
          %908 = vrot.lane.b32.xlu0 %v538, 20
          %v909 = vpop.permute.xlu0 %908
          %910 = vrot.lane.b32.xlu0 %v540, 20
          %v911 = vpop.permute.xlu0 %910
          %912 = vrot.lane.b32.xlu0 %v543, 20
          %v913 = vpop.permute.xlu0 %912
          %914 = vrot.lane.b32.xlu0 %v545, 20
          %v915 = vpop.permute.xlu0 %914
          %916 = vrot.lane.b32.xlu0 %v548, 20
          %v917 = vpop.permute.xlu0 %916
          %918 = vrot.lane.b32.xlu0 %v550, 20
          %v919 = vpop.permute.xlu0 %918
          %920 = vrot.lane.b32.xlu0 %v553, 20
          %v921 = vpop.permute.xlu0 %920
          %922 = vrot.lane.b32.xlu0 %v555, 20
          %v923 = vpop.permute.xlu0 %922
          %924 = vrot.lane.b32.xlu0 %v558, 20
          %v925 = vpop.permute.xlu0 %924
          %926 = vrot.lane.b32.xlu0 %v560, 20
          %v927 = vpop.permute.xlu0 %926
          %928 = vrot.lane.b32.xlu0 %v563, 20
          %v929 = vpop.permute.xlu0 %928
          %930 = vrot.lane.b32.xlu0 %v565, 20
          %v931 = vpop.permute.xlu0 %930
          %932 = vrot.lane.b32.xlu0 %v568, 20
          %v933 = vpop.permute.xlu0 %932
          %934 = vrot.lane.b32.xlu0 %v570, 20
          %v935 = vpop.permute.xlu0 %934
          %936 = vrot.lane.b32.xlu0 %v573, 20
          %v937 = vpop.permute.xlu0 %936
          %938 = vrot.lane.b32.xlu0 %v575, 20
          %v939 = vpop.permute.xlu0 %938
          %940 = vrot.lane.b32.xlu0 %v578, 20
          %v941 = vpop.permute.xlu0 %940
          %942 = vrot.lane.b32.xlu0 %v580, 20
          %v943 = vpop.permute.xlu0 %942
          %944 = vrot.lane.b32.xlu0 %v583, 20
          %v945 = vpop.permute.xlu0 %944
          %946 = vrot.lane.b32.xlu0 %v585, 20
          %v947 = vpop.permute.xlu0 %946
          %948 = vrot.lane.b32.xlu0 %v588, 20
          %v949 = vpop.permute.xlu0 %948
          %950 = vrot.lane.b32.xlu0 %v590, 20
          %v951 = vpop.permute.xlu0 %950
          %952 = vrot.lane.b32.xlu0 %v889, 20
          %v953 = vpop.permute.xlu0 %952
          %954 = vrot.lane.b32.xlu0 %v891, 20
          %v955 = vpop.permute.xlu0 %954
          %990 = vrot.lane.b32.xlu0 %v237, 24
          %v991 = vpop.permute.xlu0 %990
          %992 = vrot.lane.b32.xlu0 %v238, 24
          %v993 = vpop.permute.xlu0 %992
          %994 = vrot.lane.b32.xlu0 %v240, 24
          %v995 = vpop.permute.xlu0 %994
          %996 = vrot.lane.b32.xlu0 %v241, 24
          %v997 = vpop.permute.xlu0 %996
          %998 = vrot.lane.b32.xlu0 %v243, 24
          %v999 = vpop.permute.xlu0 %998
          %1000 = vrot.lane.b32.xlu0 %v244, 24
          %v1001 = vpop.permute.xlu0 %1000
          %1002 = vrot.lane.b32.xlu0 %v246, 24
          %v1003 = vpop.permute.xlu0 %1002
          %1004 = vrot.lane.b32.xlu0 %v247, 24
          %v1005 = vpop.permute.xlu0 %1004
          %1006 = vrot.lane.b32.xlu0 %v249, 24
          %v1007 = vpop.permute.xlu0 %1006
          %1008 = vrot.lane.b32.xlu0 %v250, 24
          %v1009 = vpop.permute.xlu0 %1008
          %1010 = vrot.lane.b32.xlu0 %v252, 24
          %v1011 = vpop.permute.xlu0 %1010
          %1012 = vrot.lane.b32.xlu0 %v253, 24
          %v1013 = vpop.permute.xlu0 %1012
          %1014 = vrot.lane.b32.xlu0 %v255, 24
          %v1015 = vpop.permute.xlu0 %1014
          %1016 = vrot.lane.b32.xlu0 %v256, 24
          %v1017 = vpop.permute.xlu0 %1016
          %1018 = vrot.lane.b32.xlu0 %v258, 24
          %v1019 = vpop.permute.xlu0 %1018
          %1020 = vrot.lane.b32.xlu0 %v259, 24
          %v1021 = vpop.permute.xlu0 %1020
          %1022 = vrot.lane.b32.xlu0 %v261, 24
          %v1023 = vpop.permute.xlu0 %1022
          %1024 = vrot.lane.b32.xlu0 %v262, 24
          %v1025 = vpop.permute.xlu0 %1024
          %1026 = vrot.lane.b32.xlu0 %v264, 24
          %v1027 = vpop.permute.xlu0 %1026
          %1028 = vrot.lane.b32.xlu0 %v265, 24
          %v1029 = vpop.permute.xlu0 %1028
          %1030 = vrot.lane.b32.xlu0 %v267, 24
          %v1031 = vpop.permute.xlu0 %1030
          %1032 = vrot.lane.b32.xlu0 %v268, 24
          %v1033 = vpop.permute.xlu0 %1032
          %1034 = vrot.lane.b32.xlu0 %v270, 24
          %v1035 = vpop.permute.xlu0 %1034
          %1036 = vrot.lane.b32.xlu0 %v271, 24
          %v1037 = vpop.permute.xlu0 %1036
          %1038 = vrot.lane.b32.xlu0 %v273, 24
          %v1039 = vpop.permute.xlu0 %1038
          %1040 = vrot.lane.b32.xlu0 %v274, 24
          %v1041 = vpop.permute.xlu0 %1040
          %1042 = vrot.lane.b32.xlu0 %v276, 24
          %v1043 = vpop.permute.xlu0 %1042
          %1044 = vrot.lane.b32.xlu0 %v277, 24
          %v1045 = vpop.permute.xlu0 %1044
          %1046 = vrot.lane.b32.xlu0 %v279, 24
          %v1047 = vpop.permute.xlu0 %1046
          %1048 = vrot.lane.b32.xlu0 %v280, 24
          %v1049 = vpop.permute.xlu0 %1048
          %1050 = vrot.lane.b32.xlu0 %v282, 24
          %v1051 = vpop.permute.xlu0 %1050
          %1052 = vrot.lane.b32.xlu0 %v283, 24
          %v1053 = vpop.permute.xlu0 %1052
          %v1087 = vrot.slane %v282, 1
          %v1088 = vrot.slane %v283, 1
          %v1089 = vsel %vm333, %v1087, %v1088
          %v1090 = vrot.slane %v284, 1
          %v1091 = vsel %vm333, %v1088, %v1090
          %1092 = vrot.lane.b32.xlu0 %v346, 28
          %v1093 = vpop.permute.xlu0 %1092
          %1094 = vrot.lane.b32.xlu0 %v348, 28
          %v1095 = vpop.permute.xlu0 %1094
          %1096 = vrot.lane.b32.xlu0 %v351, 28
          %v1097 = vpop.permute.xlu0 %1096
          %1098 = vrot.lane.b32.xlu0 %v353, 28
          %v1099 = vpop.permute.xlu0 %1098
          %1100 = vrot.lane.b32.xlu0 %v356, 28
          %v1101 = vpop.permute.xlu0 %1100
          %1102 = vrot.lane.b32.xlu0 %v358, 28
          %v1103 = vpop.permute.xlu0 %1102
          %1104 = vrot.lane.b32.xlu0 %v361, 28
          %v1105 = vpop.permute.xlu0 %1104
          %1106 = vrot.lane.b32.xlu0 %v363, 28
          %v1107 = vpop.permute.xlu0 %1106
          %1108 = vrot.lane.b32.xlu0 %v366, 28
          %v1109 = vpop.permute.xlu0 %1108
          %1110 = vrot.lane.b32.xlu0 %v368, 28
          %v1111 = vpop.permute.xlu0 %1110
          %1112 = vrot.lane.b32.xlu0 %v371, 28
          %v1113 = vpop.permute.xlu0 %1112
          %1114 = vrot.lane.b32.xlu0 %v373, 28
          %v1115 = vpop.permute.xlu0 %1114
          %1116 = vrot.lane.b32.xlu0 %v376, 28
          %v1117 = vpop.permute.xlu0 %1116
          %1118 = vrot.lane.b32.xlu0 %v378, 28
          %v1119 = vpop.permute.xlu0 %1118
          %1120 = vrot.lane.b32.xlu0 %v381, 28
          %v1121 = vpop.permute.xlu0 %1120
          %1122 = vrot.lane.b32.xlu0 %v383, 28
          %v1123 = vpop.permute.xlu0 %1122
          %1124 = vrot.lane.b32.xlu0 %v386, 28
          %v1125 = vpop.permute.xlu0 %1124
          %1126 = vrot.lane.b32.xlu0 %v388, 28
          %v1127 = vpop.permute.xlu0 %1126
          %1128 = vrot.lane.b32.xlu0 %v391, 28
          %v1129 = vpop.permute.xlu0 %1128
          %1130 = vrot.lane.b32.xlu0 %v393, 28
          %v1131 = vpop.permute.xlu0 %1130
          %1132 = vrot.lane.b32.xlu0 %v396, 28
          %v1133 = vpop.permute.xlu0 %1132
          %1134 = vrot.lane.b32.xlu0 %v398, 28
          %v1135 = vpop.permute.xlu0 %1134
          %1136 = vrot.lane.b32.xlu0 %v401, 28
          %v1137 = vpop.permute.xlu0 %1136
          %1138 = vrot.lane.b32.xlu0 %v403, 28
          %v1139 = vpop.permute.xlu0 %1138
          %1140 = vrot.lane.b32.xlu0 %v406, 28
          %v1141 = vpop.permute.xlu0 %1140
          %1142 = vrot.lane.b32.xlu0 %v408, 28
          %v1143 = vpop.permute.xlu0 %1142
          %1144 = vrot.lane.b32.xlu0 %v411, 28
          %v1145 = vpop.permute.xlu0 %1144
          %1146 = vrot.lane.b32.xlu0 %v413, 28
          %v1147 = vpop.permute.xlu0 %1146
          %1148 = vrot.lane.b32.xlu0 %v788, 28
          %v1149 = vpop.permute.xlu0 %1148
          %1150 = vrot.lane.b32.xlu0 %v790, 28
          %v1151 = vpop.permute.xlu0 %1150
          %1152 = vrot.lane.b32.xlu0 %v1089, 28
          %v1153 = vpop.permute.xlu0 %1152
          %1154 = vrot.lane.b32.xlu0 %v1091, 28
          %v1155 = vpop.permute.xlu0 %1154
          %v1188 = vrot.slane %v282, 2
          %v1189 = vrot.slane %v283, 2
          %v1190 = vsel %vm510, %v1188, %v1189
          %v1191 = vrot.slane %v284, 2
          %v1192 = vsel %vm510, %v1189, %v1191
          %1193 = vrot.lane.b32.xlu0 %v523, 32
          %v1194 = vpop.permute.xlu0 %1193
          %1195 = vrot.lane.b32.xlu0 %v525, 32
          %v1196 = vpop.permute.xlu0 %1195
          %1197 = vrot.lane.b32.xlu0 %v528, 32
          %v1198 = vpop.permute.xlu0 %1197
          %1199 = vrot.lane.b32.xlu0 %v530, 32
          %v1200 = vpop.permute.xlu0 %1199
          %1201 = vrot.lane.b32.xlu0 %v533, 32
          %v1202 = vpop.permute.xlu0 %1201
          %1203 = vrot.lane.b32.xlu0 %v535, 32
          %v1204 = vpop.permute.xlu0 %1203
          %1205 = vrot.lane.b32.xlu0 %v538, 32
          %v1206 = vpop.permute.xlu0 %1205
          %1207 = vrot.lane.b32.xlu0 %v540, 32
          %v1208 = vpop.permute.xlu0 %1207
          %1209 = vrot.lane.b32.xlu0 %v543, 32
          %v1210 = vpop.permute.xlu0 %1209
          %1211 = vrot.lane.b32.xlu0 %v545, 32
          %v1212 = vpop.permute.xlu0 %1211
          %1213 = vrot.lane.b32.xlu0 %v548, 32
          %v1214 = vpop.permute.xlu0 %1213
          %1215 = vrot.lane.b32.xlu0 %v550, 32
          %v1216 = vpop.permute.xlu0 %1215
          %1217 = vrot.lane.b32.xlu0 %v553, 32
          %v1218 = vpop.permute.xlu0 %1217
          %1219 = vrot.lane.b32.xlu0 %v555, 32
          %v1220 = vpop.permute.xlu0 %1219
          %1221 = vrot.lane.b32.xlu0 %v558, 32
          %v1222 = vpop.permute.xlu0 %1221
          %1223 = vrot.lane.b32.xlu0 %v560, 32
          %v1224 = vpop.permute.xlu0 %1223
          %1225 = vrot.lane.b32.xlu0 %v563, 32
          %v1226 = vpop.permute.xlu0 %1225
          %1227 = vrot.lane.b32.xlu0 %v565, 32
          %v1228 = vpop.permute.xlu0 %1227
          %1229 = vrot.lane.b32.xlu0 %v568, 32
          %v1230 = vpop.permute.xlu0 %1229
          %1231 = vrot.lane.b32.xlu0 %v570, 32
          %v1232 = vpop.permute.xlu0 %1231
          %1233 = vrot.lane.b32.xlu0 %v573, 32
          %v1234 = vpop.permute.xlu0 %1233
          %1235 = vrot.lane.b32.xlu0 %v575, 32
          %v1236 = vpop.permute.xlu0 %1235
          %1237 = vrot.lane.b32.xlu0 %v578, 32
          %v1238 = vpop.permute.xlu0 %1237
          %1239 = vrot.lane.b32.xlu0 %v580, 32
          %v1240 = vpop.permute.xlu0 %1239
          %1241 = vrot.lane.b32.xlu0 %v583, 32
          %v1242 = vpop.permute.xlu0 %1241
          %1243 = vrot.lane.b32.xlu0 %v585, 32
          %v1244 = vpop.permute.xlu0 %1243
          %1245 = vrot.lane.b32.xlu0 %v588, 32
          %v1246 = vpop.permute.xlu0 %1245
          %1247 = vrot.lane.b32.xlu0 %v590, 32
          %v1248 = vpop.permute.xlu0 %1247
          %1249 = vrot.lane.b32.xlu0 %v889, 32
          %v1250 = vpop.permute.xlu0 %1249
          %1251 = vrot.lane.b32.xlu0 %v891, 32
          %v1252 = vpop.permute.xlu0 %1251
          %1253 = vrot.lane.b32.xlu0 %v1190, 32
          %v1254 = vpop.permute.xlu0 %1253
          %1255 = vrot.lane.b32.xlu0 %v1192, 32
          %v1256 = vpop.permute.xlu0 %1255
          %vm1289 = vcmask 31744
          %v1290 = vsel %vm1289, %v231, %v415
          %v1291 = vsel %vm1289, %v232, %v417
          %v1292 = vsel %vm1289, %v234, %v419
          %v1293 = vsel %vm1289, %v235, %v421
          %v1294 = vsel %vm1289, %v237, %v423
          %v1295 = vsel %vm1289, %v238, %v425
          %v1296 = vsel %vm1289, %v240, %v427
          %v1297 = vsel %vm1289, %v241, %v429
          %v1298 = vsel %vm1289, %v243, %v431
          %v1299 = vsel %vm1289, %v244, %v433
          %v1300 = vsel %vm1289, %v246, %v435
          %v1301 = vsel %vm1289, %v247, %v437
          %v1302 = vsel %vm1289, %v249, %v439
          %v1303 = vsel %vm1289, %v250, %v441
          %v1304 = vsel %vm1289, %v252, %v443
          %v1305 = vsel %vm1289, %v253, %v445
          %v1306 = vsel %vm1289, %v255, %v447
          %v1307 = vsel %vm1289, %v256, %v449
          %v1308 = vsel %vm1289, %v258, %v451
          %v1309 = vsel %vm1289, %v259, %v453
          %v1310 = vsel %vm1289, %v261, %v455
          %v1311 = vsel %vm1289, %v262, %v457
          %v1312 = vsel %vm1289, %v264, %v459
          %v1313 = vsel %vm1289, %v265, %v461
          %v1314 = vsel %vm1289, %v267, %v463
          %v1315 = vsel %vm1289, %v268, %v465
          %v1316 = vsel %vm1289, %v270, %v467
          %v1317 = vsel %vm1289, %v271, %v469
          %v1318 = vsel %vm1289, %v273, %v471
          %v1319 = vsel %vm1289, %v274, %v473
          %v1320 = vsel %vm1289, %v276, %v475
          %v1321 = vsel %vm1289, %v277, %v477
          %vm1322 = vcmask 64512
          %v1323 = vsel %vm1322, %v1290, %v592
          %v1324 = vsel %vm1322, %v1291, %v594
          %v1325 = vsel %vm1322, %v1292, %v596
          %v1326 = vsel %vm1322, %v1293, %v598
          %v1327 = vsel %vm1322, %v1294, %v600
          %v1328 = vsel %vm1322, %v1295, %v602
          %v1329 = vsel %vm1322, %v1296, %v604
          %v1330 = vsel %vm1322, %v1297, %v606
          %v1331 = vsel %vm1322, %v1298, %v608
          %v1332 = vsel %vm1322, %v1299, %v610
          %v1333 = vsel %vm1322, %v1300, %v612
          %v1334 = vsel %vm1322, %v1301, %v614
          %v1335 = vsel %vm1322, %v1302, %v616
          %v1336 = vsel %vm1322, %v1303, %v618
          %v1337 = vsel %vm1322, %v1304, %v620
          %v1338 = vsel %vm1322, %v1305, %v622
          %v1339 = vsel %vm1322, %v1306, %v624
          %v1340 = vsel %vm1322, %v1307, %v626
          %v1341 = vsel %vm1322, %v1308, %v628
          %v1342 = vsel %vm1322, %v1309, %v630
          %v1343 = vsel %vm1322, %v1310, %v632
          %v1344 = vsel %vm1322, %v1311, %v634
          %v1345 = vsel %vm1322, %v1312, %v636
          %v1346 = vsel %vm1322, %v1313, %v638
          %v1347 = vsel %vm1322, %v1314, %v640
          %v1348 = vsel %vm1322, %v1315, %v642
          %v1349 = vsel %vm1322, %v1316, %v644
          %v1350 = vsel %vm1322, %v1317, %v646
          %v1351 = vsel %vm1322, %v1318, %v648
          %v1352 = vsel %vm1322, %v1319, %v650
          %v1353 = vsel %vm1322, %v1320, %v652
          %v1354 = vsel %vm1322, %v1321, %v654
          %vm1355 = vcmask 97280
          %v1356 = vsel %vm1355, %v1323, %v690
          %v1357 = vsel %vm1355, %v1324, %v692
          %v1358 = vsel %vm1355, %v1325, %v694
          %v1359 = vsel %vm1355, %v1326, %v696
          %v1360 = vsel %vm1355, %v1327, %v698
          %v1361 = vsel %vm1355, %v1328, %v700
          %v1362 = vsel %vm1355, %v1329, %v702
          %v1363 = vsel %vm1355, %v1330, %v704
          %v1364 = vsel %vm1355, %v1331, %v706
          %v1365 = vsel %vm1355, %v1332, %v708
          %v1366 = vsel %vm1355, %v1333, %v710
          %v1367 = vsel %vm1355, %v1334, %v712
          %v1368 = vsel %vm1355, %v1335, %v714
          %v1369 = vsel %vm1355, %v1336, %v716
          %v1370 = vsel %vm1355, %v1337, %v718
          %v1371 = vsel %vm1355, %v1338, %v720
          %v1372 = vsel %vm1355, %v1339, %v722
          %v1373 = vsel %vm1355, %v1340, %v724
          %v1374 = vsel %vm1355, %v1341, %v726
          %v1375 = vsel %vm1355, %v1342, %v728
          %v1376 = vsel %vm1355, %v1343, %v730
          %v1377 = vsel %vm1355, %v1344, %v732
          %v1378 = vsel %vm1355, %v1345, %v734
          %v1379 = vsel %vm1355, %v1346, %v736
          %v1380 = vsel %vm1355, %v1347, %v738
          %v1381 = vsel %vm1355, %v1348, %v740
          %v1382 = vsel %vm1355, %v1349, %v742
          %v1383 = vsel %vm1355, %v1350, %v744
          %v1384 = vsel %vm1355, %v1351, %v746
          %v1385 = vsel %vm1355, %v1352, %v748
          %v1386 = vsel %vm1355, %v1353, %v750
          %v1387 = vsel %vm1355, %v1354, %v752
          %vm1388 = vcmask 130048
          %v1389 = vsel %vm1388, %v1356, %v792
          %v1390 = vsel %vm1388, %v1357, %v794
          %v1391 = vsel %vm1388, %v1358, %v796
          %v1392 = vsel %vm1388, %v1359, %v798
          %v1393 = vsel %vm1388, %v1360, %v800
          %v1394 = vsel %vm1388, %v1361, %v802
          %v1395 = vsel %vm1388, %v1362, %v804
          %v1396 = vsel %vm1388, %v1363, %v806
          %v1397 = vsel %vm1388, %v1364, %v808
          %v1398 = vsel %vm1388, %v1365, %v810
          %v1399 = vsel %vm1388, %v1366, %v812
          %v1400 = vsel %vm1388, %v1367, %v814
          %v1401 = vsel %vm1388, %v1368, %v816
          %v1402 = vsel %vm1388, %v1369, %v818
          %v1403 = vsel %vm1388, %v1370, %v820
          %v1404 = vsel %vm1388, %v1371, %v822
          %v1405 = vsel %vm1388, %v1372, %v824
          %v1406 = vsel %vm1388, %v1373, %v826
          %v1407 = vsel %vm1388, %v1374, %v828
          %v1408 = vsel %vm1388, %v1375, %v830
          %v1409 = vsel %vm1388, %v1376, %v832
          %v1410 = vsel %vm1388, %v1377, %v834
          %v1411 = vsel %vm1388, %v1378, %v836
          %v1412 = vsel %vm1388, %v1379, %v838
          %v1413 = vsel %vm1388, %v1380, %v840
          %v1414 = vsel %vm1388, %v1381, %v842
          %v1415 = vsel %vm1388, %v1382, %v844
          %v1416 = vsel %vm1388, %v1383, %v846
          %v1417 = vsel %vm1388, %v1384, %v848
          %v1418 = vsel %vm1388, %v1385, %v850
          %v1419 = vsel %vm1388, %v1386, %v852
          %v1420 = vsel %vm1388, %v1387, %v854
          %vm1421 = vcmask 162816
          %v1422 = vsel %vm1421, %v1389, %v893
          %v1423 = vsel %vm1421, %v1390, %v895
          %v1424 = vsel %vm1421, %v1391, %v897
          %v1425 = vsel %vm1421, %v1392, %v899
          %v1426 = vsel %vm1421, %v1393, %v901
          %v1427 = vsel %vm1421, %v1394, %v903
          %v1428 = vsel %vm1421, %v1395, %v905
          %v1429 = vsel %vm1421, %v1396, %v907
          %v1430 = vsel %vm1421, %v1397, %v909
          %v1431 = vsel %vm1421, %v1398, %v911
          %v1432 = vsel %vm1421, %v1399, %v913
          %v1433 = vsel %vm1421, %v1400, %v915
          %v1434 = vsel %vm1421, %v1401, %v917
          %v1435 = vsel %vm1421, %v1402, %v919
          %v1436 = vsel %vm1421, %v1403, %v921
          %v1437 = vsel %vm1421, %v1404, %v923
          %v1438 = vsel %vm1421, %v1405, %v925
          %v1439 = vsel %vm1421, %v1406, %v927
          %v1440 = vsel %vm1421, %v1407, %v929
          %v1441 = vsel %vm1421, %v1408, %v931
          %v1442 = vsel %vm1421, %v1409, %v933
          %v1443 = vsel %vm1421, %v1410, %v935
          %v1444 = vsel %vm1421, %v1411, %v937
          %v1445 = vsel %vm1421, %v1412, %v939
          %v1446 = vsel %vm1421, %v1413, %v941
          %v1447 = vsel %vm1421, %v1414, %v943
          %v1448 = vsel %vm1421, %v1415, %v945
          %v1449 = vsel %vm1421, %v1416, %v947
          %v1450 = vsel %vm1421, %v1417, %v949
          %v1451 = vsel %vm1421, %v1418, %v951
          %v1452 = vsel %vm1421, %v1419, %v953
          %v1453 = vsel %vm1421, %v1420, %v955
          %vm1454 = vcmask 195584
          %v1455 = vsel %vm1454, %v1422, %v991
          %v1456 = vsel %vm1454, %v1423, %v993
          %v1457 = vsel %vm1454, %v1424, %v995
          %v1458 = vsel %vm1454, %v1425, %v997
          %v1459 = vsel %vm1454, %v1426, %v999
          %v1460 = vsel %vm1454, %v1427, %v1001
          %v1461 = vsel %vm1454, %v1428, %v1003
          %v1462 = vsel %vm1454, %v1429, %v1005
          %v1463 = vsel %vm1454, %v1430, %v1007
          %v1464 = vsel %vm1454, %v1431, %v1009
          %v1465 = vsel %vm1454, %v1432, %v1011
          %v1466 = vsel %vm1454, %v1433, %v1013
          %v1467 = vsel %vm1454, %v1434, %v1015
          %v1468 = vsel %vm1454, %v1435, %v1017
          %v1469 = vsel %vm1454, %v1436, %v1019
          %v1470 = vsel %vm1454, %v1437, %v1021
          %v1471 = vsel %vm1454, %v1438, %v1023
          %v1472 = vsel %vm1454, %v1439, %v1025
          %v1473 = vsel %vm1454, %v1440, %v1027
          %v1474 = vsel %vm1454, %v1441, %v1029
          %v1475 = vsel %vm1454, %v1442, %v1031
          %v1476 = vsel %vm1454, %v1443, %v1033
          %v1477 = vsel %vm1454, %v1444, %v1035
          %v1478 = vsel %vm1454, %v1445, %v1037
          %v1479 = vsel %vm1454, %v1446, %v1039
          %v1480 = vsel %vm1454, %v1447, %v1041
          %v1481 = vsel %vm1454, %v1448, %v1043
          %v1482 = vsel %vm1454, %v1449, %v1045
          %v1483 = vsel %vm1454, %v1450, %v1047
          %v1484 = vsel %vm1454, %v1451, %v1049
          %v1485 = vsel %vm1454, %v1452, %v1051
          %v1486 = vsel %vm1454, %v1453, %v1053
          %vm1487 = vcmask 228352
          %v1488 = vsel %vm1487, %v1455, %v1093
          %v1489 = vsel %vm1487, %v1456, %v1095
          %v1490 = vsel %vm1487, %v1457, %v1097
          %v1491 = vsel %vm1487, %v1458, %v1099
          %v1492 = vsel %vm1487, %v1459, %v1101
          %v1493 = vsel %vm1487, %v1460, %v1103
          %v1494 = vsel %vm1487, %v1461, %v1105
          %v1495 = vsel %vm1487, %v1462, %v1107
          %v1496 = vsel %vm1487, %v1463, %v1109
          %v1497 = vsel %vm1487, %v1464, %v1111
          %v1498 = vsel %vm1487, %v1465, %v1113
          %v1499 = vsel %vm1487, %v1466, %v1115
          %v1500 = vsel %vm1487, %v1467, %v1117
          %v1501 = vsel %vm1487, %v1468, %v1119
          %v1502 = vsel %vm1487, %v1469, %v1121
          %v1503 = vsel %vm1487, %v1470, %v1123
          %v1504 = vsel %vm1487, %v1471, %v1125
          %v1505 = vsel %vm1487, %v1472, %v1127
          %v1506 = vsel %vm1487, %v1473, %v1129
          %v1507 = vsel %vm1487, %v1474, %v1131
          %v1508 = vsel %vm1487, %v1475, %v1133
          %v1509 = vsel %vm1487, %v1476, %v1135
          %v1510 = vsel %vm1487, %v1477, %v1137
          %v1511 = vsel %vm1487, %v1478, %v1139
          %v1512 = vsel %vm1487, %v1479, %v1141
          %v1513 = vsel %vm1487, %v1480, %v1143
          %v1514 = vsel %vm1487, %v1481, %v1145
          %v1515 = vsel %vm1487, %v1482, %v1147
          %v1516 = vsel %vm1487, %v1483, %v1149
          %v1517 = vsel %vm1487, %v1484, %v1151
          %v1518 = vsel %vm1487, %v1485, %v1153
          %v1519 = vsel %vm1487, %v1486, %v1155
          %vm1520 = vcmask 261120
          %v1521 = vsel %vm1520, %v1488, %v1194
          %v1522 = vsel %vm1520, %v1489, %v1196
          %v1523 = vsel %vm1520, %v1490, %v1198
          %v1524 = vsel %vm1520, %v1491, %v1200
          %v1525 = vsel %vm1520, %v1492, %v1202
          %v1526 = vsel %vm1520, %v1493, %v1204
          %v1527 = vsel %vm1520, %v1494, %v1206
          %v1528 = vsel %vm1520, %v1495, %v1208
          %v1529 = vsel %vm1520, %v1496, %v1210
          %v1530 = vsel %vm1520, %v1497, %v1212
          %v1531 = vsel %vm1520, %v1498, %v1214
          %v1532 = vsel %vm1520, %v1499, %v1216
          %v1533 = vsel %vm1520, %v1500, %v1218
          %v1534 = vsel %vm1520, %v1501, %v1220
          %v1535 = vsel %vm1520, %v1502, %v1222
          %v1536 = vsel %vm1520, %v1503, %v1224
          %v1537 = vsel %vm1520, %v1504, %v1226
          %v1538 = vsel %vm1520, %v1505, %v1228
          %v1539 = vsel %vm1520, %v1506, %v1230
          %v1540 = vsel %vm1520, %v1507, %v1232
          %v1541 = vsel %vm1520, %v1508, %v1234
          %v1542 = vsel %vm1520, %v1509, %v1236
          %v1543 = vsel %vm1520, %v1510, %v1238
          %v1544 = vsel %vm1520, %v1511, %v1240
          %v1545 = vsel %vm1520, %v1512, %v1242
          %v1546 = vsel %vm1520, %v1513, %v1244
          %v1547 = vsel %vm1520, %v1514, %v1246
          %v1548 = vsel %vm1520, %v1515, %v1248
          %v1549 = vsel %vm1520, %v1516, %v1250
          %v1550 = vsel %vm1520, %v1517, %v1252
          %v1551 = vsel %vm1520, %v1518, %v1254
          %v1552 = vsel %vm1520, %v1519, %v1256
          %vm1553 = vcmask 293888
          %1554 = vst.msk [vmem:[#allocation2] sm:$0xff] %vm1553, %v1521
          %1555 = vst.msk [vmem:[#allocation2 + $0x8] sm:$0xff] %vm1553, %v1522
          %1556 = vst.msk [vmem:[#allocation2 + $0x10] sm:$0xff] %vm1553, %v1523
          %1557 = vst.msk [vmem:[#allocation2 + $0x18] sm:$0xff] %vm1553, %v1524
          %1558 = vst.msk [vmem:[#allocation2 + $0x20] sm:$0xff] %vm1553, %v1525
          %1559 = vst.msk [vmem:[#allocation2 + $0x28] sm:$0xff] %vm1553, %v1526
          %1560 = vst.msk [vmem:[#allocation2 + $0x30] sm:$0xff] %vm1553, %v1527
          %1561 = vst.msk [vmem:[#allocation2 + $0x38] sm:$0xff] %vm1553, %v1528
          %1562 = vst.msk [vmem:[#allocation2 + $0x40] sm:$0xff] %vm1553, %v1529
          %1563 = vst.msk [vmem:[#allocation2 + $0x48] sm:$0xff] %vm1553, %v1530
          %1564 = vst.msk [vmem:[#allocation2 + $0x50] sm:$0xff] %vm1553, %v1531
          %1565 = vst.msk [vmem:[#allocation2 + $0x58] sm:$0xff] %vm1553, %v1532
          %1566 = vst.msk [vmem:[#allocation2 + $0x60] sm:$0xff] %vm1553, %v1533
          %1567 = vst.msk [vmem:[#allocation2 + $0x68] sm:$0xff] %vm1553, %v1534
          %1568 = vst.msk [vmem:[#allocation2 + $0x70] sm:$0xff] %vm1553, %v1535
          %1569 = vst.msk [vmem:[#allocation2 + $0x78] sm:$0xff] %vm1553, %v1536
          %1570 = vst.msk [vmem:[#allocation2 + $0x80] sm:$0xff] %vm1553, %v1537
          %1571 = vst.msk [vmem:[#allocation2 + $0x88] sm:$0xff] %vm1553, %v1538
          %1572 = vst.msk [vmem:[#allocation2 + $0x90] sm:$0xff] %vm1553, %v1539
          %1573 = vst.msk [vmem:[#allocation2 + $0x98] sm:$0xff] %vm1553, %v1540
          %1574 = vst.msk [vmem:[#allocation2 + $0xa0] sm:$0xff] %vm1553, %v1541
          %1575 = vst.msk [vmem:[#allocation2 + $0xa8] sm:$0xff] %vm1553, %v1542
          %1576 = vst.msk [vmem:[#allocation2 + $0xb0] sm:$0xff] %vm1553, %v1543
          %1577 = vst.msk [vmem:[#allocation2 + $0xb8] sm:$0xff] %vm1553, %v1544
          %1578 = vst.msk [vmem:[#allocation2 + $0xc0] sm:$0xff] %vm1553, %v1545
          %1579 = vst.msk [vmem:[#allocation2 + $0xc8] sm:$0xff] %vm1553, %v1546
          %1580 = vst.msk [vmem:[#allocation2 + $0xd0] sm:$0xff] %vm1553, %v1547
          %1581 = vst.msk [vmem:[#allocation2 + $0xd8] sm:$0xff] %vm1553, %v1548
          %1582 = vst.msk [vmem:[#allocation2 + $0xe0] sm:$0xff] %vm1553, %v1549
          %1583 = vst.msk [vmem:[#allocation2 + $0xe8] sm:$0xff] %vm1553, %v1550
          %1584 = vst.msk [vmem:[#allocation2 + $0xf0] sm:$0xff] %vm1553, %v1551
          %1585 = vst.msk [vmem:[#allocation2 + $0xf8] sm:$0xff] %vm1553, %v1552
        $region36: #{tpu_custom_call.1} parent=31 // pred_fallthru
          _
        %v1586 = vld [vmem:[#allocation2] sm:$0xff]
        %v1587 = vld [vmem:[#allocation2 + $0x8] sm:$0xff]
        %v1588 = vld [vmem:[#allocation2 + $0x10] sm:$0xff]
        %v1589 = vld [vmem:[#allocation2 + $0x18] sm:$0xff]
        %v1590 = vld [vmem:[#allocation2 + $0x20] sm:$0xff]
        %v1591 = vld [vmem:[#allocation2 + $0x28] sm:$0xff]
        %v1592 = vld [vmem:[#allocation2 + $0x30] sm:$0xff]
        %v1593 = vld [vmem:[#allocation2 + $0x38] sm:$0xff]
        %v1594 = vld [vmem:[#allocation2 + $0x40] sm:$0xff]
        %v1595 = vld [vmem:[#allocation2 + $0x48] sm:$0xff]
        %v1596 = vld [vmem:[#allocation2 + $0x50] sm:$0xff]
        %v1597 = vld [vmem:[#allocation2 + $0x58] sm:$0xff]
        %v1598 = vld [vmem:[#allocation2 + $0x60] sm:$0xff]
        %v1599 = vld [vmem:[#allocation2 + $0x68] sm:$0xff]
        %v1600 = vld [vmem:[#allocation2 + $0x70] sm:$0xff]
        %v1601 = vld [vmem:[#allocation2 + $0x78] sm:$0xff]
        %v1602 = vld [vmem:[#allocation2 + $0x80] sm:$0xff]
        %v1603 = vld [vmem:[#allocation2 + $0x88] sm:$0xff]
        %v1604 = vld [vmem:[#allocation2 + $0x90] sm:$0xff]
        %v1605 = vld [vmem:[#allocation2 + $0x98] sm:$0xff]
        %v1606 = vld [vmem:[#allocation2 + $0xa0] sm:$0xff]
        %v1607 = vld [vmem:[#allocation2 + $0xa8] sm:$0xff]
        %v1608 = vld [vmem:[#allocation2 + $0xb0] sm:$0xff]
        %v1609 = vld [vmem:[#allocation2 + $0xb8] sm:$0xff]
        %v1610 = vld [vmem:[#allocation2 + $0xc0] sm:$0xff]
        %v1611 = vld [vmem:[#allocation2 + $0xc8] sm:$0xff]
        %v1612 = vld [vmem:[#allocation2 + $0xd0] sm:$0xff]
        %v1613 = vld [vmem:[#allocation2 + $0xd8] sm:$0xff]
        %v1614 = vld [vmem:[#allocation2 + $0xe0] sm:$0xff]
        %v1615 = vld [vmem:[#allocation2 + $0xe8] sm:$0xff]
        %v1616 = vld [vmem:[#allocation2 + $0xf0] sm:$0xff]
        %v1617 = vld [vmem:[#allocation2 + $0xf8] sm:$0xff]
        %v1618 = vld [vmem:[%s219] sm:$0xff]
        %v1619 = vld [vmem:[%s219 + $0x8] sm:$0xff]
        %v1620 = vld [vmem:[%s219 + $0x10] sm:$0xff]
        %v1621 = vld [vmem:[%s219 + $0x18] sm:$0xff]
        %v1622 = vld [vmem:[%s219 + $0x20] sm:$0xf]
        %v1623 = vld [vmem:[%s222] sm:$0x1]
        %v1625 = vperm.slane %v1623, 0
        %vm1627 = vcmask 293888
        %v1629 = vsel %vm1627, %v1586, 0
        %v1632 = vsel %vm1627, %v1587, 0
        %v1635 = vsel %vm1627, %v1588, 0
        %v1638 = vsel %vm1627, %v1589, 0
        %v1641 = vsel %vm1627, %v1590, 0
        %v1644 = vsel %vm1627, %v1591, 0
        %v1647 = vsel %vm1627, %v1592, 0
        %v1650 = vsel %vm1627, %v1593, 0
        %v1653 = vsel %vm1627, %v1594, 0
        %v1656 = vsel %vm1627, %v1595, 0
        %v1659 = vsel %vm1627, %v1596, 0
        %v1662 = vsel %vm1627, %v1597, 0
        %v1665 = vsel %vm1627, %v1598, 0
        %v1668 = vsel %vm1627, %v1599, 0
        %v1671 = vsel %vm1627, %v1600, 0
        %v1674 = vsel %vm1627, %v1601, 0
        %v1677 = vsel %vm1627, %v1602, 0
        %v1680 = vsel %vm1627, %v1603, 0
        %v1683 = vsel %vm1627, %v1604, 0
        %v1686 = vsel %vm1627, %v1605, 0
        %v1689 = vsel %vm1627, %v1606, 0
        %v1692 = vsel %vm1627, %v1607, 0
        %v1695 = vsel %vm1627, %v1608, 0
        %v1698 = vsel %vm1627, %v1609, 0
        %v1701 = vsel %vm1627, %v1610, 0
        %v1704 = vsel %vm1627, %v1611, 0
        %v1707 = vsel %vm1627, %v1612, 0
        %v1710 = vsel %vm1627, %v1613, 0
        %v1713 = vsel %vm1627, %v1614, 0
        %v1716 = vsel %vm1627, %v1615, 0
        %v1719 = vsel %vm1627, %v1616, 0
        %v1722 = vsel %vm1627, %v1617, 0
        %vm1724 = vcmask 1043456
        %v1726 = vsel %vm1724, %v1622, 0
        %1728 = vmatpush.msra.mxu0 0.0
        %1729 = vmatpush.msra.mxu0 0.0
        %1730 = vmatpush.msra.mxu0 0.0
        %1731 = vmatpush.msra.mxu0 0.0
        %1732 = vmatpush.msra.mxu0 0.0
        %1733 = vmatpush.msra.mxu0 0.0
        %1734 = vmatpush.msra.mxu0 0.0
        %1735 = vmatpush.msra.mxu0 0.0
        %1736 = vmatpush.msra.mxu0 0.0
        %1737 = vmatpush.msra.mxu0 0.0
        %1738 = vmatpush.msra.mxu0 0.0
        %1739 = vmatpush.msra.mxu0 %v1726
        %1740 = vmatpush.msra.mxu0 %v1621
        %1741 = vmatpush.msra.mxu0 %v1620
        %1742 = vmatpush.msra.mxu0 %v1619
        %1743 = vmatpush.msra.mxu0 %v1618
        %1744 = vmatmul.f32.gmra.mxu0 %v1629
        %v1745 = vpop.f32.mrf.mxu0
        %v1746 = vadd.f32 %v1625, %v1745
        %1747 = vmatmul.f32.gmra.mxu0 %v1632
        %v1748 = vpop.f32.mrf.mxu0
        %v1749 = vadd.f32 %v1625, %v1748
        %1750 = vmatmul.f32.gmra.mxu0 %v1635
        %v1751 = vpop.f32.mrf.mxu0
        %v1752 = vadd.f32 %v1625, %v1751
        %1753 = vmatmul.f32.gmra.mxu0 %v1638
        %v1754 = vpop.f32.mrf.mxu0
        %v1755 = vadd.f32 %v1625, %v1754
        %1756 = vmatmul.f32.gmra.mxu0 %v1641
        %v1757 = vpop.f32.mrf.mxu0
        %v1758 = vadd.f32 %v1625, %v1757
        %1759 = vmatmul.f32.gmra.mxu0 %v1644
        %v1760 = vpop.f32.mrf.mxu0
        %v1761 = vadd.f32 %v1625, %v1760
        %1762 = vmatmul.f32.gmra.mxu0 %v1647
        %v1763 = vpop.f32.mrf.mxu0
        %v1764 = vadd.f32 %v1625, %v1763
        %1765 = vmatmul.f32.gmra.mxu0 %v1650
        %v1766 = vpop.f32.mrf.mxu0
        %v1767 = vadd.f32 %v1625, %v1766
        %1768 = vmatmul.f32.gmra.mxu0 %v1653
        %v1769 = vpop.f32.mrf.mxu0
        %v1770 = vadd.f32 %v1625, %v1769
        %1771 = vmatmul.f32.gmra.mxu0 %v1656
        %v1772 = vpop.f32.mrf.mxu0
        %v1773 = vadd.f32 %v1625, %v1772
        %1774 = vmatmul.f32.gmra.mxu0 %v1659
        %v1775 = vpop.f32.mrf.mxu0
        %v1776 = vadd.f32 %v1625, %v1775
        %1777 = vmatmul.f32.gmra.mxu0 %v1662
        %v1778 = vpop.f32.mrf.mxu0
        %v1779 = vadd.f32 %v1625, %v1778
        %1780 = vmatmul.f32.gmra.mxu0 %v1665
        %v1781 = vpop.f32.mrf.mxu0
        %v1782 = vadd.f32 %v1625, %v1781
        %1783 = vmatmul.f32.gmra.mxu0 %v1668
        %v1784 = vpop.f32.mrf.mxu0
        %v1785 = vadd.f32 %v1625, %v1784
        %1786 = vmatmul.f32.gmra.mxu0 %v1671
        %v1787 = vpop.f32.mrf.mxu0
        %v1788 = vadd.f32 %v1625, %v1787
        %1789 = vmatmul.f32.gmra.mxu0 %v1674
        %v1790 = vpop.f32.mrf.mxu0
        %v1791 = vadd.f32 %v1625, %v1790
        %1792 = vmatmul.f32.gmra.mxu0 %v1677
        %v1793 = vpop.f32.mrf.mxu0
        %v1794 = vadd.f32 %v1625, %v1793
        %1795 = vmatmul.f32.gmra.mxu0 %v1680
        %v1796 = vpop.f32.mrf.mxu0
        %v1797 = vadd.f32 %v1625, %v1796
        %1798 = vmatmul.f32.gmra.mxu0 %v1683
        %v1799 = vpop.f32.mrf.mxu0
        %v1800 = vadd.f32 %v1625, %v1799
        %1801 = vmatmul.f32.gmra.mxu0 %v1686
        %v1802 = vpop.f32.mrf.mxu0
        %v1803 = vadd.f32 %v1625, %v1802
        %1804 = vmatmul.f32.gmra.mxu0 %v1689
        %v1805 = vpop.f32.mrf.mxu0
        %v1806 = vadd.f32 %v1625, %v1805
        %1807 = vmatmul.f32.gmra.mxu0 %v1692
        %v1808 = vpop.f32.mrf.mxu0
        %v1809 = vadd.f32 %v1625, %v1808
        %1810 = vmatmul.f32.gmra.mxu0 %v1695
        %v1811 = vpop.f32.mrf.mxu0
        %v1812 = vadd.f32 %v1625, %v1811
        %1813 = vmatmul.f32.gmra.mxu0 %v1698
        %v1814 = vpop.f32.mrf.mxu0
        %v1815 = vadd.f32 %v1625, %v1814
        %1816 = vmatmul.f32.gmra.mxu0 %v1701
        %v1817 = vpop.f32.mrf.mxu0
        %v1818 = vadd.f32 %v1625, %v1817
        %1819 = vmatmul.f32.gmra.mxu0 %v1704
        %v1820 = vpop.f32.mrf.mxu0
        %v1821 = vadd.f32 %v1625, %v1820
        %1822 = vmatmul.f32.gmra.mxu0 %v1707
        %v1823 = vpop.f32.mrf.mxu0
        %v1824 = vadd.f32 %v1625, %v1823
        %1825 = vmatmul.f32.gmra.mxu0 %v1710
        %v1826 = vpop.f32.mrf.mxu0
        %v1827 = vadd.f32 %v1625, %v1826
        %1828 = vmatmul.f32.gmra.mxu0 %v1713
        %v1829 = vpop.f32.mrf.mxu0
        %v1830 = vadd.f32 %v1625, %v1829
        %1831 = vmatmul.f32.gmra.mxu0 %v1716
        %v1832 = vpop.f32.mrf.mxu0
        %v1833 = vadd.f32 %v1625, %v1832
        %1834 = vmatmul.f32.gmra.mxu0 %v1719
        %v1835 = vpop.f32.mrf.mxu0
        %v1836 = vadd.f32 %v1625, %v1835
        %1837 = vmatmul.f32.gmra.mxu0 %v1722
        %v1838 = vpop.f32.mrf.mxu0
        %v1839 = vadd.f32 %v1625, %v1838
        %1840 = vdwg.mxu0
        %v1841 = vxor.u32 %v1746, 2147483648
        %v1842 = vxor.u32 %v1749, 2147483648
        %v1843 = vxor.u32 %v1752, 2147483648
        %v1844 = vxor.u32 %v1755, 2147483648
        %v1845 = vxor.u32 %v1758, 2147483648
        %v1846 = vxor.u32 %v1761, 2147483648
        %v1847 = vxor.u32 %v1764, 2147483648
        %v1848 = vxor.u32 %v1767, 2147483648
        %v1849 = vxor.u32 %v1770, 2147483648
        %v1850 = vxor.u32 %v1773, 2147483648
        %v1851 = vxor.u32 %v1776, 2147483648
        %v1852 = vxor.u32 %v1779, 2147483648
        %v1853 = vxor.u32 %v1782, 2147483648
        %v1854 = vxor.u32 %v1785, 2147483648
        %v1855 = vxor.u32 %v1788, 2147483648
        %v1856 = vxor.u32 %v1791, 2147483648
        %v1857 = vxor.u32 %v1794, 2147483648
        %v1858 = vxor.u32 %v1797, 2147483648
        %v1859 = vxor.u32 %v1800, 2147483648
        %v1860 = vxor.u32 %v1803, 2147483648
        %v1861 = vxor.u32 %v1806, 2147483648
        %v1862 = vxor.u32 %v1809, 2147483648
        %v1863 = vxor.u32 %v1812, 2147483648
        %v1864 = vxor.u32 %v1815, 2147483648
        %v1865 = vxor.u32 %v1818, 2147483648
        %v1866 = vxor.u32 %v1821, 2147483648
        %v1867 = vxor.u32 %v1824, 2147483648
        %v1868 = vxor.u32 %v1827, 2147483648
        %v1869 = vxor.u32 %v1830, 2147483648
        %v1870 = vxor.u32 %v1833, 2147483648
        %v1871 = vxor.u32 %v1836, 2147483648
        %v1872 = vxor.u32 %v1839, 2147483648
        %v1873 = vmul.f32 %v1841, 1.442695
        %v1874 = vpow.pop %v1873
        %v1875 = vmul.f32 %v1842, 1.442695
        %v1876 = vpow.pop %v1875
        %v1877 = vmul.f32 %v1843, 1.442695
        %v1878 = vpow.pop %v1877
        %v1879 = vmul.f32 %v1844, 1.442695
        %v1880 = vpow.pop %v1879
        %v1881 = vmul.f32 %v1845, 1.442695
        %v1882 = vpow.pop %v1881
        %v1883 = vmul.f32 %v1846, 1.442695
        %v1884 = vpow.pop %v1883
        %v1885 = vmul.f32 %v1847, 1.442695
        %v1886 = vpow.pop %v1885
        %v1887 = vmul.f32 %v1848, 1.442695
        %v1888 = vpow.pop %v1887
        %v1889 = vmul.f32 %v1849, 1.442695
        %v1890 = vpow.pop %v1889
        %v1891 = vmul.f32 %v1850, 1.442695
        %v1892 = vpow.pop %v1891
        %v1893 = vmul.f32 %v1851, 1.442695
        %v1894 = vpow.pop %v1893
        %v1895 = vmul.f32 %v1852, 1.442695
        %v1896 = vpow.pop %v1895
        %v1897 = vmul.f32 %v1853, 1.442695
        %v1898 = vpow.pop %v1897
        %v1899 = vmul.f32 %v1854, 1.442695
        %v1900 = vpow.pop %v1899
        %v1901 = vmul.f32 %v1855, 1.442695
        %v1902 = vpow.pop %v1901
        %v1903 = vmul.f32 %v1856, 1.442695
        %v1904 = vpow.pop %v1903
        %v1905 = vmul.f32 %v1857, 1.442695
        %v1906 = vpow.pop %v1905
        %v1907 = vmul.f32 %v1858, 1.442695
        %v1908 = vpow.pop %v1907
        %v1909 = vmul.f32 %v1859, 1.442695
        %v1910 = vpow.pop %v1909
        %v1911 = vmul.f32 %v1860, 1.442695
        %v1912 = vpow.pop %v1911
        %v1913 = vmul.f32 %v1861, 1.442695
        %v1914 = vpow.pop %v1913
        %v1915 = vmul.f32 %v1862, 1.442695
        %v1916 = vpow.pop %v1915
        %v1917 = vmul.f32 %v1863, 1.442695
        %v1918 = vpow.pop %v1917
        %v1919 = vmul.f32 %v1864, 1.442695
        %v1920 = vpow.pop %v1919
        %v1921 = vmul.f32 %v1865, 1.442695
        %v1922 = vpow.pop %v1921
        %v1923 = vmul.f32 %v1866, 1.442695
        %v1924 = vpow.pop %v1923
        %v1925 = vmul.f32 %v1867, 1.442695
        %v1926 = vpow.pop %v1925
        %v1927 = vmul.f32 %v1868, 1.442695
        %v1928 = vpow.pop %v1927
        %v1929 = vmul.f32 %v1869, 1.442695
        %v1930 = vpow.pop %v1929
        %v1931 = vmul.f32 %v1870, 1.442695
        %v1932 = vpow.pop %v1931
        %v1933 = vmul.f32 %v1871, 1.442695
        %v1934 = vpow.pop %v1933
        %v1935 = vmul.f32 %v1872, 1.442695
        %v1936 = vpow.pop %v1935
        %v1937 = vadd.f32 %v1874, 1.0
        %v1938 = vadd.f32 %v1876, 1.0
        %v1939 = vadd.f32 %v1878, 1.0
        %v1940 = vadd.f32 %v1880, 1.0
        %v1941 = vadd.f32 %v1882, 1.0
        %v1942 = vadd.f32 %v1884, 1.0
        %v1943 = vadd.f32 %v1886, 1.0
        %v1944 = vadd.f32 %v1888, 1.0
        %v1945 = vadd.f32 %v1890, 1.0
        %v1946 = vadd.f32 %v1892, 1.0
        %v1947 = vadd.f32 %v1894, 1.0
        %v1948 = vadd.f32 %v1896, 1.0
        %v1949 = vadd.f32 %v1898, 1.0
        %v1950 = vadd.f32 %v1900, 1.0
        %v1951 = vadd.f32 %v1902, 1.0
        %v1952 = vadd.f32 %v1904, 1.0
        %v1953 = vadd.f32 %v1906, 1.0
        %v1954 = vadd.f32 %v1908, 1.0
        %v1955 = vadd.f32 %v1910, 1.0
        %v1956 = vadd.f32 %v1912, 1.0
        %v1957 = vadd.f32 %v1914, 1.0
        %v1958 = vadd.f32 %v1916, 1.0
        %v1959 = vadd.f32 %v1918, 1.0
        %v1960 = vadd.f32 %v1920, 1.0
        %v1961 = vadd.f32 %v1922, 1.0
        %v1962 = vadd.f32 %v1924, 1.0
        %v1963 = vadd.f32 %v1926, 1.0
        %v1964 = vadd.f32 %v1928, 1.0
        %v1965 = vadd.f32 %v1930, 1.0
        %v1966 = vadd.f32 %v1932, 1.0
        %v1967 = vadd.f32 %v1934, 1.0
        %v1968 = vadd.f32 %v1936, 1.0
        %v1969 = vrcp.pop %v1937
        %v1970 = vmul.f32 %v1937, %v1969
        %v1971 = vsub.f32 1.0, %v1970
        %v1972 = vmul.f32 %v1969, %v1971
        %v1973 = vadd.f32 %v1969, %v1972
        %vm1974 = vweird.f32 %v1937
        %vm1975 = vweird.f32 %v1969
        %vm1976 = vmor %vm1974, %vm1975
        %v1977 = vsel %vm1976, %v1969, %v1973
        %v1978 = vand.u32 2147483647, %v1937
        %vm1979 = vcmp.eq.f32.partialorder %v1978, 8.507059e+37
        %v1980 = vand.u32 %v1937, 2147483648
        %v1981 = vor.u32 1.1754944e-38, %v1980
        %v1982 = vsel %vm1979, %v1981, %v1977
        %v1983 = vmul.f32 1.0, %v1982
        %v1984 = vrcp.pop %v1938
        %v1985 = vmul.f32 %v1938, %v1984
        %v1986 = vsub.f32 1.0, %v1985
        %v1987 = vmul.f32 %v1984, %v1986
        %v1988 = vadd.f32 %v1984, %v1987
        %vm1989 = vweird.f32 %v1938
        %vm1990 = vweird.f32 %v1984
        %vm1991 = vmor %vm1989, %vm1990
        %v1992 = vsel %vm1991, %v1984, %v1988
        %v1993 = vand.u32 2147483647, %v1938
        %vm1994 = vcmp.eq.f32.partialorder %v1993, 8.507059e+37
        %v1995 = vand.u32 %v1938, 2147483648
        %v1996 = vor.u32 1.1754944e-38, %v1995
        %v1997 = vsel %vm1994, %v1996, %v1992
        %v1998 = vmul.f32 1.0, %v1997
        %v1999 = vrcp.pop %v1939
        %v2000 = vmul.f32 %v1939, %v1999
        %v2001 = vsub.f32 1.0, %v2000
        %v2002 = vmul.f32 %v1999, %v2001
        %v2003 = vadd.f32 %v1999, %v2002
        %vm2004 = vweird.f32 %v1939
        %vm2005 = vweird.f32 %v1999
        %vm2006 = vmor %vm2004, %vm2005
        %v2007 = vsel %vm2006, %v1999, %v2003
        %v2008 = vand.u32 2147483647, %v1939
        %vm2009 = vcmp.eq.f32.partialorder %v2008, 8.507059e+37
        %v2010 = vand.u32 %v1939, 2147483648
        %v2011 = vor.u32 1.1754944e-38, %v2010
        %v2012 = vsel %vm2009, %v2011, %v2007
        %v2013 = vmul.f32 1.0, %v2012
        %v2014 = vrcp.pop %v1940
        %v2015 = vmul.f32 %v1940, %v2014
        %v2016 = vsub.f32 1.0, %v2015
        %v2017 = vmul.f32 %v2014, %v2016
        %v2018 = vadd.f32 %v2014, %v2017
        %vm2019 = vweird.f32 %v1940
        %vm2020 = vweird.f32 %v2014
        %vm2021 = vmor %vm2019, %vm2020
        %v2022 = vsel %vm2021, %v2014, %v2018
        %v2023 = vand.u32 2147483647, %v1940
        %vm2024 = vcmp.eq.f32.partialorder %v2023, 8.507059e+37
        %v2025 = vand.u32 %v1940, 2147483648
        %v2026 = vor.u32 1.1754944e-38, %v2025
        %v2027 = vsel %vm2024, %v2026, %v2022
        %v2028 = vmul.f32 1.0, %v2027
        %v2029 = vrcp.pop %v1941
        %v2030 = vmul.f32 %v1941, %v2029
        %v2031 = vsub.f32 1.0, %v2030
        %v2032 = vmul.f32 %v2029, %v2031
        %v2033 = vadd.f32 %v2029, %v2032
        %vm2034 = vweird.f32 %v1941
        %vm2035 = vweird.f32 %v2029
        %vm2036 = vmor %vm2034, %vm2035
        %v2037 = vsel %vm2036, %v2029, %v2033
        %v2038 = vand.u32 2147483647, %v1941
        %vm2039 = vcmp.eq.f32.partialorder %v2038, 8.507059e+37
        %v2040 = vand.u32 %v1941, 2147483648
        %v2041 = vor.u32 1.1754944e-38, %v2040
        %v2042 = vsel %vm2039, %v2041, %v2037
        %v2043 = vmul.f32 1.0, %v2042
        %v2044 = vrcp.pop %v1942
        %v2045 = vmul.f32 %v1942, %v2044
        %v2046 = vsub.f32 1.0, %v2045
        %v2047 = vmul.f32 %v2044, %v2046
        %v2048 = vadd.f32 %v2044, %v2047
        %vm2049 = vweird.f32 %v1942
        %vm2050 = vweird.f32 %v2044
        %vm2051 = vmor %vm2049, %vm2050
        %v2052 = vsel %vm2051, %v2044, %v2048
        %v2053 = vand.u32 2147483647, %v1942
        %vm2054 = vcmp.eq.f32.partialorder %v2053, 8.507059e+37
        %v2055 = vand.u32 %v1942, 2147483648
        %v2056 = vor.u32 1.1754944e-38, %v2055
        %v2057 = vsel %vm2054, %v2056, %v2052
        %v2058 = vmul.f32 1.0, %v2057
        %v2059 = vrcp.pop %v1943
        %v2060 = vmul.f32 %v1943, %v2059
        %v2061 = vsub.f32 1.0, %v2060
        %v2062 = vmul.f32 %v2059, %v2061
        %v2063 = vadd.f32 %v2059, %v2062
        %vm2064 = vweird.f32 %v1943
        %vm2065 = vweird.f32 %v2059
        %vm2066 = vmor %vm2064, %vm2065
        %v2067 = vsel %vm2066, %v2059, %v2063
        %v2068 = vand.u32 2147483647, %v1943
        %vm2069 = vcmp.eq.f32.partialorder %v2068, 8.507059e+37
        %v2070 = vand.u32 %v1943, 2147483648
        %v2071 = vor.u32 1.1754944e-38, %v2070
        %v2072 = vsel %vm2069, %v2071, %v2067
        %v2073 = vmul.f32 1.0, %v2072
        %v2074 = vrcp.pop %v1944
        %v2075 = vmul.f32 %v1944, %v2074
        %v2076 = vsub.f32 1.0, %v2075
        %v2077 = vmul.f32 %v2074, %v2076
        %v2078 = vadd.f32 %v2074, %v2077
        %vm2079 = vweird.f32 %v1944
        %vm2080 = vweird.f32 %v2074
        %vm2081 = vmor %vm2079, %vm2080
        %v2082 = vsel %vm2081, %v2074, %v2078
        %v2083 = vand.u32 2147483647, %v1944
        %vm2084 = vcmp.eq.f32.partialorder %v2083, 8.507059e+37
        %v2085 = vand.u32 %v1944, 2147483648
        %v2086 = vor.u32 1.1754944e-38, %v2085
        %v2087 = vsel %vm2084, %v2086, %v2082
        %v2088 = vmul.f32 1.0, %v2087
        %v2089 = vrcp.pop %v1945
        %v2090 = vmul.f32 %v1945, %v2089
        %v2091 = vsub.f32 1.0, %v2090
        %v2092 = vmul.f32 %v2089, %v2091
        %v2093 = vadd.f32 %v2089, %v2092
        %vm2094 = vweird.f32 %v1945
        %vm2095 = vweird.f32 %v2089
        %vm2096 = vmor %vm2094, %vm2095
        %v2097 = vsel %vm2096, %v2089, %v2093
        %v2098 = vand.u32 2147483647, %v1945
        %vm2099 = vcmp.eq.f32.partialorder %v2098, 8.507059e+37
        %v2100 = vand.u32 %v1945, 2147483648
        %v2101 = vor.u32 1.1754944e-38, %v2100
        %v2102 = vsel %vm2099, %v2101, %v2097
        %v2103 = vmul.f32 1.0, %v2102
        %v2104 = vrcp.pop %v1946
        %v2105 = vmul.f32 %v1946, %v2104
        %v2106 = vsub.f32 1.0, %v2105
        %v2107 = vmul.f32 %v2104, %v2106
        %v2108 = vadd.f32 %v2104, %v2107
        %vm2109 = vweird.f32 %v1946
        %vm2110 = vweird.f32 %v2104
        %vm2111 = vmor %vm2109, %vm2110
        %v2112 = vsel %vm2111, %v2104, %v2108
        %v2113 = vand.u32 2147483647, %v1946
        %vm2114 = vcmp.eq.f32.partialorder %v2113, 8.507059e+37
        %v2115 = vand.u32 %v1946, 2147483648
        %v2116 = vor.u32 1.1754944e-38, %v2115
        %v2117 = vsel %vm2114, %v2116, %v2112
        %v2118 = vmul.f32 1.0, %v2117
        %v2119 = vrcp.pop %v1947
        %v2120 = vmul.f32 %v1947, %v2119
        %v2121 = vsub.f32 1.0, %v2120
        %v2122 = vmul.f32 %v2119, %v2121
        %v2123 = vadd.f32 %v2119, %v2122
        %vm2124 = vweird.f32 %v1947
        %vm2125 = vweird.f32 %v2119
        %vm2126 = vmor %vm2124, %vm2125
        %v2127 = vsel %vm2126, %v2119, %v2123
        %v2128 = vand.u32 2147483647, %v1947
        %vm2129 = vcmp.eq.f32.partialorder %v2128, 8.507059e+37
        %v2130 = vand.u32 %v1947, 2147483648
        %v2131 = vor.u32 1.1754944e-38, %v2130
        %v2132 = vsel %vm2129, %v2131, %v2127
        %v2133 = vmul.f32 1.0, %v2132
        %v2134 = vrcp.pop %v1948
        %v2135 = vmul.f32 %v1948, %v2134
        %v2136 = vsub.f32 1.0, %v2135
        %v2137 = vmul.f32 %v2134, %v2136
        %v2138 = vadd.f32 %v2134, %v2137
        %vm2139 = vweird.f32 %v1948
        %vm2140 = vweird.f32 %v2134
        %vm2141 = vmor %vm2139, %vm2140
        %v2142 = vsel %vm2141, %v2134, %v2138
        %v2143 = vand.u32 2147483647, %v1948
        %vm2144 = vcmp.eq.f32.partialorder %v2143, 8.507059e+37
        %v2145 = vand.u32 %v1948, 2147483648
        %v2146 = vor.u32 1.1754944e-38, %v2145
        %v2147 = vsel %vm2144, %v2146, %v2142
        %v2148 = vmul.f32 1.0, %v2147
        %v2149 = vrcp.pop %v1949
        %v2150 = vmul.f32 %v1949, %v2149
        %v2151 = vsub.f32 1.0, %v2150
        %v2152 = vmul.f32 %v2149, %v2151
        %v2153 = vadd.f32 %v2149, %v2152
        %vm2154 = vweird.f32 %v1949
        %vm2155 = vweird.f32 %v2149
        %vm2156 = vmor %vm2154, %vm2155
        %v2157 = vsel %vm2156, %v2149, %v2153
        %v2158 = vand.u32 2147483647, %v1949
        %vm2159 = vcmp.eq.f32.partialorder %v2158, 8.507059e+37
        %v2160 = vand.u32 %v1949, 2147483648
        %v2161 = vor.u32 1.1754944e-38, %v2160
        %v2162 = vsel %vm2159, %v2161, %v2157
        %v2163 = vmul.f32 1.0, %v2162
        %v2164 = vrcp.pop %v1950
        %v2165 = vmul.f32 %v1950, %v2164
        %v2166 = vsub.f32 1.0, %v2165
        %v2167 = vmul.f32 %v2164, %v2166
        %v2168 = vadd.f32 %v2164, %v2167
        %vm2169 = vweird.f32 %v1950
        %vm2170 = vweird.f32 %v2164
        %vm2171 = vmor %vm2169, %vm2170
        %v2172 = vsel %vm2171, %v2164, %v2168
        %v2173 = vand.u32 2147483647, %v1950
        %vm2174 = vcmp.eq.f32.partialorder %v2173, 8.507059e+37
        %v2175 = vand.u32 %v1950, 2147483648
        %v2176 = vor.u32 1.1754944e-38, %v2175
        %v2177 = vsel %vm2174, %v2176, %v2172
        %v2178 = vmul.f32 1.0, %v2177
        %v2179 = vrcp.pop %v1951
        %v2180 = vmul.f32 %v1951, %v2179
        %v2181 = vsub.f32 1.0, %v2180
        %v2182 = vmul.f32 %v2179, %v2181
        %v2183 = vadd.f32 %v2179, %v2182
        %vm2184 = vweird.f32 %v1951
        %vm2185 = vweird.f32 %v2179
        %vm2186 = vmor %vm2184, %vm2185
        %v2187 = vsel %vm2186, %v2179, %v2183
        %v2188 = vand.u32 2147483647, %v1951
        %vm2189 = vcmp.eq.f32.partialorder %v2188, 8.507059e+37
        %v2190 = vand.u32 %v1951, 2147483648
        %v2191 = vor.u32 1.1754944e-38, %v2190
        %v2192 = vsel %vm2189, %v2191, %v2187
        %v2193 = vmul.f32 1.0, %v2192
        %v2194 = vrcp.pop %v1952
        %v2195 = vmul.f32 %v1952, %v2194
        %v2196 = vsub.f32 1.0, %v2195
        %v2197 = vmul.f32 %v2194, %v2196
        %v2198 = vadd.f32 %v2194, %v2197
        %vm2199 = vweird.f32 %v1952
        %vm2200 = vweird.f32 %v2194
        %vm2201 = vmor %vm2199, %vm2200
        %v2202 = vsel %vm2201, %v2194, %v2198
        %v2203 = vand.u32 2147483647, %v1952
        %vm2204 = vcmp.eq.f32.partialorder %v2203, 8.507059e+37
        %v2205 = vand.u32 %v1952, 2147483648
        %v2206 = vor.u32 1.1754944e-38, %v2205
        %v2207 = vsel %vm2204, %v2206, %v2202
        %v2208 = vmul.f32 1.0, %v2207
        %v2209 = vrcp.pop %v1953
        %v2210 = vmul.f32 %v1953, %v2209
        %v2211 = vsub.f32 1.0, %v2210
        %v2212 = vmul.f32 %v2209, %v2211
        %v2213 = vadd.f32 %v2209, %v2212
        %vm2214 = vweird.f32 %v1953
        %vm2215 = vweird.f32 %v2209
        %vm2216 = vmor %vm2214, %vm2215
        %v2217 = vsel %vm2216, %v2209, %v2213
        %v2218 = vand.u32 2147483647, %v1953
        %vm2219 = vcmp.eq.f32.partialorder %v2218, 8.507059e+37
        %v2220 = vand.u32 %v1953, 2147483648
        %v2221 = vor.u32 1.1754944e-38, %v2220
        %v2222 = vsel %vm2219, %v2221, %v2217
        %v2223 = vmul.f32 1.0, %v2222
        %v2224 = vrcp.pop %v1954
        %v2225 = vmul.f32 %v1954, %v2224
        %v2226 = vsub.f32 1.0, %v2225
        %v2227 = vmul.f32 %v2224, %v2226
        %v2228 = vadd.f32 %v2224, %v2227
        %vm2229 = vweird.f32 %v1954
        %vm2230 = vweird.f32 %v2224
        %vm2231 = vmor %vm2229, %vm2230
        %v2232 = vsel %vm2231, %v2224, %v2228
        %v2233 = vand.u32 2147483647, %v1954
        %vm2234 = vcmp.eq.f32.partialorder %v2233, 8.507059e+37
        %v2235 = vand.u32 %v1954, 2147483648
        %v2236 = vor.u32 1.1754944e-38, %v2235
        %v2237 = vsel %vm2234, %v2236, %v2232
        %v2238 = vmul.f32 1.0, %v2237
        %v2239 = vrcp.pop %v1955
        %v2240 = vmul.f32 %v1955, %v2239
        %v2241 = vsub.f32 1.0, %v2240
        %v2242 = vmul.f32 %v2239, %v2241
        %v2243 = vadd.f32 %v2239, %v2242
        %vm2244 = vweird.f32 %v1955
        %vm2245 = vweird.f32 %v2239
        %vm2246 = vmor %vm2244, %vm2245
        %v2247 = vsel %vm2246, %v2239, %v2243
        %v2248 = vand.u32 2147483647, %v1955
        %vm2249 = vcmp.eq.f32.partialorder %v2248, 8.507059e+37
        %v2250 = vand.u32 %v1955, 2147483648
        %v2251 = vor.u32 1.1754944e-38, %v2250
        %v2252 = vsel %vm2249, %v2251, %v2247
        %v2253 = vmul.f32 1.0, %v2252
        %v2254 = vrcp.pop %v1956
        %v2255 = vmul.f32 %v1956, %v2254
        %v2256 = vsub.f32 1.0, %v2255
        %v2257 = vmul.f32 %v2254, %v2256
        %v2258 = vadd.f32 %v2254, %v2257
        %vm2259 = vweird.f32 %v1956
        %vm2260 = vweird.f32 %v2254
        %vm2261 = vmor %vm2259, %vm2260
        %v2262 = vsel %vm2261, %v2254, %v2258
        %v2263 = vand.u32 2147483647, %v1956
        %vm2264 = vcmp.eq.f32.partialorder %v2263, 8.507059e+37
        %v2265 = vand.u32 %v1956, 2147483648
        %v2266 = vor.u32 1.1754944e-38, %v2265
        %v2267 = vsel %vm2264, %v2266, %v2262
        %v2268 = vmul.f32 1.0, %v2267
        %v2269 = vrcp.pop %v1957
        %v2270 = vmul.f32 %v1957, %v2269
        %v2271 = vsub.f32 1.0, %v2270
        %v2272 = vmul.f32 %v2269, %v2271
        %v2273 = vadd.f32 %v2269, %v2272
        %vm2274 = vweird.f32 %v1957
        %vm2275 = vweird.f32 %v2269
        %vm2276 = vmor %vm2274, %vm2275
        %v2277 = vsel %vm2276, %v2269, %v2273
        %v2278 = vand.u32 2147483647, %v1957
        %vm2279 = vcmp.eq.f32.partialorder %v2278, 8.507059e+37
        %v2280 = vand.u32 %v1957, 2147483648
        %v2281 = vor.u32 1.1754944e-38, %v2280
        %v2282 = vsel %vm2279, %v2281, %v2277
        %v2283 = vmul.f32 1.0, %v2282
        %v2284 = vrcp.pop %v1958
        %v2285 = vmul.f32 %v1958, %v2284
        %v2286 = vsub.f32 1.0, %v2285
        %v2287 = vmul.f32 %v2284, %v2286
        %v2288 = vadd.f32 %v2284, %v2287
        %vm2289 = vweird.f32 %v1958
        %vm2290 = vweird.f32 %v2284
        %vm2291 = vmor %vm2289, %vm2290
        %v2292 = vsel %vm2291, %v2284, %v2288
        %v2293 = vand.u32 2147483647, %v1958
        %vm2294 = vcmp.eq.f32.partialorder %v2293, 8.507059e+37
        %v2295 = vand.u32 %v1958, 2147483648
        %v2296 = vor.u32 1.1754944e-38, %v2295
        %v2297 = vsel %vm2294, %v2296, %v2292
        %v2298 = vmul.f32 1.0, %v2297
        %v2299 = vrcp.pop %v1959
        %v2300 = vmul.f32 %v1959, %v2299
        %v2301 = vsub.f32 1.0, %v2300
        %v2302 = vmul.f32 %v2299, %v2301
        %v2303 = vadd.f32 %v2299, %v2302
        %vm2304 = vweird.f32 %v1959
        %vm2305 = vweird.f32 %v2299
        %vm2306 = vmor %vm2304, %vm2305
        %v2307 = vsel %vm2306, %v2299, %v2303
        %v2308 = vand.u32 2147483647, %v1959
        %vm2309 = vcmp.eq.f32.partialorder %v2308, 8.507059e+37
        %v2310 = vand.u32 %v1959, 2147483648
        %v2311 = vor.u32 1.1754944e-38, %v2310
        %v2312 = vsel %vm2309, %v2311, %v2307
        %v2313 = vmul.f32 1.0, %v2312
        %v2314 = vrcp.pop %v1960
        %v2315 = vmul.f32 %v1960, %v2314
        %v2316 = vsub.f32 1.0, %v2315
        %v2317 = vmul.f32 %v2314, %v2316
        %v2318 = vadd.f32 %v2314, %v2317
        %vm2319 = vweird.f32 %v1960
        %vm2320 = vweird.f32 %v2314
        %vm2321 = vmor %vm2319, %vm2320
        %v2322 = vsel %vm2321, %v2314, %v2318
        %v2323 = vand.u32 2147483647, %v1960
        %vm2324 = vcmp.eq.f32.partialorder %v2323, 8.507059e+37
        %v2325 = vand.u32 %v1960, 2147483648
        %v2326 = vor.u32 1.1754944e-38, %v2325
        %v2327 = vsel %vm2324, %v2326, %v2322
        %v2328 = vmul.f32 1.0, %v2327
        %v2329 = vrcp.pop %v1961
        %v2330 = vmul.f32 %v1961, %v2329
        %v2331 = vsub.f32 1.0, %v2330
        %v2332 = vmul.f32 %v2329, %v2331
        %v2333 = vadd.f32 %v2329, %v2332
        %vm2334 = vweird.f32 %v1961
        %vm2335 = vweird.f32 %v2329
        %vm2336 = vmor %vm2334, %vm2335
        %v2337 = vsel %vm2336, %v2329, %v2333
        %v2338 = vand.u32 2147483647, %v1961
        %vm2339 = vcmp.eq.f32.partialorder %v2338, 8.507059e+37
        %v2340 = vand.u32 %v1961, 2147483648
        %v2341 = vor.u32 1.1754944e-38, %v2340
        %v2342 = vsel %vm2339, %v2341, %v2337
        %v2343 = vmul.f32 1.0, %v2342
        %v2344 = vrcp.pop %v1962
        %v2345 = vmul.f32 %v1962, %v2344
        %v2346 = vsub.f32 1.0, %v2345
        %v2347 = vmul.f32 %v2344, %v2346
        %v2348 = vadd.f32 %v2344, %v2347
        %vm2349 = vweird.f32 %v1962
        %vm2350 = vweird.f32 %v2344
        %vm2351 = vmor %vm2349, %vm2350
        %v2352 = vsel %vm2351, %v2344, %v2348
        %v2353 = vand.u32 2147483647, %v1962
        %vm2354 = vcmp.eq.f32.partialorder %v2353, 8.507059e+37
        %v2355 = vand.u32 %v1962, 2147483648
        %v2356 = vor.u32 1.1754944e-38, %v2355
        %v2357 = vsel %vm2354, %v2356, %v2352
        %v2358 = vmul.f32 1.0, %v2357
        %v2359 = vrcp.pop %v1963
        %v2360 = vmul.f32 %v1963, %v2359
        %v2361 = vsub.f32 1.0, %v2360
        %v2362 = vmul.f32 %v2359, %v2361
        %v2363 = vadd.f32 %v2359, %v2362
        %vm2364 = vweird.f32 %v1963
        %vm2365 = vweird.f32 %v2359
        %vm2366 = vmor %vm2364, %vm2365
        %v2367 = vsel %vm2366, %v2359, %v2363
        %v2368 = vand.u32 2147483647, %v1963
        %vm2369 = vcmp.eq.f32.partialorder %v2368, 8.507059e+37
        %v2370 = vand.u32 %v1963, 2147483648
        %v2371 = vor.u32 1.1754944e-38, %v2370
        %v2372 = vsel %vm2369, %v2371, %v2367
        %v2373 = vmul.f32 1.0, %v2372
        %v2374 = vrcp.pop %v1964
        %v2375 = vmul.f32 %v1964, %v2374
        %v2376 = vsub.f32 1.0, %v2375
        %v2377 = vmul.f32 %v2374, %v2376
        %v2378 = vadd.f32 %v2374, %v2377
        %vm2379 = vweird.f32 %v1964
        %vm2380 = vweird.f32 %v2374
        %vm2381 = vmor %vm2379, %vm2380
        %v2382 = vsel %vm2381, %v2374, %v2378
        %v2383 = vand.u32 2147483647, %v1964
        %vm2384 = vcmp.eq.f32.partialorder %v2383, 8.507059e+37
        %v2385 = vand.u32 %v1964, 2147483648
        %v2386 = vor.u32 1.1754944e-38, %v2385
        %v2387 = vsel %vm2384, %v2386, %v2382
        %v2388 = vmul.f32 1.0, %v2387
        %v2389 = vrcp.pop %v1965
        %v2390 = vmul.f32 %v1965, %v2389
        %v2391 = vsub.f32 1.0, %v2390
        %v2392 = vmul.f32 %v2389, %v2391
        %v2393 = vadd.f32 %v2389, %v2392
        %vm2394 = vweird.f32 %v1965
        %vm2395 = vweird.f32 %v2389
        %vm2396 = vmor %vm2394, %vm2395
        %v2397 = vsel %vm2396, %v2389, %v2393
        %v2398 = vand.u32 2147483647, %v1965
        %vm2399 = vcmp.eq.f32.partialorder %v2398, 8.507059e+37
        %v2400 = vand.u32 %v1965, 2147483648
        %v2401 = vor.u32 1.1754944e-38, %v2400
        %v2402 = vsel %vm2399, %v2401, %v2397
        %v2403 = vmul.f32 1.0, %v2402
        %v2404 = vrcp.pop %v1966
        %v2405 = vmul.f32 %v1966, %v2404
        %v2406 = vsub.f32 1.0, %v2405
        %v2407 = vmul.f32 %v2404, %v2406
        %v2408 = vadd.f32 %v2404, %v2407
        %vm2409 = vweird.f32 %v1966
        %vm2410 = vweird.f32 %v2404
        %vm2411 = vmor %vm2409, %vm2410
        %v2412 = vsel %vm2411, %v2404, %v2408
        %v2413 = vand.u32 2147483647, %v1966
        %vm2414 = vcmp.eq.f32.partialorder %v2413, 8.507059e+37
        %v2415 = vand.u32 %v1966, 2147483648
        %v2416 = vor.u32 1.1754944e-38, %v2415
        %v2417 = vsel %vm2414, %v2416, %v2412
        %v2418 = vmul.f32 1.0, %v2417
        %v2419 = vrcp.pop %v1967
        %v2420 = vmul.f32 %v1967, %v2419
        %v2421 = vsub.f32 1.0, %v2420
        %v2422 = vmul.f32 %v2419, %v2421
        %v2423 = vadd.f32 %v2419, %v2422
        %vm2424 = vweird.f32 %v1967
        %vm2425 = vweird.f32 %v2419
        %vm2426 = vmor %vm2424, %vm2425
        %v2427 = vsel %vm2426, %v2419, %v2423
        %v2428 = vand.u32 2147483647, %v1967
        %vm2429 = vcmp.eq.f32.partialorder %v2428, 8.507059e+37
        %v2430 = vand.u32 %v1967, 2147483648
        %v2431 = vor.u32 1.1754944e-38, %v2430
        %v2432 = vsel %vm2429, %v2431, %v2427
        %v2433 = vmul.f32 1.0, %v2432
        %v2434 = vrcp.pop %v1968
        %v2435 = vmul.f32 %v1968, %v2434
        %v2436 = vsub.f32 1.0, %v2435
        %v2437 = vmul.f32 %v2434, %v2436
        %v2438 = vadd.f32 %v2434, %v2437
        %vm2439 = vweird.f32 %v1968
        %vm2440 = vweird.f32 %v2434
        %vm2441 = vmor %vm2439, %vm2440
        %v2442 = vsel %vm2441, %v2434, %v2438
        %v2443 = vand.u32 2147483647, %v1968
        %vm2444 = vcmp.eq.f32.partialorder %v2443, 8.507059e+37
        %v2445 = vand.u32 %v1968, 2147483648
        %v2446 = vor.u32 1.1754944e-38, %v2445
        %v2447 = vsel %vm2444, %v2446, %v2442
        %v2448 = vmul.f32 1.0, %v2447
        %v2449 = vmul.f32 %v1746, %v1983
        %v2450 = vmul.f32 %v1749, %v1998
        %v2451 = vmul.f32 %v1752, %v2013
        %v2452 = vmul.f32 %v1755, %v2028
        %v2453 = vmul.f32 %v1758, %v2043
        %v2454 = vmul.f32 %v1761, %v2058
        %v2455 = vmul.f32 %v1764, %v2073
        %v2456 = vmul.f32 %v1767, %v2088
        %v2457 = vmul.f32 %v1770, %v2103
        %v2458 = vmul.f32 %v1773, %v2118
        %v2459 = vmul.f32 %v1776, %v2133
        %v2460 = vmul.f32 %v1779, %v2148
        %v2461 = vmul.f32 %v1782, %v2163
        %v2462 = vmul.f32 %v1785, %v2178
        %v2463 = vmul.f32 %v1788, %v2193
        %v2464 = vmul.f32 %v1791, %v2208
        %v2465 = vmul.f32 %v1794, %v2223
        %v2466 = vmul.f32 %v1797, %v2238
        %v2467 = vmul.f32 %v1800, %v2253
        %v2468 = vmul.f32 %v1803, %v2268
        %v2469 = vmul.f32 %v1806, %v2283
        %v2470 = vmul.f32 %v1809, %v2298
        %v2471 = vmul.f32 %v1812, %v2313
        %v2472 = vmul.f32 %v1815, %v2328
        %v2473 = vmul.f32 %v1818, %v2343
        %v2474 = vmul.f32 %v1821, %v2358
        %v2475 = vmul.f32 %v1824, %v2373
        %v2476 = vmul.f32 %v1827, %v2388
        %v2477 = vmul.f32 %v1830, %v2403
        %v2478 = vmul.f32 %v1833, %v2418
        %v2479 = vmul.f32 %v1836, %v2433
        %v2480 = vmul.f32 %v1839, %v2448
        %2481 = vst [vmem:[%s210] sm:$0xff] %v2449
        %2482 = vst [vmem:[%s210 + $0x8] sm:$0xff] %v2450
        %2483 = vst [vmem:[%s210 + $0x10] sm:$0xff] %v2451
        %2484 = vst [vmem:[%s210 + $0x18] sm:$0xff] %v2452
        %2485 = vst [vmem:[%s210 + $0x20] sm:$0xff] %v2453
        %2486 = vst [vmem:[%s210 + $0x28] sm:$0xff] %v2454
        %2487 = vst [vmem:[%s210 + $0x30] sm:$0xff] %v2455
        %2488 = vst [vmem:[%s210 + $0x38] sm:$0xff] %v2456
        %2489 = vst [vmem:[%s210 + $0x40] sm:$0xff] %v2457
        %2490 = vst [vmem:[%s210 + $0x48] sm:$0xff] %v2458
        %2491 = vst [vmem:[%s210 + $0x50] sm:$0xff] %v2459
        %2492 = vst [vmem:[%s210 + $0x58] sm:$0xff] %v2460
        %2493 = vst [vmem:[%s210 + $0x60] sm:$0xff] %v2461
        %2494 = vst [vmem:[%s210 + $0x68] sm:$0xff] %v2462
        %2495 = vst [vmem:[%s210 + $0x70] sm:$0xff] %v2463
        %2496 = vst [vmem:[%s210 + $0x78] sm:$0xff] %v2464
        %2497 = vst [vmem:[%s210 + $0x80] sm:$0xff] %v2465
        %2498 = vst [vmem:[%s210 + $0x88] sm:$0xff] %v2466
        %2499 = vst [vmem:[%s210 + $0x90] sm:$0xff] %v2467
        %2500 = vst [vmem:[%s210 + $0x98] sm:$0xff] %v2468
        %2501 = vst [vmem:[%s210 + $0xa0] sm:$0xff] %v2469
        %2502 = vst [vmem:[%s210 + $0xa8] sm:$0xff] %v2470
        %2503 = vst [vmem:[%s210 + $0xb0] sm:$0xff] %v2471
        %2504 = vst [vmem:[%s210 + $0xb8] sm:$0xff] %v2472
        %2505 = vst [vmem:[%s210 + $0xc0] sm:$0xff] %v2473
        %2506 = vst [vmem:[%s210 + $0xc8] sm:$0xff] %v2474
        %2507 = vst [vmem:[%s210 + $0xd0] sm:$0xff] %v2475
        %2508 = vst [vmem:[%s210 + $0xd8] sm:$0xff] %v2476
        %2509 = vst [vmem:[%s210 + $0xe0] sm:$0xff] %v2477
        %2510 = vst [vmem:[%s210 + $0xe8] sm:$0xff] %v2478
        %2511 = vst [vmem:[%s210 + $0xf0] sm:$0xff] %v2479
        %2512 = vst [vmem:[%s210 + $0xf8] sm:$0xff] %v2480
        %s2513 = sand.u32 %s126, 1
        %s2514 = scalar_lea.sflag [#allocation4], %s2513
        %s2515 = sand.u32 %s126, 1
        %s2516 = smul.addr %s2515, 256
        %s2517 = scalar_lea.vmem [#allocation3], %s2516
        // Predicated region
        $region37: #{tpu_custom_call.1} parent=31 // pred_check
          %p2518 = pneg %p136
        $region38: #{tpu_custom_call.1} parent=31 // pred_check_branch
          %2520 = sbr.rel (%p2518) target = $region40
        $region39: #{tpu_custom_call.1} parent=31 // pred_region
          %s2521 = smul.u32 32, %s23
          %2523 = vsyncadd %s2514, 0
          %s2524 = sadd.s32 %s24, %s2521
          %s2525 = smul.addr %s22, 32
          %s2526 = sadd.s32 %s2524, %s2525
          %s2527 = smul.addr %s2526, 8
          %s2528 = scalar_lea.hbm %s3, %s2527
          %s2529 = sshll.u32 %s2517, 4
          %s2530 = int_to_ptr.vmem [resolvable:$true] %s2529
          %s2531 = sshll.u32 %s2528, 4
          %s2532 = int_to_ptr.hbm [resolvable:$true] %s2531
          %2537 = dma.vmem_to_hbm [thread:$0]  %s2530, 4096, %s2532, %s2514, 128, 128, 8
        $region40: #{tpu_custom_call.1} parent=31 // pred_fallthru
          _
      $region32: #{tpu_custom_call.1} parent=5 // pred_fallthru
        _
      %p2538 = scmp.le.s32.totalorder 2, %s12
      // Predicated region
      $region41: #{tpu_custom_call.1} parent=5 // pred_check
        %p2539 = pneg %p2538
      $region42: #{tpu_custom_call.1} parent=5 // pred_check_branch
        %2541 = sbr.rel (%p2539) target = $region44
      $region43: #{tpu_custom_call.1} parent=5 // pred_region
        %s2542 = ssub.s32 %s12, 2
        // Predicated region
        $region45: #{tpu_custom_call.1} parent=43 // pred_check
          %p2543 = pneg %p142
        $region46: #{tpu_custom_call.1} parent=43 // pred_check_branch
          %2545 = sbr.rel (%p2543) target = $region48
        $region47: #{tpu_custom_call.1} parent=43 // pred_region
          %s2546 = sand.u32 %s127, 1
          %s2547 = scalar_lea.sflag [#allocation4], %s2546
          %s2548 = sand.u32 %s127, 1
          %s2549 = smul.addr %s2548, 256
          %s2550 = scalar_lea.vmem [#allocation3], %s2549
          %2552 = dma.done %s2547, 4096
        $region48: #{tpu_custom_call.1} parent=43 // pred_fallthru
          _
      $region44: #{tpu_custom_call.1} parent=5 // pred_fallthru
        _
    $region6: #{tpu_custom_call.1} parent=1 // loop_footer
      %s16 = sadd.s32 1, %s12
    $region7: #{tpu_custom_call.1} parent=1 // loop_footer_branch
      %11 = sbr.rel target = $region3
    $region8: #{tpu_custom_call.1} parent=1 // loop_exit
      _
    %2553 = vsyncpa [#allocation4], 1
    %s2554 = scalar_lea.sflag [#allocation4], 1
    %2555 = vsyncpa %s2554, 1

</llo_original>
